<compile_context>
chip_gen: v5e
topology: v5e:2x2
jax: 0.10.0
libtpu: 0.0.40
codegen_flags: <defaults>
</compile_context>

<pallas_src>
import jax
import jax.numpy as jnp
from jax.experimental import pallas as pl
from jax.experimental.pallas import tpu as pltpu

HIDDEN_SIZE = 50
INPUT_SIZE = 10
NUM_LAYERS = 2          # hard-wired as two explicit cells in the kernel
OUTPUT_SIZE = 1

HIDDEN_PAD = 128        # lane-padded hidden size: each gate = one full vreg
OUT_PAD = 128           # lane-padded FC output width (unmasked stores)
BATCH_PAD = 8           # sublane granularity for f32


def lstm_fc_kernel(lengths_ref, x2d_ref,
                   w_ih0_ref, w_hh0_ref, b0_ref,
                   w_l1_ref, b1_ref,
                   w_fc_ref, b_fc_ref,
                   out_ref, xw_ref):
    """x2d_ref: (T*B, F) time-major, pre-flattened in the wrapper.
    lengths_ref: (B, 1) int32.
    Fused-gate weights: w_ih0 (F, 4Hp), w_hh0 (Hp, 4Hp),
    w_l1 (2*Hp, 4Hp) = stacked [layer1 input-side ; layer1 recurrent-side].
    Biases: (1, 4Hp). FC: w_fc (Hp, OUT_PAD), b_fc (1, OUT_PAD).
    xw_ref: VMEM scratch (T*B, 4Hp) for the hoisted layer-0 input projection."""
    TB, F = x2d_ref.shape
    H4 = w_hh0_ref.shape[-1]
    Hp = H4 // 4
    B = lengths_ref.shape[0]
    T = TB // B

    lengths = lengths_ref[...]                      # (B, 1) int32

    # ---- Hoisted, time-invariant layer-0 input projection (one fat matmul).
    xw_ref[...] = (
        jnp.dot(x2d_ref[...], w_ih0_ref[...], preferred_element_type=jnp.float32)
        + b0_ref[...]
    )

    def gates_to_hc(g, c):
        # Gate order matches PyTorch: i, f, g, o; each slice is 128-lane aligned.
        i = jax.nn.sigmoid(g[:, 0 * Hp:1 * Hp])
        f = jax.nn.sigmoid(g[:, 1 * Hp:2 * Hp])
        gg = jnp.tanh(g[:, 2 * Hp:3 * Hp])
        o = jax.nn.sigmoid(g[:, 3 * Hp:4 * Hp])
        c_new = f * c + i * gg
        return o * jnp.tanh(c_new), c_new

    zeros = jnp.zeros((B, Hp), jnp.float32)

    def step(t, carry):
        h1, c1, h2, c2 = carry
        # One shared mask broadcast per step, reused by all four selects.
        mask = jnp.broadcast_to(t < lengths, (B, Hp))    # (B, Hp) bool

        row0 = pl.multiple_of(t * B, B)
        xw_t = xw_ref[pl.ds(row0, B), :]                 # (B, 4Hp)

        # Layer 0: x-side already projected; one recurrent matmul (ref at use).
        g0 = xw_t + jnp.dot(h1, w_hh0_ref[...],
                            preferred_element_type=jnp.float32)
        h1n, c1n = gates_to_hc(g0, c1)

        # Layer 1: single fused matmul over [h1n, h2] (input + recurrent).
        h_cat = jnp.concatenate([h1n, h2], axis=-1)      # (B, 2Hp)
        g1 = (jnp.dot(h_cat, w_l1_ref[...],
                      preferred_element_type=jnp.float32)
              + b1_ref[...])
        h2n, c2n = gates_to_hc(g1, c2)

        h1 = jnp.where(mask, h1n, h1)
        c1 = jnp.where(mask, c1n, c1)
        h2 = jnp.where(mask, h2n, h2)
        c2 = jnp.where(mask, c2n, c2)
        return h1, c1, h2, c2

    h1, c1, h2, c2 = jax.lax.fori_loop(
        0, T, step, (zeros, zeros, zeros, zeros), unroll=True)

    # FC on the last valid top-layer hidden state; lane-dense padded output.
    out_ref[...] = (
        jnp.dot(h2, w_fc_ref[...], preferred_element_type=jnp.float32)
        + b_fc_ref[...]
    )


def init_params(key, input_size=INPUT_SIZE, hidden_size=HIDDEN_SIZE,
                output_size=OUTPUT_SIZE):
    """Deterministic init in the exact PyTorch LSTM/Linear layouts."""
    H, F, O = hidden_size, input_size, output_size
    ks = jax.random.split(key, 10)
    bound = 1.0 / jnp.sqrt(jnp.float32(H))

    def u(k, shape):
        return jax.random.uniform(k, shape, jnp.float32, -bound, bound)

    return dict(
        w_ih_l0=u(ks[0], (4 * H, F)), w_hh_l0=u(ks[1], (4 * H, H)),
        b_ih_l0=u(ks[2], (4 * H,)),   b_hh_l0=u(ks[3], (4 * H,)),
        w_ih_l1=u(ks[4], (4 * H, H)), w_hh_l1=u(ks[5], (4 * H, H)),
        b_ih_l1=u(ks[6], (4 * H,)),   b_hh_l1=u(ks[7], (4 * H,)),
        w_fc=u(ks[8], (O, H)),        b_fc=u(ks[9], (O,)),
    )


def pack_params(raw, hidden_size=HIDDEN_SIZE, input_size=INPUT_SIZE,
                output_size=OUTPUT_SIZE, hp=HIDDEN_PAD, op=OUT_PAD):
    """Re-lay-out PyTorch params for the kernel:
    fused-gate weights (in_pad, 4*hp) zero-padded so pad lanes of h/c stay
    exactly 0; layer-1 input/recurrent weights stacked into one (2*hp, 4*hp)
    matrix; biases pre-combined to (1, 4*hp); FC padded to (hp, op)."""
    H, F, O = hidden_size, input_size, output_size

    def cat_gates(w, in_dim, in_pad):
        # PyTorch (4H, in), gate order i,f,g,o -> (in_pad, 4*hp).
        w4 = w.reshape(4, H, in_dim)                                # (4,H,in)
        w4 = jnp.pad(w4, ((0, 0), (0, hp - H), (0, in_pad - in_dim)))
        return jnp.transpose(w4, (2, 0, 1)).reshape(in_pad, 4 * hp)

    def cat_bias(b_ih, b_hh):
        b = (b_ih + b_hh).reshape(4, H)
        b = jnp.pad(b, ((0, 0), (0, hp - H)))
        return b.reshape(1, 4 * hp)

    # Layer 1: rows [0:hp] multiply h1_new (input side), rows [hp:2hp] multiply h2.
    w_l1 = jnp.concatenate(
        [cat_gates(raw["w_ih_l1"], H, hp), cat_gates(raw["w_hh_l1"], H, hp)],
        axis=0)                                                      # (2hp, 4hp)

    return dict(
        w_ih0=cat_gates(raw["w_ih_l0"], F, F),
        w_hh0=cat_gates(raw["w_hh_l0"], H, hp),
        b0=cat_bias(raw["b_ih_l0"], raw["b_hh_l0"]),
        w_l1=w_l1,
        b1=cat_bias(raw["b_ih_l1"], raw["b_hh_l1"]),
        w_fc=jnp.pad(raw["w_fc"].T, ((0, hp - H), (0, op - O))),     # (hp, op)
        b_fc=jnp.pad(raw["b_fc"].reshape(1, O), ((0, 0), (0, op - O))),
    )


def lstm_model_forward(x, lengths, packed):
    """x: (B, T, F) float32 batch-first (as in the PyTorch module),
    lengths: (B,) int32.  Returns (B, OUTPUT_SIZE)."""
    B, T, F = x.shape
    Hp = packed["w_hh0"].shape[0]
    Bp = ((B + BATCH_PAD - 1) // BATCH_PAD) * BATCH_PAD   # fill f32 sublanes

    # Wrapper-side layout plumbing: time-major, batch-padded, pre-flattened.
    x_tbf = jnp.transpose(x, (1, 0, 2)).astype(jnp.float32)        # (T, B, F)
    x_tbf = jnp.pad(x_tbf, ((0, 0), (0, Bp - B), (0, 0)))          # (T, Bp, F)
    x2d = x_tbf.reshape(T * Bp, F)                                 # (T*Bp, F)
    lens2d = jnp.pad(lengths.astype(jnp.int32), (0, Bp - B)).reshape(Bp, 1)

    args = (lens2d, x2d,
            packed["w_ih0"], packed["w_hh0"], packed["b0"],
            packed["w_l1"], packed["b1"],
            packed["w_fc"], packed["b_fc"])

    vmem = pl.BlockSpec(memory_space=pltpu.MemorySpace.VMEM)
    out = pl.pallas_call(
        lstm_fc_kernel,
        out_shape=jax.ShapeDtypeStruct((Bp, OUT_PAD), jnp.float32),
        in_specs=[vmem] * len(args),
        out_specs=vmem,
        scratch_shapes=[pltpu.VMEM((T * Bp, 4 * Hp), jnp.float32)],
    )(*args)
    return out[:B, :OUTPUT_SIZE]


def lstm_model_ref(x, lengths, raw):
    """Pure-JAX reference (unpadded, per-gate) mirroring pack/pad + gather-last."""
    B, T, F = x.shape
    H = HIDDEN_SIZE

    def cell(x_t, h, c, w_ih, w_hh, b_ih, b_hh):
        g = x_t @ w_ih.T + h @ w_hh.T + b_ih + b_hh    # (B, 4H), order i,f,g,o
        i = jax.nn.sigmoid(g[:, 0:H])
        f = jax.nn.sigmoid(g[:, H:2 * H])
        gg = jnp.tanh(g[:, 2 * H:3 * H])
        o = jax.nn.sigmoid(g[:, 3 * H:4 * H])
        c_new = f * c + i * gg
        return o * jnp.tanh(c_new), c_new

    h1 = c1 = h2 = c2 = jnp.zeros((B, H), jnp.float32)
    lens = lengths.reshape(B, 1).astype(jnp.int32)
    for t in range(T):
        x_t = x[:, t, :].astype(jnp.float32)
        mask = t < lens
        h1n, c1n = cell(x_t, h1, c1, raw["w_ih_l0"], raw["w_hh_l0"],
                        raw["b_ih_l0"], raw["b_hh_l0"])
        h2n, c2n = cell(h1n, h2, c2, raw["w_ih_l1"], raw["w_hh_l1"],
                        raw["b_ih_l1"], raw["b_hh_l1"])
        h1 = jnp.where(mask, h1n, h1); c1 = jnp.where(mask, c1n, c1)
        h2 = jnp.where(mask, h2n, h2); c2 = jnp.where(mask, c2n, c2)
    return h2 @ raw["w_fc"].T + raw["b_fc"]


if __name__ == "__main__":
    key = jax.random.PRNGKey(0)
    k_par, k_x = jax.random.split(key)

    B, T = 4, 8
    raw = init_params(k_par)
    packed = pack_params(raw)
    x = jax.random.normal(k_x, (B, T, INPUT_SIZE), jnp.float32)
    lengths = jnp.array([8, 5, 3, 6], dtype=jnp.int32)   # variable-length seqs

    out = lstm_model_forward(x, lengths, packed)
    out = jax.block_until_ready(out)

    ref = lstm_model_ref(x, lengths, raw)
    assert out.shape == (B, OUTPUT_SIZE)
    assert jnp.allclose(out, ref, atol=1e-5, rtol=1e-5), (out, ref)

    print("KERNEL_OK")
</pallas_src>

<mosaic_0001>
module attributes {stable_mosaic.version = 11 : i64} {
  func.func @lstm_fc_kernel(%arg0: memref<8x1xi32, #tpu.memory_space<vmem>>, %arg1: memref<64x10xf32, #tpu.memory_space<vmem>>, %arg2: memref<10x512xf32, #tpu.memory_space<vmem>>, %arg3: memref<128x512xf32, #tpu.memory_space<vmem>>, %arg4: memref<1x512xf32, #tpu.memory_space<vmem>>, %arg5: memref<256x512xf32, #tpu.memory_space<vmem>>, %arg6: memref<1x512xf32, #tpu.memory_space<vmem>>, %arg7: memref<128x128xf32, #tpu.memory_space<vmem>>, %arg8: memref<1x128xf32, #tpu.memory_space<vmem>>, %arg9: memref<8x128xf32, #tpu.memory_space<vmem>>, %arg10: memref<64x512xf32, #tpu.memory_space<vmem>>) attributes {dimension_semantics = [], scalar_prefetch = 0 : i64, scratch_operands = 1 : i64, tpu.core_type = #tpu.core_type<tc>} {
    %c0 = arith.constant 0 : index
    %c0_0 = arith.constant 0 : index
    %0 = vector.load %arg0[%c0, %c0_0] : memref<8x1xi32, #tpu.memory_space<vmem>>, vector<8x1xi32>
    %c0_1 = arith.constant 0 : index
    %c0_2 = arith.constant 0 : index
    %1 = vector.load %arg1[%c0_1, %c0_2] : memref<64x10xf32, #tpu.memory_space<vmem>>, vector<64x10xf32>
    %c0_3 = arith.constant 0 : index
    %c0_4 = arith.constant 0 : index
    %2 = vector.load %arg2[%c0_3, %c0_4] : memref<10x512xf32, #tpu.memory_space<vmem>>, vector<10x512xf32>
    %cst = arith.constant dense<0.000000e+00> : vector<64x512xf32>
    %3 = tpu.matmul %1, %2, %cst {dimension_numbers = #tpu.dot_dimension_numbers<[1], [0], [0], [1], [0, 0, 1, 1], [], []>} : vector<64x10xf32>, vector<10x512xf32>, vector<64x512xf32> -> vector<64x512xf32>
    %c0_5 = arith.constant 0 : index
    %c0_6 = arith.constant 0 : index
    %4 = vector.load %arg4[%c0_5, %c0_6] : memref<1x512xf32, #tpu.memory_space<vmem>>, vector<1x512xf32>
    %5 = vector.broadcast %4 : vector<1x512xf32> to vector<64x512xf32>
    %6 = arith.addf %3, %5 : vector<64x512xf32>
    %c0_7 = arith.constant 0 : index
    %c0_8 = arith.constant 0 : index
    %7 = vector.load %arg10[%c0_7, %c0_8] : memref<64x512xf32, #tpu.memory_space<vmem>>, vector<64x512xf32>
    tpu.vector_store %arg10[%c0_7, %c0_8], %6 {strides = array<i32>} : memref<64x512xf32, #tpu.memory_space<vmem>>, vector<64x512xf32>,
    %cst_9 = arith.constant 0.000000e+00 : f32
    %8 = vector.broadcast %cst_9 : f32 to vector<8x128xf32>
    %c0_i32 = arith.constant 0 : i32
    %9 = vector.broadcast %c0_i32 : i32 to vector<8x1xi32>
    %10 = arith.cmpi slt, %9, %0 : vector<8x1xi32>
    %11 = vector.shape_cast %10 : vector<8x1xi1> to vector<8x1xi1>
    %12 = vector.broadcast %11 : vector<8x1xi1> to vector<8x128xi1>
    %c8_i32 = arith.constant 8 : i32
    %13 = arith.muli %c0_i32, %c8_i32 : i32
    %14 = tpu.assume_multiple %13, 8 : i32
    %15 = arith.index_cast %14 : i32 to index
    %c0_10 = arith.constant 0 : index
    %16 = vector.load %arg10[%15, %c0_10] : memref<64x512xf32, #tpu.memory_space<vmem>>, vector<8x512xf32>
    %c0_11 = arith.constant 0 : index
    %c0_12 = arith.constant 0 : index
    %17 = vector.load %arg3[%c0_11, %c0_12] : memref<128x512xf32, #tpu.memory_space<vmem>>, vector<128x512xf32>
    %cst_13 = arith.constant dense<0.000000e+00> : vector<8x512xf32>
    %18 = tpu.matmul %8, %17, %cst_13 {dimension_numbers = #tpu.dot_dimension_numbers<[1], [0], [0], [1], [0, 0, 1, 1], [], []>} : vector<8x128xf32>, vector<128x512xf32>, vector<8x512xf32> -> vector<8x512xf32>
    %19 = arith.addf %16, %18 : vector<8x512xf32>
    %20 = vector.extract_strided_slice %19 {offsets = [0, 0], sizes = [8, 128], strides = [1, 1]} : vector<8x512xf32> to vector<8x128xf32>
    %21 = arith.negf %20 : vector<8x128xf32>
    %22 = math.exp %21 : vector<8x128xf32>
    %cst_14 = arith.constant 1.000000e+00 : f32
    %23 = vector.broadcast %cst_14 : f32 to vector<8x128xf32>
    %24 = arith.addf %23, %22 : vector<8x128xf32>
    %25 = arith.divf %23, %24 : vector<8x128xf32>
    %26 = vector.extract_strided_slice %19 {offsets = [0, 128], sizes = [8, 128], strides = [1, 1]} : vector<8x512xf32> to vector<8x128xf32>
    %27 = arith.negf %26 : vector<8x128xf32>
    %28 = math.exp %27 : vector<8x128xf32>
    %cst_15 = arith.constant 1.000000e+00 : f32
    %29 = vector.broadcast %cst_15 : f32 to vector<8x128xf32>
    %30 = arith.addf %29, %28 : vector<8x128xf32>
    %31 = arith.divf %29, %30 : vector<8x128xf32>
    %32 = vector.extract_strided_slice %19 {offsets = [0, 256], sizes = [8, 128], strides = [1, 1]} : vector<8x512xf32> to vector<8x128xf32>
    %33 = math.tanh %32 : vector<8x128xf32>
    %34 = vector.extract_strided_slice %19 {offsets = [0, 384], sizes = [8, 128], strides = [1, 1]} : vector<8x512xf32> to vector<8x128xf32>
    %35 = arith.negf %34 : vector<8x128xf32>
    %36 = math.exp %35 : vector<8x128xf32>
    %cst_16 = arith.constant 1.000000e+00 : f32
    %37 = vector.broadcast %cst_16 : f32 to vector<8x128xf32>
    %38 = arith.addf %37, %36 : vector<8x128xf32>
    %39 = arith.divf %37, %38 : vector<8x128xf32>
    %40 = arith.mulf %31, %8 : vector<8x128xf32>
    %41 = arith.mulf %25, %33 : vector<8x128xf32>
    %42 = arith.addf %40, %41 : vector<8x128xf32>
    %43 = math.tanh %42 : vector<8x128xf32>
    %44 = arith.mulf %39, %43 : vector<8x128xf32>
    %45 = tpu.concatenate %44, %8 in 1 : vector<8x128xf32>, vector<8x128xf32> -> vector<8x256xf32>
    %c0_17 = arith.constant 0 : index
    %c0_18 = arith.constant 0 : index
    %46 = vector.load %arg5[%c0_17, %c0_18] : memref<256x512xf32, #tpu.memory_space<vmem>>, vector<256x512xf32>
    %cst_19 = arith.constant dense<0.000000e+00> : vector<8x512xf32>
    %47 = tpu.matmul %45, %46, %cst_19 {dimension_numbers = #tpu.dot_dimension_numbers<[1], [0], [0], [1], [0, 0, 1, 1], [], []>} : vector<8x256xf32>, vector<256x512xf32>, vector<8x512xf32> -> vector<8x512xf32>
    %c0_20 = arith.constant 0 : index
    %c0_21 = arith.constant 0 : index
    %48 = vector.load %arg6[%c0_20, %c0_21] : memref<1x512xf32, #tpu.memory_space<vmem>>, vector<1x512xf32>
    %49 = vector.broadcast %48 : vector<1x512xf32> to vector<8x512xf32>
    %50 = arith.addf %47, %49 : vector<8x512xf32>
    %51 = vector.extract_strided_slice %50 {offsets = [0, 0], sizes = [8, 128], strides = [1, 1]} : vector<8x512xf32> to vector<8x128xf32>
    %52 = arith.negf %51 : vector<8x128xf32>
    %53 = math.exp %52 : vector<8x128xf32>
    %cst_22 = arith.constant 1.000000e+00 : f32
    %54 = vector.broadcast %cst_22 : f32 to vector<8x128xf32>
    %55 = arith.addf %54, %53 : vector<8x128xf32>
    %56 = arith.divf %54, %55 : vector<8x128xf32>
    %57 = vector.extract_strided_slice %50 {offsets = [0, 128], sizes = [8, 128], strides = [1, 1]} : vector<8x512xf32> to vector<8x128xf32>
    %58 = arith.negf %57 : vector<8x128xf32>
    %59 = math.exp %58 : vector<8x128xf32>
    %cst_23 = arith.constant 1.000000e+00 : f32
    %60 = vector.broadcast %cst_23 : f32 to vector<8x128xf32>
    %61 = arith.addf %60, %59 : vector<8x128xf32>
    %62 = arith.divf %60, %61 : vector<8x128xf32>
    %63 = vector.extract_strided_slice %50 {offsets = [0, 256], sizes = [8, 128], strides = [1, 1]} : vector<8x512xf32> to vector<8x128xf32>
    %64 = math.tanh %63 : vector<8x128xf32>
    %65 = vector.extract_strided_slice %50 {offsets = [0, 384], sizes = [8, 128], strides = [1, 1]} : vector<8x512xf32> to vector<8x128xf32>
    %66 = arith.negf %65 : vector<8x128xf32>
    %67 = math.exp %66 : vector<8x128xf32>
    %cst_24 = arith.constant 1.000000e+00 : f32
    %68 = vector.broadcast %cst_24 : f32 to vector<8x128xf32>
    %69 = arith.addf %68, %67 : vector<8x128xf32>
    %70 = arith.divf %68, %69 : vector<8x128xf32>
    %71 = arith.mulf %62, %8 : vector<8x128xf32>
    %72 = arith.mulf %56, %64 : vector<8x128xf32>
    %73 = arith.addf %71, %72 : vector<8x128xf32>
    %74 = math.tanh %73 : vector<8x128xf32>
    %75 = arith.mulf %70, %74 : vector<8x128xf32>
    %76 = arith.select %12, %44, %8 : vector<8x128xi1>, vector<8x128xf32>
    %77 = arith.select %12, %42, %8 : vector<8x128xi1>, vector<8x128xf32>
    %78 = arith.select %12, %75, %8 : vector<8x128xi1>, vector<8x128xf32>
    %79 = arith.select %12, %73, %8 : vector<8x128xi1>, vector<8x128xf32>
    %c1_i32 = arith.constant 1 : i32
    %80 = vector.broadcast %c1_i32 : i32 to vector<8x1xi32>
    %81 = arith.cmpi slt, %80, %0 : vector<8x1xi32>
    %82 = vector.shape_cast %81 : vector<8x1xi1> to vector<8x1xi1>
    %83 = vector.broadcast %82 : vector<8x1xi1> to vector<8x128xi1>
    %c8_i32_25 = arith.constant 8 : i32
    %84 = arith.muli %c1_i32, %c8_i32_25 : i32
    %85 = tpu.assume_multiple %84, 8 : i32
    %86 = arith.index_cast %85 : i32 to index
    %c0_26 = arith.constant 0 : index
    %87 = vector.load %arg10[%86, %c0_26] : memref<64x512xf32, #tpu.memory_space<vmem>>, vector<8x512xf32>
    %c0_27 = arith.constant 0 : index
    %c0_28 = arith.constant 0 : index
    %88 = vector.load %arg3[%c0_27, %c0_28] : memref<128x512xf32, #tpu.memory_space<vmem>>, vector<128x512xf32>
    %cst_29 = arith.constant dense<0.000000e+00> : vector<8x512xf32>
    %89 = tpu.matmul %76, %88, %cst_29 {dimension_numbers = #tpu.dot_dimension_numbers<[1], [0], [0], [1], [0, 0, 1, 1], [], []>} : vector<8x128xf32>, vector<128x512xf32>, vector<8x512xf32> -> vector<8x512xf32>
    %90 = arith.addf %87, %89 : vector<8x512xf32>
    %91 = vector.extract_strided_slice %90 {offsets = [0, 0], sizes = [8, 128], strides = [1, 1]} : vector<8x512xf32> to vector<8x128xf32>
    %92 = arith.negf %91 : vector<8x128xf32>
    %93 = math.exp %92 : vector<8x128xf32>
    %cst_30 = arith.constant 1.000000e+00 : f32
    %94 = vector.broadcast %cst_30 : f32 to vector<8x128xf32>
    %95 = arith.addf %94, %93 : vector<8x128xf32>
    %96 = arith.divf %94, %95 : vector<8x128xf32>
    %97 = vector.extract_strided_slice %90 {offsets = [0, 128], sizes = [8, 128], strides = [1, 1]} : vector<8x512xf32> to vector<8x128xf32>
    %98 = arith.negf %97 : vector<8x128xf32>
    %99 = math.exp %98 : vector<8x128xf32>
    %cst_31 = arith.constant 1.000000e+00 : f32
    %100 = vector.broadcast %cst_31 : f32 to vector<8x128xf32>
    %101 = arith.addf %100, %99 : vector<8x128xf32>
    %102 = arith.divf %100, %101 : vector<8x128xf32>
    %103 = vector.extract_strided_slice %90 {offsets = [0, 256], sizes = [8, 128], strides = [1, 1]} : vector<8x512xf32> to vector<8x128xf32>
    %104 = math.tanh %103 : vector<8x128xf32>
    %105 = vector.extract_strided_slice %90 {offsets = [0, 384], sizes = [8, 128], strides = [1, 1]} : vector<8x512xf32> to vector<8x128xf32>
    %106 = arith.negf %105 : vector<8x128xf32>
    %107 = math.exp %106 : vector<8x128xf32>
    %cst_32 = arith.constant 1.000000e+00 : f32
    %108 = vector.broadcast %cst_32 : f32 to vector<8x128xf32>
    %109 = arith.addf %108, %107 : vector<8x128xf32>
    %110 = arith.divf %108, %109 : vector<8x128xf32>
    %111 = arith.mulf %102, %77 : vector<8x128xf32>
    %112 = arith.mulf %96, %104 : vector<8x128xf32>
    %113 = arith.addf %111, %112 : vector<8x128xf32>
    %114 = math.tanh %113 : vector<8x128xf32>
    %115 = arith.mulf %110, %114 : vector<8x128xf32>
    %116 = tpu.concatenate %115, %78 in 1 : vector<8x128xf32>, vector<8x128xf32> -> vector<8x256xf32>
    %c0_33 = arith.constant 0 : index
    %c0_34 = arith.constant 0 : index
    %117 = vector.load %arg5[%c0_33, %c0_34] : memref<256x512xf32, #tpu.memory_space<vmem>>, vector<256x512xf32>
    %cst_35 = arith.constant dense<0.000000e+00> : vector<8x512xf32>
    %118 = tpu.matmul %116, %117, %cst_35 {dimension_numbers = #tpu.dot_dimension_numbers<[1], [0], [0], [1], [0, 0, 1, 1], [], []>} : vector<8x256xf32>, vector<256x512xf32>, vector<8x512xf32> -> vector<8x512xf32>
    %c0_36 = arith.constant 0 : index
    %c0_37 = arith.constant 0 : index
    %119 = vector.load %arg6[%c0_36, %c0_37] : memref<1x512xf32, #tpu.memory_space<vmem>>, vector<1x512xf32>
    %120 = vector.broadcast %119 : vector<1x512xf32> to vector<8x512xf32>
    %121 = arith.addf %118, %120 : vector<8x512xf32>
    %122 = vector.extract_strided_slice %121 {offsets = [0, 0], sizes = [8, 128], strides = [1, 1]} : vector<8x512xf32> to vector<8x128xf32>
    %123 = arith.negf %122 : vector<8x128xf32>
    %124 = math.exp %123 : vector<8x128xf32>
    %cst_38 = arith.constant 1.000000e+00 : f32
    %125 = vector.broadcast %cst_38 : f32 to vector<8x128xf32>
    %126 = arith.addf %125, %124 : vector<8x128xf32>
    %127 = arith.divf %125, %126 : vector<8x128xf32>
    %128 = vector.extract_strided_slice %121 {offsets = [0, 128], sizes = [8, 128], strides = [1, 1]} : vector<8x512xf32> to vector<8x128xf32>
    %129 = arith.negf %128 : vector<8x128xf32>
    %130 = math.exp %129 : vector<8x128xf32>
    %cst_39 = arith.constant 1.000000e+00 : f32
    %131 = vector.broadcast %cst_39 : f32 to vector<8x128xf32>
    %132 = arith.addf %131, %130 : vector<8x128xf32>
    %133 = arith.divf %131, %132 : vector<8x128xf32>
    %134 = vector.extract_strided_slice %121 {offsets = [0, 256], sizes = [8, 128], strides = [1, 1]} : vector<8x512xf32> to vector<8x128xf32>
    %135 = math.tanh %134 : vector<8x128xf32>
    %136 = vector.extract_strided_slice %121 {offsets = [0, 384], sizes = [8, 128], strides = [1, 1]} : vector<8x512xf32> to vector<8x128xf32>
    %137 = arith.negf %136 : vector<8x128xf32>
    %138 = math.exp %137 : vector<8x128xf32>
    %cst_40 = arith.constant 1.000000e+00 : f32
    %139 = vector.broadcast %cst_40 : f32 to vector<8x128xf32>
    %140 = arith.addf %139, %138 : vector<8x128xf32>
    %141 = arith.divf %139, %140 : vector<8x128xf32>
    %142 = arith.mulf %133, %79 : vector<8x128xf32>
    %143 = arith.mulf %127, %135 : vector<8x128xf32>
    %144 = arith.addf %142, %143 : vector<8x128xf32>
    %145 = math.tanh %144 : vector<8x128xf32>
    %146 = arith.mulf %141, %145 : vector<8x128xf32>
    %147 = arith.select %83, %115, %76 : vector<8x128xi1>, vector<8x128xf32>
    %148 = arith.select %83, %113, %77 : vector<8x128xi1>, vector<8x128xf32>
    %149 = arith.select %83, %146, %78 : vector<8x128xi1>, vector<8x128xf32>
    %150 = arith.select %83, %144, %79 : vector<8x128xi1>, vector<8x128xf32>
    %c2_i32 = arith.constant 2 : i32
    %151 = vector.broadcast %c2_i32 : i32 to vector<8x1xi32>
    %152 = arith.cmpi slt, %151, %0 : vector<8x1xi32>
    %153 = vector.shape_cast %152 : vector<8x1xi1> to vector<8x1xi1>
    %154 = vector.broadcast %153 : vector<8x1xi1> to vector<8x128xi1>
    %c8_i32_41 = arith.constant 8 : i32
    %155 = arith.muli %c2_i32, %c8_i32_41 : i32
    %156 = tpu.assume_multiple %155, 8 : i32
    %157 = arith.index_cast %156 : i32 to index
    %c0_42 = arith.constant 0 : index
    %158 = vector.load %arg10[%157, %c0_42] : memref<64x512xf32, #tpu.memory_space<vmem>>, vector<8x512xf32>
    %c0_43 = arith.constant 0 : index
    %c0_44 = arith.constant 0 : index
    %159 = vector.load %arg3[%c0_43, %c0_44] : memref<128x512xf32, #tpu.memory_space<vmem>>, vector<128x512xf32>
    %cst_45 = arith.constant dense<0.000000e+00> : vector<8x512xf32>
    %160 = tpu.matmul %147, %159, %cst_45 {dimension_numbers = #tpu.dot_dimension_numbers<[1], [0], [0], [1], [0, 0, 1, 1], [], []>} : vector<8x128xf32>, vector<128x512xf32>, vector<8x512xf32> -> vector<8x512xf32>
    %161 = arith.addf %158, %160 : vector<8x512xf32>
    %162 = vector.extract_strided_slice %161 {offsets = [0, 0], sizes = [8, 128], strides = [1, 1]} : vector<8x512xf32> to vector<8x128xf32>
    %163 = arith.negf %162 : vector<8x128xf32>
    %164 = math.exp %163 : vector<8x128xf32>
    %cst_46 = arith.constant 1.000000e+00 : f32
    %165 = vector.broadcast %cst_46 : f32 to vector<8x128xf32>
    %166 = arith.addf %165, %164 : vector<8x128xf32>
    %167 = arith.divf %165, %166 : vector<8x128xf32>
    %168 = vector.extract_strided_slice %161 {offsets = [0, 128], sizes = [8, 128], strides = [1, 1]} : vector<8x512xf32> to vector<8x128xf32>
    %169 = arith.negf %168 : vector<8x128xf32>
    %170 = math.exp %169 : vector<8x128xf32>
    %cst_47 = arith.constant 1.000000e+00 : f32
    %171 = vector.broadcast %cst_47 : f32 to vector<8x128xf32>
    %172 = arith.addf %171, %170 : vector<8x128xf32>
    %173 = arith.divf %171, %172 : vector<8x128xf32>
    %174 = vector.extract_strided_slice %161 {offsets = [0, 256], sizes = [8, 128], strides = [1, 1]} : vector<8x512xf32> to vector<8x128xf32>
    %175 = math.tanh %174 : vector<8x128xf32>
    %176 = vector.extract_strided_slice %161 {offsets = [0, 384], sizes = [8, 128], strides = [1, 1]} : vector<8x512xf32> to vector<8x128xf32>
    %177 = arith.negf %176 : vector<8x128xf32>
    %178 = math.exp %177 : vector<8x128xf32>
    %cst_48 = arith.constant 1.000000e+00 : f32
    %179 = vector.broadcast %cst_48 : f32 to vector<8x128xf32>
    %180 = arith.addf %179, %178 : vector<8x128xf32>
    %181 = arith.divf %179, %180 : vector<8x128xf32>
    %182 = arith.mulf %173, %148 : vector<8x128xf32>
    %183 = arith.mulf %167, %175 : vector<8x128xf32>
    %184 = arith.addf %182, %183 : vector<8x128xf32>
    %185 = math.tanh %184 : vector<8x128xf32>
    %186 = arith.mulf %181, %185 : vector<8x128xf32>
    %187 = tpu.concatenate %186, %149 in 1 : vector<8x128xf32>, vector<8x128xf32> -> vector<8x256xf32>
    %c0_49 = arith.constant 0 : index
    %c0_50 = arith.constant 0 : index
    %188 = vector.load %arg5[%c0_49, %c0_50] : memref<256x512xf32, #tpu.memory_space<vmem>>, vector<256x512xf32>
    %cst_51 = arith.constant dense<0.000000e+00> : vector<8x512xf32>
    %189 = tpu.matmul %187, %188, %cst_51 {dimension_numbers = #tpu.dot_dimension_numbers<[1], [0], [0], [1], [0, 0, 1, 1], [], []>} : vector<8x256xf32>, vector<256x512xf32>, vector<8x512xf32> -> vector<8x512xf32>
    %c0_52 = arith.constant 0 : index
    %c0_53 = arith.constant 0 : index
    %190 = vector.load %arg6[%c0_52, %c0_53] : memref<1x512xf32, #tpu.memory_space<vmem>>, vector<1x512xf32>
    %191 = vector.broadcast %190 : vector<1x512xf32> to vector<8x512xf32>
    %192 = arith.addf %189, %191 : vector<8x512xf32>
    %193 = vector.extract_strided_slice %192 {offsets = [0, 0], sizes = [8, 128], strides = [1, 1]} : vector<8x512xf32> to vector<8x128xf32>
    %194 = arith.negf %193 : vector<8x128xf32>
    %195 = math.exp %194 : vector<8x128xf32>
    %cst_54 = arith.constant 1.000000e+00 : f32
    %196 = vector.broadcast %cst_54 : f32 to vector<8x128xf32>
    %197 = arith.addf %196, %195 : vector<8x128xf32>
    %198 = arith.divf %196, %197 : vector<8x128xf32>
    %199 = vector.extract_strided_slice %192 {offsets = [0, 128], sizes = [8, 128], strides = [1, 1]} : vector<8x512xf32> to vector<8x128xf32>
    %200 = arith.negf %199 : vector<8x128xf32>
    %201 = math.exp %200 : vector<8x128xf32>
    %cst_55 = arith.constant 1.000000e+00 : f32
    %202 = vector.broadcast %cst_55 : f32 to vector<8x128xf32>
    %203 = arith.addf %202, %201 : vector<8x128xf32>
    %204 = arith.divf %202, %203 : vector<8x128xf32>
    %205 = vector.extract_strided_slice %192 {offsets = [0, 256], sizes = [8, 128], strides = [1, 1]} : vector<8x512xf32> to vector<8x128xf32>
    %206 = math.tanh %205 : vector<8x128xf32>
    %207 = vector.extract_strided_slice %192 {offsets = [0, 384], sizes = [8, 128], strides = [1, 1]} : vector<8x512xf32> to vector<8x128xf32>
    %208 = arith.negf %207 : vector<8x128xf32>
    %209 = math.exp %208 : vector<8x128xf32>
    %cst_56 = arith.constant 1.000000e+00 : f32
    %210 = vector.broadcast %cst_56 : f32 to vector<8x128xf32>
    %211 = arith.addf %210, %209 : vector<8x128xf32>
    %212 = arith.divf %210, %211 : vector<8x128xf32>
    %213 = arith.mulf %204, %150 : vector<8x128xf32>
    %214 = arith.mulf %198, %206 : vector<8x128xf32>
    %215 = arith.addf %213, %214 : vector<8x128xf32>
    %216 = math.tanh %215 : vector<8x128xf32>
    %217 = arith.mulf %212, %216 : vector<8x128xf32>
    %218 = arith.select %154, %186, %147 : vector<8x128xi1>, vector<8x128xf32>
    %219 = arith.select %154, %184, %148 : vector<8x128xi1>, vector<8x128xf32>
    %220 = arith.select %154, %217, %149 : vector<8x128xi1>, vector<8x128xf32>
    %221 = arith.select %154, %215, %150 : vector<8x128xi1>, vector<8x128xf32>
    %c3_i32 = arith.constant 3 : i32
    %222 = vector.broadcast %c3_i32 : i32 to vector<8x1xi32>
    %223 = arith.cmpi slt, %222, %0 : vector<8x1xi32>
    %224 = vector.shape_cast %223 : vector<8x1xi1> to vector<8x1xi1>
    %225 = vector.broadcast %224 : vector<8x1xi1> to vector<8x128xi1>
    %c8_i32_57 = arith.constant 8 : i32
    %226 = arith.muli %c3_i32, %c8_i32_57 : i32
    %227 = tpu.assume_multiple %226, 8 : i32
    %228 = arith.index_cast %227 : i32 to index
    %c0_58 = arith.constant 0 : index
    %229 = vector.load %arg10[%228, %c0_58] : memref<64x512xf32, #tpu.memory_space<vmem>>, vector<8x512xf32>
    %c0_59 = arith.constant 0 : index
    %c0_60 = arith.constant 0 : index
    %230 = vector.load %arg3[%c0_59, %c0_60] : memref<128x512xf32, #tpu.memory_space<vmem>>, vector<128x512xf32>
    %cst_61 = arith.constant dense<0.000000e+00> : vector<8x512xf32>
    %231 = tpu.matmul %218, %230, %cst_61 {dimension_numbers = #tpu.dot_dimension_numbers<[1], [0], [0], [1], [0, 0, 1, 1], [], []>} : vector<8x128xf32>, vector<128x512xf32>, vector<8x512xf32> -> vector<8x512xf32>
    %232 = arith.addf %229, %231 : vector<8x512xf32>
    %233 = vector.extract_strided_slice %232 {offsets = [0, 0], sizes = [8, 128], strides = [1, 1]} : vector<8x512xf32> to vector<8x128xf32>
    %234 = arith.negf %233 : vector<8x128xf32>
    %235 = math.exp %234 : vector<8x128xf32>
    %cst_62 = arith.constant 1.000000e+00 : f32
    %236 = vector.broadcast %cst_62 : f32 to vector<8x128xf32>
    %237 = arith.addf %236, %235 : vector<8x128xf32>
    %238 = arith.divf %236, %237 : vector<8x128xf32>
    %239 = vector.extract_strided_slice %232 {offsets = [0, 128], sizes = [8, 128], strides = [1, 1]} : vector<8x512xf32> to vector<8x128xf32>
    %240 = arith.negf %239 : vector<8x128xf32>
    %241 = math.exp %240 : vector<8x128xf32>
    %cst_63 = arith.constant 1.000000e+00 : f32
    %242 = vector.broadcast %cst_63 : f32 to vector<8x128xf32>
    %243 = arith.addf %242, %241 : vector<8x128xf32>
    %244 = arith.divf %242, %243 : vector<8x128xf32>
    %245 = vector.extract_strided_slice %232 {offsets = [0, 256], sizes = [8, 128], strides = [1, 1]} : vector<8x512xf32> to vector<8x128xf32>
    %246 = math.tanh %245 : vector<8x128xf32>
    %247 = vector.extract_strided_slice %232 {offsets = [0, 384], sizes = [8, 128], strides = [1, 1]} : vector<8x512xf32> to vector<8x128xf32>
    %248 = arith.negf %247 : vector<8x128xf32>
    %249 = math.exp %248 : vector<8x128xf32>
    %cst_64 = arith.constant 1.000000e+00 : f32
    %250 = vector.broadcast %cst_64 : f32 to vector<8x128xf32>
    %251 = arith.addf %250, %249 : vector<8x128xf32>
    %252 = arith.divf %250, %251 : vector<8x128xf32>
    %253 = arith.mulf %244, %219 : vector<8x128xf32>
    %254 = arith.mulf %238, %246 : vector<8x128xf32>
    %255 = arith.addf %253, %254 : vector<8x128xf32>
    %256 = math.tanh %255 : vector<8x128xf32>
    %257 = arith.mulf %252, %256 : vector<8x128xf32>
    %258 = tpu.concatenate %257, %220 in 1 : vector<8x128xf32>, vector<8x128xf32> -> vector<8x256xf32>
    %c0_65 = arith.constant 0 : index
    %c0_66 = arith.constant 0 : index
    %259 = vector.load %arg5[%c0_65, %c0_66] : memref<256x512xf32, #tpu.memory_space<vmem>>, vector<256x512xf32>
    %cst_67 = arith.constant dense<0.000000e+00> : vector<8x512xf32>
    %260 = tpu.matmul %258, %259, %cst_67 {dimension_numbers = #tpu.dot_dimension_numbers<[1], [0], [0], [1], [0, 0, 1, 1], [], []>} : vector<8x256xf32>, vector<256x512xf32>, vector<8x512xf32> -> vector<8x512xf32>
    %c0_68 = arith.constant 0 : index
    %c0_69 = arith.constant 0 : index
    %261 = vector.load %arg6[%c0_68, %c0_69] : memref<1x512xf32, #tpu.memory_space<vmem>>, vector<1x512xf32>
    %262 = vector.broadcast %261 : vector<1x512xf32> to vector<8x512xf32>
    %263 = arith.addf %260, %262 : vector<8x512xf32>
    %264 = vector.extract_strided_slice %263 {offsets = [0, 0], sizes = [8, 128], strides = [1, 1]} : vector<8x512xf32> to vector<8x128xf32>
    %265 = arith.negf %264 : vector<8x128xf32>
    %266 = math.exp %265 : vector<8x128xf32>
    %cst_70 = arith.constant 1.000000e+00 : f32
    %267 = vector.broadcast %cst_70 : f32 to vector<8x128xf32>
    %268 = arith.addf %267, %266 : vector<8x128xf32>
    %269 = arith.divf %267, %268 : vector<8x128xf32>
    %270 = vector.extract_strided_slice %263 {offsets = [0, 128], sizes = [8, 128], strides = [1, 1]} : vector<8x512xf32> to vector<8x128xf32>
    %271 = arith.negf %270 : vector<8x128xf32>
    %272 = math.exp %271 : vector<8x128xf32>
    %cst_71 = arith.constant 1.000000e+00 : f32
    %273 = vector.broadcast %cst_71 : f32 to vector<8x128xf32>
    %274 = arith.addf %273, %272 : vector<8x128xf32>
    %275 = arith.divf %273, %274 : vector<8x128xf32>
    %276 = vector.extract_strided_slice %263 {offsets = [0, 256], sizes = [8, 128], strides = [1, 1]} : vector<8x512xf32> to vector<8x128xf32>
    %277 = math.tanh %276 : vector<8x128xf32>
    %278 = vector.extract_strided_slice %263 {offsets = [0, 384], sizes = [8, 128], strides = [1, 1]} : vector<8x512xf32> to vector<8x128xf32>
    %279 = arith.negf %278 : vector<8x128xf32>
    %280 = math.exp %279 : vector<8x128xf32>
    %cst_72 = arith.constant 1.000000e+00 : f32
    %281 = vector.broadcast %cst_72 : f32 to vector<8x128xf32>
    %282 = arith.addf %281, %280 : vector<8x128xf32>
    %283 = arith.divf %281, %282 : vector<8x128xf32>
    %284 = arith.mulf %275, %221 : vector<8x128xf32>
    %285 = arith.mulf %269, %277 : vector<8x128xf32>
    %286 = arith.addf %284, %285 : vector<8x128xf32>
    %287 = math.tanh %286 : vector<8x128xf32>
    %288 = arith.mulf %283, %287 : vector<8x128xf32>
    %289 = arith.select %225, %257, %218 : vector<8x128xi1>, vector<8x128xf32>
    %290 = arith.select %225, %255, %219 : vector<8x128xi1>, vector<8x128xf32>
    %291 = arith.select %225, %288, %220 : vector<8x128xi1>, vector<8x128xf32>
    %292 = arith.select %225, %286, %221 : vector<8x128xi1>, vector<8x128xf32>
    %c4_i32 = arith.constant 4 : i32
    %293 = vector.broadcast %c4_i32 : i32 to vector<8x1xi32>
    %294 = arith.cmpi slt, %293, %0 : vector<8x1xi32>
    %295 = vector.shape_cast %294 : vector<8x1xi1> to vector<8x1xi1>
    %296 = vector.broadcast %295 : vector<8x1xi1> to vector<8x128xi1>
    %c8_i32_73 = arith.constant 8 : i32
    %297 = arith.muli %c4_i32, %c8_i32_73 : i32
    %298 = tpu.assume_multiple %297, 8 : i32
    %299 = arith.index_cast %298 : i32 to index
    %c0_74 = arith.constant 0 : index
    %300 = vector.load %arg10[%299, %c0_74] : memref<64x512xf32, #tpu.memory_space<vmem>>, vector<8x512xf32>
    %c0_75 = arith.constant 0 : index
    %c0_76 = arith.constant 0 : index
    %301 = vector.load %arg3[%c0_75, %c0_76] : memref<128x512xf32, #tpu.memory_space<vmem>>, vector<128x512xf32>
    %cst_77 = arith.constant dense<0.000000e+00> : vector<8x512xf32>
    %302 = tpu.matmul %289, %301, %cst_77 {dimension_numbers = #tpu.dot_dimension_numbers<[1], [0], [0], [1], [0, 0, 1, 1], [], []>} : vector<8x128xf32>, vector<128x512xf32>, vector<8x512xf32> -> vector<8x512xf32>
    %303 = arith.addf %300, %302 : vector<8x512xf32>
    %304 = vector.extract_strided_slice %303 {offsets = [0, 0], sizes = [8, 128], strides = [1, 1]} : vector<8x512xf32> to vector<8x128xf32>
    %305 = arith.negf %304 : vector<8x128xf32>
    %306 = math.exp %305 : vector<8x128xf32>
    %cst_78 = arith.constant 1.000000e+00 : f32
    %307 = vector.broadcast %cst_78 : f32 to vector<8x128xf32>
    %308 = arith.addf %307, %306 : vector<8x128xf32>
    %309 = arith.divf %307, %308 : vector<8x128xf32>
    %310 = vector.extract_strided_slice %303 {offsets = [0, 128], sizes = [8, 128], strides = [1, 1]} : vector<8x512xf32> to vector<8x128xf32>
    %311 = arith.negf %310 : vector<8x128xf32>
    %312 = math.exp %311 : vector<8x128xf32>
    %cst_79 = arith.constant 1.000000e+00 : f32
    %313 = vector.broadcast %cst_79 : f32 to vector<8x128xf32>
    %314 = arith.addf %313, %312 : vector<8x128xf32>
    %315 = arith.divf %313, %314 : vector<8x128xf32>
    %316 = vector.extract_strided_slice %303 {offsets = [0, 256], sizes = [8, 128], strides = [1, 1]} : vector<8x512xf32> to vector<8x128xf32>
    %317 = math.tanh %316 : vector<8x128xf32>
    %318 = vector.extract_strided_slice %303 {offsets = [0, 384], sizes = [8, 128], strides = [1, 1]} : vector<8x512xf32> to vector<8x128xf32>
    %319 = arith.negf %318 : vector<8x128xf32>
    %320 = math.exp %319 : vector<8x128xf32>
    %cst_80 = arith.constant 1.000000e+00 : f32
    %321 = vector.broadcast %cst_80 : f32 to vector<8x128xf32>
    %322 = arith.addf %321, %320 : vector<8x128xf32>
    %323 = arith.divf %321, %322 : vector<8x128xf32>
    %324 = arith.mulf %315, %290 : vector<8x128xf32>
    %325 = arith.mulf %309, %317 : vector<8x128xf32>
    %326 = arith.addf %324, %325 : vector<8x128xf32>
    %327 = math.tanh %326 : vector<8x128xf32>
    %328 = arith.mulf %323, %327 : vector<8x128xf32>
    %329 = tpu.concatenate %328, %291 in 1 : vector<8x128xf32>, vector<8x128xf32> -> vector<8x256xf32>
    %c0_81 = arith.constant 0 : index
    %c0_82 = arith.constant 0 : index
    %330 = vector.load %arg5[%c0_81, %c0_82] : memref<256x512xf32, #tpu.memory_space<vmem>>, vector<256x512xf32>
    %cst_83 = arith.constant dense<0.000000e+00> : vector<8x512xf32>
    %331 = tpu.matmul %329, %330, %cst_83 {dimension_numbers = #tpu.dot_dimension_numbers<[1], [0], [0], [1], [0, 0, 1, 1], [], []>} : vector<8x256xf32>, vector<256x512xf32>, vector<8x512xf32> -> vector<8x512xf32>
    %c0_84 = arith.constant 0 : index
    %c0_85 = arith.constant 0 : index
    %332 = vector.load %arg6[%c0_84, %c0_85] : memref<1x512xf32, #tpu.memory_space<vmem>>, vector<1x512xf32>
    %333 = vector.broadcast %332 : vector<1x512xf32> to vector<8x512xf32>
    %334 = arith.addf %331, %333 : vector<8x512xf32>
    %335 = vector.extract_strided_slice %334 {offsets = [0, 0], sizes = [8, 128], strides = [1, 1]} : vector<8x512xf32> to vector<8x128xf32>
    %336 = arith.negf %335 : vector<8x128xf32>
    %337 = math.exp %336 : vector<8x128xf32>
    %cst_86 = arith.constant 1.000000e+00 : f32
    %338 = vector.broadcast %cst_86 : f32 to vector<8x128xf32>
    %339 = arith.addf %338, %337 : vector<8x128xf32>
    %340 = arith.divf %338, %339 : vector<8x128xf32>
    %341 = vector.extract_strided_slice %334 {offsets = [0, 128], sizes = [8, 128], strides = [1, 1]} : vector<8x512xf32> to vector<8x128xf32>
    %342 = arith.negf %341 : vector<8x128xf32>
    %343 = math.exp %342 : vector<8x128xf32>
    %cst_87 = arith.constant 1.000000e+00 : f32
    %344 = vector.broadcast %cst_87 : f32 to vector<8x128xf32>
    %345 = arith.addf %344, %343 : vector<8x128xf32>
    %346 = arith.divf %344, %345 : vector<8x128xf32>
    %347 = vector.extract_strided_slice %334 {offsets = [0, 256], sizes = [8, 128], strides = [1, 1]} : vector<8x512xf32> to vector<8x128xf32>
    %348 = math.tanh %347 : vector<8x128xf32>
    %349 = vector.extract_strided_slice %334 {offsets = [0, 384], sizes = [8, 128], strides = [1, 1]} : vector<8x512xf32> to vector<8x128xf32>
    %350 = arith.negf %349 : vector<8x128xf32>
    %351 = math.exp %350 : vector<8x128xf32>
    %cst_88 = arith.constant 1.000000e+00 : f32
    %352 = vector.broadcast %cst_88 : f32 to vector<8x128xf32>
    %353 = arith.addf %352, %351 : vector<8x128xf32>
    %354 = arith.divf %352, %353 : vector<8x128xf32>
    %355 = arith.mulf %346, %292 : vector<8x128xf32>
    %356 = arith.mulf %340, %348 : vector<8x128xf32>
    %357 = arith.addf %355, %356 : vector<8x128xf32>
    %358 = math.tanh %357 : vector<8x128xf32>
    %359 = arith.mulf %354, %358 : vector<8x128xf32>
    %360 = arith.select %296, %328, %289 : vector<8x128xi1>, vector<8x128xf32>
    %361 = arith.select %296, %326, %290 : vector<8x128xi1>, vector<8x128xf32>
    %362 = arith.select %296, %359, %291 : vector<8x128xi1>, vector<8x128xf32>
    %363 = arith.select %296, %357, %292 : vector<8x128xi1>, vector<8x128xf32>
    %c5_i32 = arith.constant 5 : i32
    %364 = vector.broadcast %c5_i32 : i32 to vector<8x1xi32>
    %365 = arith.cmpi slt, %364, %0 : vector<8x1xi32>
    %366 = vector.shape_cast %365 : vector<8x1xi1> to vector<8x1xi1>
    %367 = vector.broadcast %366 : vector<8x1xi1> to vector<8x128xi1>
    %c8_i32_89 = arith.constant 8 : i32
    %368 = arith.muli %c5_i32, %c8_i32_89 : i32
    %369 = tpu.assume_multiple %368, 8 : i32
    %370 = arith.index_cast %369 : i32 to index
    %c0_90 = arith.constant 0 : index
    %371 = vector.load %arg10[%370, %c0_90] : memref<64x512xf32, #tpu.memory_space<vmem>>, vector<8x512xf32>
    %c0_91 = arith.constant 0 : index
    %c0_92 = arith.constant 0 : index
    %372 = vector.load %arg3[%c0_91, %c0_92] : memref<128x512xf32, #tpu.memory_space<vmem>>, vector<128x512xf32>
    %cst_93 = arith.constant dense<0.000000e+00> : vector<8x512xf32>
    %373 = tpu.matmul %360, %372, %cst_93 {dimension_numbers = #tpu.dot_dimension_numbers<[1], [0], [0], [1], [0, 0, 1, 1], [], []>} : vector<8x128xf32>, vector<128x512xf32>, vector<8x512xf32> -> vector<8x512xf32>
    %374 = arith.addf %371, %373 : vector<8x512xf32>
    %375 = vector.extract_strided_slice %374 {offsets = [0, 0], sizes = [8, 128], strides = [1, 1]} : vector<8x512xf32> to vector<8x128xf32>
    %376 = arith.negf %375 : vector<8x128xf32>
    %377 = math.exp %376 : vector<8x128xf32>
    %cst_94 = arith.constant 1.000000e+00 : f32
    %378 = vector.broadcast %cst_94 : f32 to vector<8x128xf32>
    %379 = arith.addf %378, %377 : vector<8x128xf32>
    %380 = arith.divf %378, %379 : vector<8x128xf32>
    %381 = vector.extract_strided_slice %374 {offsets = [0, 128], sizes = [8, 128], strides = [1, 1]} : vector<8x512xf32> to vector<8x128xf32>
    %382 = arith.negf %381 : vector<8x128xf32>
    %383 = math.exp %382 : vector<8x128xf32>
    %cst_95 = arith.constant 1.000000e+00 : f32
    %384 = vector.broadcast %cst_95 : f32 to vector<8x128xf32>
    %385 = arith.addf %384, %383 : vector<8x128xf32>
    %386 = arith.divf %384, %385 : vector<8x128xf32>
    %387 = vector.extract_strided_slice %374 {offsets = [0, 256], sizes = [8, 128], strides = [1, 1]} : vector<8x512xf32> to vector<8x128xf32>
    %388 = math.tanh %387 : vector<8x128xf32>
    %389 = vector.extract_strided_slice %374 {offsets = [0, 384], sizes = [8, 128], strides = [1, 1]} : vector<8x512xf32> to vector<8x128xf32>
    %390 = arith.negf %389 : vector<8x128xf32>
    %391 = math.exp %390 : vector<8x128xf32>
    %cst_96 = arith.constant 1.000000e+00 : f32
    %392 = vector.broadcast %cst_96 : f32 to vector<8x128xf32>
    %393 = arith.addf %392, %391 : vector<8x128xf32>
    %394 = arith.divf %392, %393 : vector<8x128xf32>
    %395 = arith.mulf %386, %361 : vector<8x128xf32>
    %396 = arith.mulf %380, %388 : vector<8x128xf32>
    %397 = arith.addf %395, %396 : vector<8x128xf32>
    %398 = math.tanh %397 : vector<8x128xf32>
    %399 = arith.mulf %394, %398 : vector<8x128xf32>
    %400 = tpu.concatenate %399, %362 in 1 : vector<8x128xf32>, vector<8x128xf32> -> vector<8x256xf32>
    %c0_97 = arith.constant 0 : index
    %c0_98 = arith.constant 0 : index
    %401 = vector.load %arg5[%c0_97, %c0_98] : memref<256x512xf32, #tpu.memory_space<vmem>>, vector<256x512xf32>
    %cst_99 = arith.constant dense<0.000000e+00> : vector<8x512xf32>
    %402 = tpu.matmul %400, %401, %cst_99 {dimension_numbers = #tpu.dot_dimension_numbers<[1], [0], [0], [1], [0, 0, 1, 1], [], []>} : vector<8x256xf32>, vector<256x512xf32>, vector<8x512xf32> -> vector<8x512xf32>
    %c0_100 = arith.constant 0 : index
    %c0_101 = arith.constant 0 : index
    %403 = vector.load %arg6[%c0_100, %c0_101] : memref<1x512xf32, #tpu.memory_space<vmem>>, vector<1x512xf32>
    %404 = vector.broadcast %403 : vector<1x512xf32> to vector<8x512xf32>
    %405 = arith.addf %402, %404 : vector<8x512xf32>
    %406 = vector.extract_strided_slice %405 {offsets = [0, 0], sizes = [8, 128], strides = [1, 1]} : vector<8x512xf32> to vector<8x128xf32>
    %407 = arith.negf %406 : vector<8x128xf32>
    %408 = math.exp %407 : vector<8x128xf32>
    %cst_102 = arith.constant 1.000000e+00 : f32
    %409 = vector.broadcast %cst_102 : f32 to vector<8x128xf32>
    %410 = arith.addf %409, %408 : vector<8x128xf32>
    %411 = arith.divf %409, %410 : vector<8x128xf32>
    %412 = vector.extract_strided_slice %405 {offsets = [0, 128], sizes = [8, 128], strides = [1, 1]} : vector<8x512xf32> to vector<8x128xf32>
    %413 = arith.negf %412 : vector<8x128xf32>
    %414 = math.exp %413 : vector<8x128xf32>
    %cst_103 = arith.constant 1.000000e+00 : f32
    %415 = vector.broadcast %cst_103 : f32 to vector<8x128xf32>
    %416 = arith.addf %415, %414 : vector<8x128xf32>
    %417 = arith.divf %415, %416 : vector<8x128xf32>
    %418 = vector.extract_strided_slice %405 {offsets = [0, 256], sizes = [8, 128], strides = [1, 1]} : vector<8x512xf32> to vector<8x128xf32>
    %419 = math.tanh %418 : vector<8x128xf32>
    %420 = vector.extract_strided_slice %405 {offsets = [0, 384], sizes = [8, 128], strides = [1, 1]} : vector<8x512xf32> to vector<8x128xf32>
    %421 = arith.negf %420 : vector<8x128xf32>
    %422 = math.exp %421 : vector<8x128xf32>
    %cst_104 = arith.constant 1.000000e+00 : f32
    %423 = vector.broadcast %cst_104 : f32 to vector<8x128xf32>
    %424 = arith.addf %423, %422 : vector<8x128xf32>
    %425 = arith.divf %423, %424 : vector<8x128xf32>
    %426 = arith.mulf %417, %363 : vector<8x128xf32>
    %427 = arith.mulf %411, %419 : vector<8x128xf32>
    %428 = arith.addf %426, %427 : vector<8x128xf32>
    %429 = math.tanh %428 : vector<8x128xf32>
    %430 = arith.mulf %425, %429 : vector<8x128xf32>
    %431 = arith.select %367, %399, %360 : vector<8x128xi1>, vector<8x128xf32>
    %432 = arith.select %367, %397, %361 : vector<8x128xi1>, vector<8x128xf32>
    %433 = arith.select %367, %430, %362 : vector<8x128xi1>, vector<8x128xf32>
    %434 = arith.select %367, %428, %363 : vector<8x128xi1>, vector<8x128xf32>
    %c6_i32 = arith.constant 6 : i32
    %435 = vector.broadcast %c6_i32 : i32 to vector<8x1xi32>
    %436 = arith.cmpi slt, %435, %0 : vector<8x1xi32>
    %437 = vector.shape_cast %436 : vector<8x1xi1> to vector<8x1xi1>
    %438 = vector.broadcast %437 : vector<8x1xi1> to vector<8x128xi1>
    %c8_i32_105 = arith.constant 8 : i32
    %439 = arith.muli %c6_i32, %c8_i32_105 : i32
    %440 = tpu.assume_multiple %439, 8 : i32
    %441 = arith.index_cast %440 : i32 to index
    %c0_106 = arith.constant 0 : index
    %442 = vector.load %arg10[%441, %c0_106] : memref<64x512xf32, #tpu.memory_space<vmem>>, vector<8x512xf32>
    %c0_107 = arith.constant 0 : index
    %c0_108 = arith.constant 0 : index
    %443 = vector.load %arg3[%c0_107, %c0_108] : memref<128x512xf32, #tpu.memory_space<vmem>>, vector<128x512xf32>
    %cst_109 = arith.constant dense<0.000000e+00> : vector<8x512xf32>
    %444 = tpu.matmul %431, %443, %cst_109 {dimension_numbers = #tpu.dot_dimension_numbers<[1], [0], [0], [1], [0, 0, 1, 1], [], []>} : vector<8x128xf32>, vector<128x512xf32>, vector<8x512xf32> -> vector<8x512xf32>
    %445 = arith.addf %442, %444 : vector<8x512xf32>
    %446 = vector.extract_strided_slice %445 {offsets = [0, 0], sizes = [8, 128], strides = [1, 1]} : vector<8x512xf32> to vector<8x128xf32>
    %447 = arith.negf %446 : vector<8x128xf32>
    %448 = math.exp %447 : vector<8x128xf32>
    %cst_110 = arith.constant 1.000000e+00 : f32
    %449 = vector.broadcast %cst_110 : f32 to vector<8x128xf32>
    %450 = arith.addf %449, %448 : vector<8x128xf32>
    %451 = arith.divf %449, %450 : vector<8x128xf32>
    %452 = vector.extract_strided_slice %445 {offsets = [0, 128], sizes = [8, 128], strides = [1, 1]} : vector<8x512xf32> to vector<8x128xf32>
    %453 = arith.negf %452 : vector<8x128xf32>
    %454 = math.exp %453 : vector<8x128xf32>
    %cst_111 = arith.constant 1.000000e+00 : f32
    %455 = vector.broadcast %cst_111 : f32 to vector<8x128xf32>
    %456 = arith.addf %455, %454 : vector<8x128xf32>
    %457 = arith.divf %455, %456 : vector<8x128xf32>
    %458 = vector.extract_strided_slice %445 {offsets = [0, 256], sizes = [8, 128], strides = [1, 1]} : vector<8x512xf32> to vector<8x128xf32>
    %459 = math.tanh %458 : vector<8x128xf32>
    %460 = vector.extract_strided_slice %445 {offsets = [0, 384], sizes = [8, 128], strides = [1, 1]} : vector<8x512xf32> to vector<8x128xf32>
    %461 = arith.negf %460 : vector<8x128xf32>
    %462 = math.exp %461 : vector<8x128xf32>
    %cst_112 = arith.constant 1.000000e+00 : f32
    %463 = vector.broadcast %cst_112 : f32 to vector<8x128xf32>
    %464 = arith.addf %463, %462 : vector<8x128xf32>
    %465 = arith.divf %463, %464 : vector<8x128xf32>
    %466 = arith.mulf %457, %432 : vector<8x128xf32>
    %467 = arith.mulf %451, %459 : vector<8x128xf32>
    %468 = arith.addf %466, %467 : vector<8x128xf32>
    %469 = math.tanh %468 : vector<8x128xf32>
    %470 = arith.mulf %465, %469 : vector<8x128xf32>
    %471 = tpu.concatenate %470, %433 in 1 : vector<8x128xf32>, vector<8x128xf32> -> vector<8x256xf32>
    %c0_113 = arith.constant 0 : index
    %c0_114 = arith.constant 0 : index
    %472 = vector.load %arg5[%c0_113, %c0_114] : memref<256x512xf32, #tpu.memory_space<vmem>>, vector<256x512xf32>
    %cst_115 = arith.constant dense<0.000000e+00> : vector<8x512xf32>
    %473 = tpu.matmul %471, %472, %cst_115 {dimension_numbers = #tpu.dot_dimension_numbers<[1], [0], [0], [1], [0, 0, 1, 1], [], []>} : vector<8x256xf32>, vector<256x512xf32>, vector<8x512xf32> -> vector<8x512xf32>
    %c0_116 = arith.constant 0 : index
    %c0_117 = arith.constant 0 : index
    %474 = vector.load %arg6[%c0_116, %c0_117] : memref<1x512xf32, #tpu.memory_space<vmem>>, vector<1x512xf32>
    %475 = vector.broadcast %474 : vector<1x512xf32> to vector<8x512xf32>
    %476 = arith.addf %473, %475 : vector<8x512xf32>
    %477 = vector.extract_strided_slice %476 {offsets = [0, 0], sizes = [8, 128], strides = [1, 1]} : vector<8x512xf32> to vector<8x128xf32>
    %478 = arith.negf %477 : vector<8x128xf32>
    %479 = math.exp %478 : vector<8x128xf32>
    %cst_118 = arith.constant 1.000000e+00 : f32
    %480 = vector.broadcast %cst_118 : f32 to vector<8x128xf32>
    %481 = arith.addf %480, %479 : vector<8x128xf32>
    %482 = arith.divf %480, %481 : vector<8x128xf32>
    %483 = vector.extract_strided_slice %476 {offsets = [0, 128], sizes = [8, 128], strides = [1, 1]} : vector<8x512xf32> to vector<8x128xf32>
    %484 = arith.negf %483 : vector<8x128xf32>
    %485 = math.exp %484 : vector<8x128xf32>
    %cst_119 = arith.constant 1.000000e+00 : f32
    %486 = vector.broadcast %cst_119 : f32 to vector<8x128xf32>
    %487 = arith.addf %486, %485 : vector<8x128xf32>
    %488 = arith.divf %486, %487 : vector<8x128xf32>
    %489 = vector.extract_strided_slice %476 {offsets = [0, 256], sizes = [8, 128], strides = [1, 1]} : vector<8x512xf32> to vector<8x128xf32>
    %490 = math.tanh %489 : vector<8x128xf32>
    %491 = vector.extract_strided_slice %476 {offsets = [0, 384], sizes = [8, 128], strides = [1, 1]} : vector<8x512xf32> to vector<8x128xf32>
    %492 = arith.negf %491 : vector<8x128xf32>
    %493 = math.exp %492 : vector<8x128xf32>
    %cst_120 = arith.constant 1.000000e+00 : f32
    %494 = vector.broadcast %cst_120 : f32 to vector<8x128xf32>
    %495 = arith.addf %494, %493 : vector<8x128xf32>
    %496 = arith.divf %494, %495 : vector<8x128xf32>
    %497 = arith.mulf %488, %434 : vector<8x128xf32>
    %498 = arith.mulf %482, %490 : vector<8x128xf32>
    %499 = arith.addf %497, %498 : vector<8x128xf32>
    %500 = math.tanh %499 : vector<8x128xf32>
    %501 = arith.mulf %496, %500 : vector<8x128xf32>
    %502 = arith.select %438, %470, %431 : vector<8x128xi1>, vector<8x128xf32>
    %503 = arith.select %438, %468, %432 : vector<8x128xi1>, vector<8x128xf32>
    %504 = arith.select %438, %501, %433 : vector<8x128xi1>, vector<8x128xf32>
    %505 = arith.select %438, %499, %434 : vector<8x128xi1>, vector<8x128xf32>
    %c7_i32 = arith.constant 7 : i32
    %506 = vector.broadcast %c7_i32 : i32 to vector<8x1xi32>
    %507 = arith.cmpi slt, %506, %0 : vector<8x1xi32>
    %508 = vector.shape_cast %507 : vector<8x1xi1> to vector<8x1xi1>
    %509 = vector.broadcast %508 : vector<8x1xi1> to vector<8x128xi1>
    %c8_i32_121 = arith.constant 8 : i32
    %510 = arith.muli %c7_i32, %c8_i32_121 : i32
    %511 = tpu.assume_multiple %510, 8 : i32
    %512 = arith.index_cast %511 : i32 to index
    %c0_122 = arith.constant 0 : index
    %513 = vector.load %arg10[%512, %c0_122] : memref<64x512xf32, #tpu.memory_space<vmem>>, vector<8x512xf32>
    %c0_123 = arith.constant 0 : index
    %c0_124 = arith.constant 0 : index
    %514 = vector.load %arg3[%c0_123, %c0_124] : memref<128x512xf32, #tpu.memory_space<vmem>>, vector<128x512xf32>
    %cst_125 = arith.constant dense<0.000000e+00> : vector<8x512xf32>
    %515 = tpu.matmul %502, %514, %cst_125 {dimension_numbers = #tpu.dot_dimension_numbers<[1], [0], [0], [1], [0, 0, 1, 1], [], []>} : vector<8x128xf32>, vector<128x512xf32>, vector<8x512xf32> -> vector<8x512xf32>
    %516 = arith.addf %513, %515 : vector<8x512xf32>
    %517 = vector.extract_strided_slice %516 {offsets = [0, 0], sizes = [8, 128], strides = [1, 1]} : vector<8x512xf32> to vector<8x128xf32>
    %518 = arith.negf %517 : vector<8x128xf32>
    %519 = math.exp %518 : vector<8x128xf32>
    %cst_126 = arith.constant 1.000000e+00 : f32
    %520 = vector.broadcast %cst_126 : f32 to vector<8x128xf32>
    %521 = arith.addf %520, %519 : vector<8x128xf32>
    %522 = arith.divf %520, %521 : vector<8x128xf32>
    %523 = vector.extract_strided_slice %516 {offsets = [0, 128], sizes = [8, 128], strides = [1, 1]} : vector<8x512xf32> to vector<8x128xf32>
    %524 = arith.negf %523 : vector<8x128xf32>
    %525 = math.exp %524 : vector<8x128xf32>
    %cst_127 = arith.constant 1.000000e+00 : f32
    %526 = vector.broadcast %cst_127 : f32 to vector<8x128xf32>
    %527 = arith.addf %526, %525 : vector<8x128xf32>
    %528 = arith.divf %526, %527 : vector<8x128xf32>
    %529 = vector.extract_strided_slice %516 {offsets = [0, 256], sizes = [8, 128], strides = [1, 1]} : vector<8x512xf32> to vector<8x128xf32>
    %530 = math.tanh %529 : vector<8x128xf32>
    %531 = vector.extract_strided_slice %516 {offsets = [0, 384], sizes = [8, 128], strides = [1, 1]} : vector<8x512xf32> to vector<8x128xf32>
    %532 = arith.negf %531 : vector<8x128xf32>
    %533 = math.exp %532 : vector<8x128xf32>
    %cst_128 = arith.constant 1.000000e+00 : f32
    %534 = vector.broadcast %cst_128 : f32 to vector<8x128xf32>
    %535 = arith.addf %534, %533 : vector<8x128xf32>
    %536 = arith.divf %534, %535 : vector<8x128xf32>
    %537 = arith.mulf %528, %503 : vector<8x128xf32>
    %538 = arith.mulf %522, %530 : vector<8x128xf32>
    %539 = arith.addf %537, %538 : vector<8x128xf32>
    %540 = math.tanh %539 : vector<8x128xf32>
    %541 = arith.mulf %536, %540 : vector<8x128xf32>
    %542 = tpu.concatenate %541, %504 in 1 : vector<8x128xf32>, vector<8x128xf32> -> vector<8x256xf32>
    %c0_129 = arith.constant 0 : index
    %c0_130 = arith.constant 0 : index
    %543 = vector.load %arg5[%c0_129, %c0_130] : memref<256x512xf32, #tpu.memory_space<vmem>>, vector<256x512xf32>
    %cst_131 = arith.constant dense<0.000000e+00> : vector<8x512xf32>
    %544 = tpu.matmul %542, %543, %cst_131 {dimension_numbers = #tpu.dot_dimension_numbers<[1], [0], [0], [1], [0, 0, 1, 1], [], []>} : vector<8x256xf32>, vector<256x512xf32>, vector<8x512xf32> -> vector<8x512xf32>
    %c0_132 = arith.constant 0 : index
    %c0_133 = arith.constant 0 : index
    %545 = vector.load %arg6[%c0_132, %c0_133] : memref<1x512xf32, #tpu.memory_space<vmem>>, vector<1x512xf32>
    %546 = vector.broadcast %545 : vector<1x512xf32> to vector<8x512xf32>
    %547 = arith.addf %544, %546 : vector<8x512xf32>
    %548 = vector.extract_strided_slice %547 {offsets = [0, 0], sizes = [8, 128], strides = [1, 1]} : vector<8x512xf32> to vector<8x128xf32>
    %549 = arith.negf %548 : vector<8x128xf32>
    %550 = math.exp %549 : vector<8x128xf32>
    %cst_134 = arith.constant 1.000000e+00 : f32
    %551 = vector.broadcast %cst_134 : f32 to vector<8x128xf32>
    %552 = arith.addf %551, %550 : vector<8x128xf32>
    %553 = arith.divf %551, %552 : vector<8x128xf32>
    %554 = vector.extract_strided_slice %547 {offsets = [0, 128], sizes = [8, 128], strides = [1, 1]} : vector<8x512xf32> to vector<8x128xf32>
    %555 = arith.negf %554 : vector<8x128xf32>
    %556 = math.exp %555 : vector<8x128xf32>
    %cst_135 = arith.constant 1.000000e+00 : f32
    %557 = vector.broadcast %cst_135 : f32 to vector<8x128xf32>
    %558 = arith.addf %557, %556 : vector<8x128xf32>
    %559 = arith.divf %557, %558 : vector<8x128xf32>
    %560 = vector.extract_strided_slice %547 {offsets = [0, 256], sizes = [8, 128], strides = [1, 1]} : vector<8x512xf32> to vector<8x128xf32>
    %561 = math.tanh %560 : vector<8x128xf32>
    %562 = vector.extract_strided_slice %547 {offsets = [0, 384], sizes = [8, 128], strides = [1, 1]} : vector<8x512xf32> to vector<8x128xf32>
    %563 = arith.negf %562 : vector<8x128xf32>
    %564 = math.exp %563 : vector<8x128xf32>
    %cst_136 = arith.constant 1.000000e+00 : f32
    %565 = vector.broadcast %cst_136 : f32 to vector<8x128xf32>
    %566 = arith.addf %565, %564 : vector<8x128xf32>
    %567 = arith.divf %565, %566 : vector<8x128xf32>
    %568 = arith.mulf %559, %505 : vector<8x128xf32>
    %569 = arith.mulf %553, %561 : vector<8x128xf32>
    %570 = arith.addf %568, %569 : vector<8x128xf32>
    %571 = math.tanh %570 : vector<8x128xf32>
    %572 = arith.mulf %567, %571 : vector<8x128xf32>
    %573 = arith.select %509, %541, %502 : vector<8x128xi1>, vector<8x128xf32>
    %574 = arith.select %509, %539, %503 : vector<8x128xi1>, vector<8x128xf32>
    %575 = arith.select %509, %572, %504 : vector<8x128xi1>, vector<8x128xf32>
    %576 = arith.select %509, %570, %505 : vector<8x128xi1>, vector<8x128xf32>
    %c8_i32_137 = arith.constant 8 : i32
    %c0_138 = arith.constant 0 : index
    %c0_139 = arith.constant 0 : index
    %577 = vector.load %arg7[%c0_138, %c0_139] : memref<128x128xf32, #tpu.memory_space<vmem>>, vector<128x128xf32>
    %cst_140 = arith.constant dense<0.000000e+00> : vector<8x128xf32>
    %578 = tpu.matmul %575, %577, %cst_140 {dimension_numbers = #tpu.dot_dimension_numbers<[1], [0], [0], [1], [0, 0, 1, 1], [], []>} : vector<8x128xf32>, vector<128x128xf32>, vector<8x128xf32> -> vector<8x128xf32>
    %c0_141 = arith.constant 0 : index
    %c0_142 = arith.constant 0 : index
    %579 = vector.load %arg8[%c0_141, %c0_142] : memref<1x128xf32, #tpu.memory_space<vmem>>, vector<1x128xf32>
    %580 = vector.broadcast %579 : vector<1x128xf32> to vector<8x128xf32>
    %581 = arith.addf %578, %580 : vector<8x128xf32>
    %c0_143 = arith.constant 0 : index
    %c0_144 = arith.constant 0 : index
    %582 = vector.load %arg9[%c0_143, %c0_144] : memref<8x128xf32, #tpu.memory_space<vmem>>, vector<8x128xf32>
    tpu.vector_store %arg9[%c0_143, %c0_144], %581 {strides = array<i32>} : memref<8x128xf32, #tpu.memory_space<vmem>>, vector<8x128xf32>,
    return
  }
}

</mosaic_0001>

<llo_original>
// kernel: tpu_custom_call.1
$region0: #{tpu_custom_call.1}
  #allocation0 [shape = 'u32[]', space=smem, size = 0x4, offset = 0x4, fixed_abs, tag = 'smem constant byte address 0x4 - core index']
  #allocation1 [shape = 'u32[72,128]{1,0:T(1,128)}', space=vmem, size = 0x9000, scoped, tag = 'internal scratch']
  #allocation2 [shape = 'f32[64,512]{1,0:T(8,128)}', space=vmem, size = 0x20000, scoped, tag = 'scratch operand']
  %s0 = inlined_call_operand.vmem [shape: s32[8,1], index: 0, kind: input, shape index: {}]
  %s1 = inlined_call_operand.vmem [shape: f32[64,10], index: 1, kind: input, shape index: {}]
  %s2 = inlined_call_operand.vmem [shape: f32[10,512], index: 2, kind: input, shape index: {}]
  %s3 = inlined_call_operand.hbm [shape: f32[128,512], index: 3, kind: input, shape index: {}]
  %s4 = inlined_call_operand.vmem [shape: f32[1,512], index: 4, kind: input, shape index: {}]
  %s5 = inlined_call_operand.hbm [shape: f32[256,512], index: 5, kind: input, shape index: {}]
  %s6 = inlined_call_operand.vmem [shape: f32[1,512], index: 6, kind: input, shape index: {}]
  %s7 = inlined_call_operand.hbm [shape: f32[128,128], index: 7, kind: input, shape index: {}]
  %s8 = inlined_call_operand.vmem [shape: f32[1,128], index: 8, kind: input, shape index: {}]
  %s9 = inlined_call_operand.hbm [shape: f32[8,128], index: 9, kind: output, shape index: {}]
  %s10 = sld [smem:[#allocation0]]
  $region58: #{tpu_custom_call.1} parent=0
    _
  %s12 = ssub.s32 1, %s10
  %s13 = scalar_select 0, %s12, %s10
  $region1: #{tpu_custom_call.1} parent=0
    #allocation3 [shape = 'u8[262144]{0}', space=vmem, size = 0x40000, scoped, tag = 'input window, operand 3, single buffered']
    #allocation4 [shape = 's32[1]{0}', space=sflag, size = 0x4, scoped, tag = 'scoped memory for tpu_custom_call.1']
    #allocation5 [shape = 's32[1]{0}', space=sflag, size = 0x4, scoped, tag = 'scoped memory for tpu_custom_call.1']
    #allocation6 [shape = 'u8[524288]{0}', space=vmem, size = 0x80000, scoped, tag = 'input window, operand 5, single buffered']
    #allocation7 [shape = 's32[1]{0}', space=sflag, size = 0x4, scoped, tag = 'scoped memory for tpu_custom_call.1']
    #allocation8 [shape = 'u8[65536]{0}', space=vmem, size = 0x10000, scoped, tag = 'input window, operand 7, single buffered']
    #allocation9 [shape = 'u8[4096]{0}', space=vmem, size = 0x1000, scoped, tag = 'output window, operand 0, single buffered']
    %14 = vsyncpa [#allocation4], 0
    %15 = vsyncpa [#allocation7], 0
    %16 = vsyncpa [#allocation5], 0
    // Predicated region
    $region2: #{tpu_custom_call.1} parent=1 // pred_check
      _
    $region3: #{tpu_custom_call.1} parent=1 // pred_check_branch
      %18 = sbr.rel (0) target = $region5
    $region4: #{tpu_custom_call.1} parent=1 // pred_region
      _
    $region5: #{tpu_custom_call.1} parent=1 // pred_fallthru
      _
    // Predicated region
    $region6: #{tpu_custom_call.1} parent=1 // pred_check
      _
    $region7: #{tpu_custom_call.1} parent=1 // pred_check_branch
      %20 = sbr.rel (0) target = $region9
    $region8: #{tpu_custom_call.1} parent=1 // pred_region
      _
    $region9: #{tpu_custom_call.1} parent=1 // pred_fallthru
      _
    // Predicated region
    $region10: #{tpu_custom_call.1} parent=1 // pred_check
      _
    $region11: #{tpu_custom_call.1} parent=1 // pred_check_branch
      %22 = sbr.rel (0) target = $region13
    $region12: #{tpu_custom_call.1} parent=1 // pred_region
      _
    $region13: #{tpu_custom_call.1} parent=1 // pred_fallthru
      _
    // Predicated region
    $region14: #{tpu_custom_call.1} parent=1 // pred_check
      _
    $region15: #{tpu_custom_call.1} parent=1 // pred_check_branch
      %24 = sbr.rel (0) target = $region17
    $region16: #{tpu_custom_call.1} parent=1 // pred_region
      %26 = vsyncadd [#allocation4], 0
      %s27 = sshll.u32 %s3, 4
      %s28 = int_to_ptr.hbm [resolvable:$true] %s27
      %s29 = sshll.u32 [#allocation3], 4
      %s30 = int_to_ptr.vmem [resolvable:$true] %s29
      %35 = dma.hbm_to_vmem [thread:$0]  %s28, 8192, %s30, [#allocation4], 512, 512, 32
    $region17: #{tpu_custom_call.1} parent=1 // pred_fallthru
      _
    // Predicated region
    $region18: #{tpu_custom_call.1} parent=1 // pred_check
      _
    $region19: #{tpu_custom_call.1} parent=1 // pred_check_branch
      %37 = sbr.rel (0) target = $region21
    $region20: #{tpu_custom_call.1} parent=1 // pred_region
      _
    $region21: #{tpu_custom_call.1} parent=1 // pred_fallthru
      _
    // Predicated region
    $region22: #{tpu_custom_call.1} parent=1 // pred_check
      _
    $region23: #{tpu_custom_call.1} parent=1 // pred_check_branch
      %39 = sbr.rel (0) target = $region25
    $region24: #{tpu_custom_call.1} parent=1 // pred_region
      %41 = vsyncadd [#allocation7], 0
      %s42 = sshll.u32 %s5, 4
      %s43 = int_to_ptr.hbm [resolvable:$true] %s42
      %s44 = sshll.u32 [#allocation6], 4
      %s45 = int_to_ptr.vmem [resolvable:$true] %s44
      %50 = dma.hbm_to_vmem [thread:$0]  %s43, 16384, %s45, [#allocation7], 512, 512, 32
    $region25: #{tpu_custom_call.1} parent=1 // pred_fallthru
      _
    // Predicated region
    $region26: #{tpu_custom_call.1} parent=1 // pred_check
      _
    $region27: #{tpu_custom_call.1} parent=1 // pred_check_branch
      %52 = sbr.rel (0) target = $region29
    $region28: #{tpu_custom_call.1} parent=1 // pred_region
      _
    $region29: #{tpu_custom_call.1} parent=1 // pred_fallthru
      _
    // Predicated region
    $region30: #{tpu_custom_call.1} parent=1 // pred_check
      _
    $region31: #{tpu_custom_call.1} parent=1 // pred_check_branch
      %54 = sbr.rel (0) target = $region33
    $region32: #{tpu_custom_call.1} parent=1 // pred_region
      %56 = vsyncadd [#allocation7], 0
      %s57 = sshll.u32 %s7, 4
      %s58 = int_to_ptr.hbm [resolvable:$true] %s57
      %s59 = sshll.u32 [#allocation8], 4
      %s60 = int_to_ptr.vmem [resolvable:$true] %s59
      %65 = dma.hbm_to_vmem [thread:$0]  %s58, 2048, %s60, [#allocation7], 128, 128, 8
    $region33: #{tpu_custom_call.1} parent=1 // pred_fallthru
      _
    // Predicated region
    $region34: #{tpu_custom_call.1} parent=1 // pred_check
      _
    $region35: #{tpu_custom_call.1} parent=1 // pred_check_branch
      %67 = sbr.rel (0) target = $region37
    $region36: #{tpu_custom_call.1} parent=1 // pred_region
      _
    $region37: #{tpu_custom_call.1} parent=1 // pred_fallthru
      _
    // Predicated region
    $region38: #{tpu_custom_call.1} parent=1 // pred_check
      _
    $region39: #{tpu_custom_call.1} parent=1 // pred_check_branch
      %69 = sbr.rel (0) target = $region41
    $region40: #{tpu_custom_call.1} parent=1 // pred_region
      %71 = dma.done [#allocation4], 8192
    $region41: #{tpu_custom_call.1} parent=1 // pred_fallthru
      _
    // Predicated region
    $region42: #{tpu_custom_call.1} parent=1 // pred_check
      _
    $region43: #{tpu_custom_call.1} parent=1 // pred_check_branch
      %73 = sbr.rel (0) target = $region45
    $region44: #{tpu_custom_call.1} parent=1 // pred_region
      %75 = dma.done [#allocation7], 16384
    $region45: #{tpu_custom_call.1} parent=1 // pred_fallthru
      _
    // Predicated region
    $region46: #{tpu_custom_call.1} parent=1 // pred_check
      _
    $region47: #{tpu_custom_call.1} parent=1 // pred_check_branch
      %77 = sbr.rel (0) target = $region49
    $region48: #{tpu_custom_call.1} parent=1 // pred_region
      %79 = dma.done [#allocation7], 2048
    $region49: #{tpu_custom_call.1} parent=1 // pred_fallthru
      _
    %v80 = vld [vmem:[%s0] sm:$0xff]
    %v81 = vld [vmem:[%s1] sm:$0xff]
    %v82 = vld [vmem:[%s1 + $0x8] sm:$0xff]
    %v83 = vld [vmem:[%s1 + $0x10] sm:$0xff]
    %v84 = vld [vmem:[%s1 + $0x18] sm:$0xff]
    %v85 = vld [vmem:[%s1 + $0x20] sm:$0xff]
    %v86 = vld [vmem:[%s1 + $0x28] sm:$0xff]
    %v87 = vld [vmem:[%s1 + $0x30] sm:$0xff]
    %v88 = vld [vmem:[%s1 + $0x38] sm:$0xff]
    %v89 = vld [vmem:[%s2] sm:$0xff]
    %v90 = vld [vmem:[%s2 + $0x8] sm:$0xff]
    %v91 = vld [vmem:[%s2 + $0x10] sm:$0xff]
    %v92 = vld [vmem:[%s2 + $0x18] sm:$0xff]
    %v93 = vld [vmem:[%s2 + $0x20] sm:$0x3]
    %v94 = vld [vmem:[%s2 + $0x28] sm:$0x3]
    %v95 = vld [vmem:[%s2 + $0x30] sm:$0x3]
    %v96 = vld [vmem:[%s2 + $0x38] sm:$0x3]
    %v97 = vld [vmem:[%s4] sm:$0xf]
    %v99 = vperm.slane %v97, 0
    %v100 = vperm.slane %v97, 1
    %v101 = vperm.slane %v97, 2
    %v102 = vperm.slane %v97, 3
    %vm107 = vcmask 80896
    %v109 = vsel %vm107, %v81, 0
    %v112 = vsel %vm107, %v82, 0
    %v115 = vsel %vm107, %v83, 0
    %v118 = vsel %vm107, %v84, 0
    %v121 = vsel %vm107, %v85, 0
    %v124 = vsel %vm107, %v86, 0
    %v127 = vsel %vm107, %v87, 0
    %v130 = vsel %vm107, %v88, 0
    %vm132 = vcmask 1041408
    %v134 = vsel %vm132, %v93, 0
    %v137 = vsel %vm132, %v94, 0
    %v140 = vsel %vm132, %v95, 0
    %v143 = vsel %vm132, %v96, 0
    %145 = vmatpush.msra.mxu0 0.0
    %146 = vmatpush.msra.mxu0 0.0
    %147 = vmatpush.msra.mxu0 0.0
    %148 = vmatpush.msra.mxu0 0.0
    %149 = vmatpush.msra.mxu0 0.0
    %150 = vmatpush.msra.mxu0 0.0
    %151 = vmatpush.msra.mxu0 0.0
    %152 = vmatpush.msra.mxu0 0.0
    %153 = vmatpush.msra.mxu0 0.0
    %154 = vmatpush.msra.mxu0 0.0
    %155 = vmatpush.msra.mxu0 0.0
    %156 = vmatpush.msra.mxu0 0.0
    %157 = vmatpush.msra.mxu0 0.0
    %158 = vmatpush.msra.mxu0 0.0
    %159 = vmatpush.msra.mxu0 %v134
    %160 = vmatpush.msra.mxu0 %v89
    %161 = vmatmul.f32.gmra.mxu0 %v109
    %v162 = vpop.f32.mrf.mxu0
    %v163 = vadd.f32 %v99, %v162
    %164 = vmatmul.f32.gmra.mxu0 %v112
    %v165 = vpop.f32.mrf.mxu0
    %v166 = vadd.f32 %v99, %v165
    %167 = vmatmul.f32.gmra.mxu0 %v115
    %v168 = vpop.f32.mrf.mxu0
    %v169 = vadd.f32 %v99, %v168
    %170 = vmatmul.f32.gmra.mxu0 %v118
    %v171 = vpop.f32.mrf.mxu0
    %v172 = vadd.f32 %v99, %v171
    %173 = vmatmul.f32.gmra.mxu0 %v121
    %v174 = vpop.f32.mrf.mxu0
    %v175 = vadd.f32 %v99, %v174
    %176 = vmatmul.f32.gmra.mxu0 %v124
    %v177 = vpop.f32.mrf.mxu0
    %v178 = vadd.f32 %v99, %v177
    %179 = vmatmul.f32.gmra.mxu0 %v127
    %v180 = vpop.f32.mrf.mxu0
    %v181 = vadd.f32 %v99, %v180
    %182 = vmatmul.f32.gmra.mxu0 %v130
    %v183 = vpop.f32.mrf.mxu0
    %v184 = vadd.f32 %v99, %v183
    %185 = vdwg.mxu0
    %186 = vmatpush.msra.mxu0 0.0
    %187 = vmatpush.msra.mxu0 0.0
    %188 = vmatpush.msra.mxu0 0.0
    %189 = vmatpush.msra.mxu0 0.0
    %190 = vmatpush.msra.mxu0 0.0
    %191 = vmatpush.msra.mxu0 0.0
    %192 = vmatpush.msra.mxu0 0.0
    %193 = vmatpush.msra.mxu0 0.0
    %194 = vmatpush.msra.mxu0 0.0
    %195 = vmatpush.msra.mxu0 0.0
    %196 = vmatpush.msra.mxu0 0.0
    %197 = vmatpush.msra.mxu0 0.0
    %198 = vmatpush.msra.mxu0 0.0
    %199 = vmatpush.msra.mxu0 0.0
    %200 = vmatpush.msra.mxu0 %v137
    %201 = vmatpush.msra.mxu0 %v90
    %202 = vmatmul.f32.gmra.mxu0 %v109
    %v203 = vpop.f32.mrf.mxu0
    %v204 = vadd.f32 %v100, %v203
    %205 = vmatmul.f32.gmra.mxu0 %v112
    %v206 = vpop.f32.mrf.mxu0
    %v207 = vadd.f32 %v100, %v206
    %208 = vmatmul.f32.gmra.mxu0 %v115
    %v209 = vpop.f32.mrf.mxu0
    %v210 = vadd.f32 %v100, %v209
    %211 = vmatmul.f32.gmra.mxu0 %v118
    %v212 = vpop.f32.mrf.mxu0
    %v213 = vadd.f32 %v100, %v212
    %214 = vmatmul.f32.gmra.mxu0 %v121
    %v215 = vpop.f32.mrf.mxu0
    %v216 = vadd.f32 %v100, %v215
    %217 = vmatmul.f32.gmra.mxu0 %v124
    %v218 = vpop.f32.mrf.mxu0
    %v219 = vadd.f32 %v100, %v218
    %220 = vmatmul.f32.gmra.mxu0 %v127
    %v221 = vpop.f32.mrf.mxu0
    %v222 = vadd.f32 %v100, %v221
    %223 = vmatmul.f32.gmra.mxu0 %v130
    %v224 = vpop.f32.mrf.mxu0
    %v225 = vadd.f32 %v100, %v224
    %226 = vdwg.mxu0
    %227 = vmatpush.msra.mxu0 0.0
    %228 = vmatpush.msra.mxu0 0.0
    %229 = vmatpush.msra.mxu0 0.0
    %230 = vmatpush.msra.mxu0 0.0
    %231 = vmatpush.msra.mxu0 0.0
    %232 = vmatpush.msra.mxu0 0.0
    %233 = vmatpush.msra.mxu0 0.0
    %234 = vmatpush.msra.mxu0 0.0
    %235 = vmatpush.msra.mxu0 0.0
    %236 = vmatpush.msra.mxu0 0.0
    %237 = vmatpush.msra.mxu0 0.0
    %238 = vmatpush.msra.mxu0 0.0
    %239 = vmatpush.msra.mxu0 0.0
    %240 = vmatpush.msra.mxu0 0.0
    %241 = vmatpush.msra.mxu0 %v140
    %242 = vmatpush.msra.mxu0 %v91
    %243 = vmatmul.f32.gmra.mxu0 %v109
    %v244 = vpop.f32.mrf.mxu0
    %v245 = vadd.f32 %v101, %v244
    %246 = vmatmul.f32.gmra.mxu0 %v112
    %v247 = vpop.f32.mrf.mxu0
    %v248 = vadd.f32 %v101, %v247
    %249 = vmatmul.f32.gmra.mxu0 %v115
    %v250 = vpop.f32.mrf.mxu0
    %v251 = vadd.f32 %v101, %v250
    %252 = vmatmul.f32.gmra.mxu0 %v118
    %v253 = vpop.f32.mrf.mxu0
    %v254 = vadd.f32 %v101, %v253
    %255 = vmatmul.f32.gmra.mxu0 %v121
    %v256 = vpop.f32.mrf.mxu0
    %v257 = vadd.f32 %v101, %v256
    %258 = vmatmul.f32.gmra.mxu0 %v124
    %v259 = vpop.f32.mrf.mxu0
    %v260 = vadd.f32 %v101, %v259
    %261 = vmatmul.f32.gmra.mxu0 %v127
    %v262 = vpop.f32.mrf.mxu0
    %v263 = vadd.f32 %v101, %v262
    %264 = vmatmul.f32.gmra.mxu0 %v130
    %v265 = vpop.f32.mrf.mxu0
    %v266 = vadd.f32 %v101, %v265
    %267 = vdwg.mxu0
    %268 = vmatpush.msra.mxu0 0.0
    %269 = vmatpush.msra.mxu0 0.0
    %270 = vmatpush.msra.mxu0 0.0
    %271 = vmatpush.msra.mxu0 0.0
    %272 = vmatpush.msra.mxu0 0.0
    %273 = vmatpush.msra.mxu0 0.0
    %274 = vmatpush.msra.mxu0 0.0
    %275 = vmatpush.msra.mxu0 0.0
    %276 = vmatpush.msra.mxu0 0.0
    %277 = vmatpush.msra.mxu0 0.0
    %278 = vmatpush.msra.mxu0 0.0
    %279 = vmatpush.msra.mxu0 0.0
    %280 = vmatpush.msra.mxu0 0.0
    %281 = vmatpush.msra.mxu0 0.0
    %282 = vmatpush.msra.mxu0 %v143
    %283 = vmatpush.msra.mxu0 %v92
    %284 = vmatmul.f32.gmra.mxu0 %v109
    %v285 = vpop.f32.mrf.mxu0
    %v286 = vadd.f32 %v102, %v285
    %287 = vmatmul.f32.gmra.mxu0 %v112
    %v288 = vpop.f32.mrf.mxu0
    %v289 = vadd.f32 %v102, %v288
    %290 = vmatmul.f32.gmra.mxu0 %v115
    %v291 = vpop.f32.mrf.mxu0
    %v292 = vadd.f32 %v102, %v291
    %293 = vmatmul.f32.gmra.mxu0 %v118
    %v294 = vpop.f32.mrf.mxu0
    %v295 = vadd.f32 %v102, %v294
    %296 = vmatmul.f32.gmra.mxu0 %v121
    %v297 = vpop.f32.mrf.mxu0
    %v298 = vadd.f32 %v102, %v297
    %299 = vmatmul.f32.gmra.mxu0 %v124
    %v300 = vpop.f32.mrf.mxu0
    %v301 = vadd.f32 %v102, %v300
    %302 = vmatmul.f32.gmra.mxu0 %v127
    %v303 = vpop.f32.mrf.mxu0
    %v304 = vadd.f32 %v102, %v303
    %305 = vmatmul.f32.gmra.mxu0 %v130
    %v306 = vpop.f32.mrf.mxu0
    %v307 = vadd.f32 %v102, %v306
    %308 = vdwg.mxu0
    %309 = vst [vmem:[#allocation2] sm:$0xff] %v163
    %310 = vst [vmem:[#allocation2 + $0x8] sm:$0xff] %v204
    %311 = vst [vmem:[#allocation2 + $0x10] sm:$0xff] %v245
    %312 = vst [vmem:[#allocation2 + $0x18] sm:$0xff] %v286
    %313 = vst [vmem:[#allocation2 + $0x20] sm:$0xff] %v166
    %314 = vst [vmem:[#allocation2 + $0x28] sm:$0xff] %v207
    %315 = vst [vmem:[#allocation2 + $0x30] sm:$0xff] %v248
    %316 = vst [vmem:[#allocation2 + $0x38] sm:$0xff] %v289
    %317 = vst [vmem:[#allocation2 + $0x40] sm:$0xff] %v169
    %318 = vst [vmem:[#allocation2 + $0x48] sm:$0xff] %v210
    %319 = vst [vmem:[#allocation2 + $0x50] sm:$0xff] %v251
    %320 = vst [vmem:[#allocation2 + $0x58] sm:$0xff] %v292
    %321 = vst [vmem:[#allocation2 + $0x60] sm:$0xff] %v172
    %322 = vst [vmem:[#allocation2 + $0x68] sm:$0xff] %v213
    %323 = vst [vmem:[#allocation2 + $0x70] sm:$0xff] %v254
    %324 = vst [vmem:[#allocation2 + $0x78] sm:$0xff] %v295
    %325 = vst [vmem:[#allocation2 + $0x80] sm:$0xff] %v175
    %326 = vst [vmem:[#allocation2 + $0x88] sm:$0xff] %v216
    %327 = vst [vmem:[#allocation2 + $0x90] sm:$0xff] %v257
    %328 = vst [vmem:[#allocation2 + $0x98] sm:$0xff] %v298
    %329 = vst [vmem:[#allocation2 + $0xa0] sm:$0xff] %v178
    %330 = vst [vmem:[#allocation2 + $0xa8] sm:$0xff] %v219
    %331 = vst [vmem:[#allocation2 + $0xb0] sm:$0xff] %v260
    %332 = vst [vmem:[#allocation2 + $0xb8] sm:$0xff] %v301
    %333 = vst [vmem:[#allocation2 + $0xc0] sm:$0xff] %v181
    %334 = vst [vmem:[#allocation2 + $0xc8] sm:$0xff] %v222
    %335 = vst [vmem:[#allocation2 + $0xd0] sm:$0xff] %v263
    %336 = vst [vmem:[#allocation2 + $0xd8] sm:$0xff] %v304
    %337 = vst [vmem:[#allocation2 + $0xe0] sm:$0xff] %v184
    %338 = vst [vmem:[#allocation2 + $0xe8] sm:$0xff] %v225
    %339 = vst [vmem:[#allocation2 + $0xf0] sm:$0xff] %v266
    %340 = vst [vmem:[#allocation2 + $0xf8] sm:$0xff] %v307
    %vm341 = vcmp.gt.s32.totalorder %v80, 0
    %v342 = vsel %vm341, 1, 0
    %343 = vset.pattern.permute.xlu0 0
    %344 = vperm.xlu0 %343, %v342
    %v345 = vpop.permute.xlu0 %344
    %vm346 = vcmp.eq.s32.totalorder %v345, 1
    %s347 = smul.u32 0, 4
    %s348 = smul.addr %s347, 8
    %s349 = scalar_lea.vmem [#allocation2], %s348
    %v350 = vld [vmem:[%s349] sm:$0xff]
    %v351 = vld [vmem:[%s349 + $0x8] sm:$0xff]
    %v352 = vld [vmem:[%s349 + $0x10] sm:$0xff]
    %v353 = vld [vmem:[%s349 + $0x18] sm:$0xff]
    %v354 = vld [vmem:[#allocation3] sm:$0xff]
    %v355 = vld [vmem:[#allocation3 + $0x8] sm:$0xff]
    %v356 = vld [vmem:[#allocation3 + $0x10] sm:$0xff]
    %v357 = vld [vmem:[#allocation3 + $0x18] sm:$0xff]
    %v358 = vld [vmem:[#allocation3 + $0x20] sm:$0xff]
    %v359 = vld [vmem:[#allocation3 + $0x28] sm:$0xff]
    %v360 = vld [vmem:[#allocation3 + $0x30] sm:$0xff]
    %v361 = vld [vmem:[#allocation3 + $0x38] sm:$0xff]
    %v362 = vld [vmem:[#allocation3 + $0x40] sm:$0xff]
    %v363 = vld [vmem:[#allocation3 + $0x48] sm:$0xff]
    %v364 = vld [vmem:[#allocation3 + $0x50] sm:$0xff]
    %v365 = vld [vmem:[#allocation3 + $0x58] sm:$0xff]
    %v366 = vld [vmem:[#allocation3 + $0x60] sm:$0xff]
    %v367 = vld [vmem:[#allocation3 + $0x68] sm:$0xff]
    %v368 = vld [vmem:[#allocation3 + $0x70] sm:$0xff]
    %v369 = vld [vmem:[#allocation3 + $0x78] sm:$0xff]
    %v370 = vld [vmem:[#allocation3 + $0x80] sm:$0xff]
    %v371 = vld [vmem:[#allocation3 + $0x88] sm:$0xff]
    %v372 = vld [vmem:[#allocation3 + $0x90] sm:$0xff]
    %v373 = vld [vmem:[#allocation3 + $0x98] sm:$0xff]
    %v374 = vld [vmem:[#allocation3 + $0xa0] sm:$0xff]
    %v375 = vld [vmem:[#allocation3 + $0xa8] sm:$0xff]
    %v376 = vld [vmem:[#allocation3 + $0xb0] sm:$0xff]
    %v377 = vld [vmem:[#allocation3 + $0xb8] sm:$0xff]
    %v378 = vld [vmem:[#allocation3 + $0xc0] sm:$0xff]
    %v379 = vld [vmem:[#allocation3 + $0xc8] sm:$0xff]
    %v380 = vld [vmem:[#allocation3 + $0xd0] sm:$0xff]
    %v381 = vld [vmem:[#allocation3 + $0xd8] sm:$0xff]
    %v382 = vld [vmem:[#allocation3 + $0xe0] sm:$0xff]
    %v383 = vld [vmem:[#allocation3 + $0xe8] sm:$0xff]
    %v384 = vld [vmem:[#allocation3 + $0xf0] sm:$0xff]
    %v385 = vld [vmem:[#allocation3 + $0xf8] sm:$0xff]
    %v386 = vld [vmem:[#allocation3 + $0x100] sm:$0xff]
    %v387 = vld [vmem:[#allocation3 + $0x108] sm:$0xff]
    %v388 = vld [vmem:[#allocation3 + $0x110] sm:$0xff]
    %v389 = vld [vmem:[#allocation3 + $0x118] sm:$0xff]
    %v390 = vld [vmem:[#allocation3 + $0x120] sm:$0xff]
    %v391 = vld [vmem:[#allocation3 + $0x128] sm:$0xff]
    %v392 = vld [vmem:[#allocation3 + $0x130] sm:$0xff]
    %v393 = vld [vmem:[#allocation3 + $0x138] sm:$0xff]
    %v394 = vld [vmem:[#allocation3 + $0x140] sm:$0xff]
    %v395 = vld [vmem:[#allocation3 + $0x148] sm:$0xff]
    %v396 = vld [vmem:[#allocation3 + $0x150] sm:$0xff]
    %v397 = vld [vmem:[#allocation3 + $0x158] sm:$0xff]
    %v398 = vld [vmem:[#allocation3 + $0x160] sm:$0xff]
    %v399 = vld [vmem:[#allocation3 + $0x168] sm:$0xff]
    %v400 = vld [vmem:[#allocation3 + $0x170] sm:$0xff]
    %v401 = vld [vmem:[#allocation3 + $0x178] sm:$0xff]
    %v402 = vld [vmem:[#allocation3 + $0x180] sm:$0xff]
    %v403 = vld [vmem:[#allocation3 + $0x188] sm:$0xff]
    %v404 = vld [vmem:[#allocation3 + $0x190] sm:$0xff]
    %v405 = vld [vmem:[#allocation3 + $0x198] sm:$0xff]
    %v406 = vld [vmem:[#allocation3 + $0x1a0] sm:$0xff]
    %v407 = vld [vmem:[#allocation3 + $0x1a8] sm:$0xff]
    %v408 = vld [vmem:[#allocation3 + $0x1b0] sm:$0xff]
    %v409 = vld [vmem:[#allocation3 + $0x1b8] sm:$0xff]
    %v410 = vld [vmem:[#allocation3 + $0x1c0] sm:$0xff]
    %v411 = vld [vmem:[#allocation3 + $0x1c8] sm:$0xff]
    %v412 = vld [vmem:[#allocation3 + $0x1d0] sm:$0xff]
    %v413 = vld [vmem:[#allocation3 + $0x1d8] sm:$0xff]
    %v414 = vld [vmem:[#allocation3 + $0x1e0] sm:$0xff]
    %v415 = vld [vmem:[#allocation3 + $0x1e8] sm:$0xff]
    %v416 = vld [vmem:[#allocation3 + $0x1f0] sm:$0xff]
    %v417 = vld [vmem:[#allocation3 + $0x1f8] sm:$0xff]
    %418 = vmatpush.msra.mxu0 %v414
    %419 = vmatpush.msra.mxu0 %v410
    %420 = vmatpush.msra.mxu0 %v406
    %421 = vmatpush.msra.mxu0 %v402
    %422 = vmatpush.msra.mxu0 %v398
    %423 = vmatpush.msra.mxu0 %v394
    %424 = vmatpush.msra.mxu0 %v390
    %425 = vmatpush.msra.mxu0 %v386
    %426 = vmatpush.msra.mxu0 %v382
    %427 = vmatpush.msra.mxu0 %v378
    %428 = vmatpush.msra.mxu0 %v374
    %429 = vmatpush.msra.mxu0 %v370
    %430 = vmatpush.msra.mxu0 %v366
    %431 = vmatpush.msra.mxu0 %v362
    %432 = vmatpush.msra.mxu0 %v358
    %433 = vmatpush.msra.mxu0 %v354
    %434 = vmatmul.f32.gmra.mxu0 0.0
    %v435 = vpop.f32.mrf.mxu0
    %v436 = vadd.f32 0.0, %v435
    %437 = vdwg.mxu0
    %438 = vmatpush.msra.mxu0 %v415
    %439 = vmatpush.msra.mxu0 %v411
    %440 = vmatpush.msra.mxu0 %v407
    %441 = vmatpush.msra.mxu0 %v403
    %442 = vmatpush.msra.mxu0 %v399
    %443 = vmatpush.msra.mxu0 %v395
    %444 = vmatpush.msra.mxu0 %v391
    %445 = vmatpush.msra.mxu0 %v387
    %446 = vmatpush.msra.mxu0 %v383
    %447 = vmatpush.msra.mxu0 %v379
    %448 = vmatpush.msra.mxu0 %v375
    %449 = vmatpush.msra.mxu0 %v371
    %450 = vmatpush.msra.mxu0 %v367
    %451 = vmatpush.msra.mxu0 %v363
    %452 = vmatpush.msra.mxu0 %v359
    %453 = vmatpush.msra.mxu0 %v355
    %454 = vmatmul.f32.gmra.mxu0 0.0
    %v455 = vpop.f32.mrf.mxu0
    %v456 = vadd.f32 0.0, %v455
    %457 = vdwg.mxu0
    %458 = vmatpush.msra.mxu0 %v416
    %459 = vmatpush.msra.mxu0 %v412
    %460 = vmatpush.msra.mxu0 %v408
    %461 = vmatpush.msra.mxu0 %v404
    %462 = vmatpush.msra.mxu0 %v400
    %463 = vmatpush.msra.mxu0 %v396
    %464 = vmatpush.msra.mxu0 %v392
    %465 = vmatpush.msra.mxu0 %v388
    %466 = vmatpush.msra.mxu0 %v384
    %467 = vmatpush.msra.mxu0 %v380
    %468 = vmatpush.msra.mxu0 %v376
    %469 = vmatpush.msra.mxu0 %v372
    %470 = vmatpush.msra.mxu0 %v368
    %471 = vmatpush.msra.mxu0 %v364
    %472 = vmatpush.msra.mxu0 %v360
    %473 = vmatpush.msra.mxu0 %v356
    %474 = vmatmul.f32.gmra.mxu0 0.0
    %v475 = vpop.f32.mrf.mxu0
    %v476 = vadd.f32 0.0, %v475
    %477 = vdwg.mxu0
    %478 = vmatpush.msra.mxu0 %v417
    %479 = vmatpush.msra.mxu0 %v413
    %480 = vmatpush.msra.mxu0 %v409
    %481 = vmatpush.msra.mxu0 %v405
    %482 = vmatpush.msra.mxu0 %v401
    %483 = vmatpush.msra.mxu0 %v397
    %484 = vmatpush.msra.mxu0 %v393
    %485 = vmatpush.msra.mxu0 %v389
    %486 = vmatpush.msra.mxu0 %v385
    %487 = vmatpush.msra.mxu0 %v381
    %488 = vmatpush.msra.mxu0 %v377
    %489 = vmatpush.msra.mxu0 %v373
    %490 = vmatpush.msra.mxu0 %v369
    %491 = vmatpush.msra.mxu0 %v365
    %492 = vmatpush.msra.mxu0 %v361
    %493 = vmatpush.msra.mxu0 %v357
    %494 = vmatmul.f32.gmra.mxu0 0.0
    %v495 = vpop.f32.mrf.mxu0
    %v496 = vadd.f32 0.0, %v495
    %497 = vdwg.mxu0
    %v498 = vadd.f32 %v350, %v436
    %v499 = vadd.f32 %v351, %v456
    %v500 = vadd.f32 %v352, %v476
    %v501 = vadd.f32 %v353, %v496
    %v502 = vxor.u32 %v498, 2147483648
    %v503 = vmul.f32 %v502, 1.442695
    %v504 = vpow.pop %v503
    %v505 = vadd.f32 %v504, 1.0
    %v506 = vrcp.pop %v505
    %v507 = vmul.f32 %v505, %v506
    %v508 = vsub.f32 1.0, %v507
    %v509 = vmul.f32 %v506, %v508
    %v510 = vadd.f32 %v506, %v509
    %vm511 = vweird.f32 %v505
    %vm512 = vweird.f32 %v506
    %vm513 = vmor %vm511, %vm512
    %v514 = vsel %vm513, %v506, %v510
    %v515 = vand.u32 2147483647, %v505
    %vm516 = vcmp.eq.f32.partialorder %v515, 8.507059e+37
    %v517 = vand.u32 %v505, 2147483648
    %v518 = vor.u32 1.1754944e-38, %v517
    %v519 = vsel %vm516, %v518, %v514
    %v520 = vmul.f32 1.0, %v519
    %v521 = vxor.u32 %v499, 2147483648
    %v522 = vmul.f32 %v521, 1.442695
    %v523 = vpow.pop %v522
    %v524 = vadd.f32 %v523, 1.0
    %v525 = vrcp.pop %v524
    %v526 = vmul.f32 %v524, %v525
    %v527 = vsub.f32 1.0, %v526
    %v528 = vmul.f32 %v525, %v527
    %v529 = vadd.f32 %v525, %v528
    %vm530 = vweird.f32 %v524
    %vm531 = vweird.f32 %v525
    %vm532 = vmor %vm530, %vm531
    %v533 = vsel %vm532, %v525, %v529
    %v534 = vand.u32 2147483647, %v524
    %vm535 = vcmp.eq.f32.partialorder %v534, 8.507059e+37
    %v536 = vand.u32 %v524, 2147483648
    %v537 = vor.u32 1.1754944e-38, %v536
    %v538 = vsel %vm535, %v537, %v533
    %v539 = vmul.f32 1.0, %v538
    %v540 = vtanh.pop %v500
    %v541 = vxor.u32 %v501, 2147483648
    %v542 = vmul.f32 %v541, 1.442695
    %v543 = vpow.pop %v542
    %v544 = vadd.f32 %v543, 1.0
    %v545 = vrcp.pop %v544
    %v546 = vmul.f32 %v544, %v545
    %v547 = vsub.f32 1.0, %v546
    %v548 = vmul.f32 %v545, %v547
    %v549 = vadd.f32 %v545, %v548
    %vm550 = vweird.f32 %v544
    %vm551 = vweird.f32 %v545
    %vm552 = vmor %vm550, %vm551
    %v553 = vsel %vm552, %v545, %v549
    %v554 = vand.u32 2147483647, %v544
    %vm555 = vcmp.eq.f32.partialorder %v554, 8.507059e+37
    %v556 = vand.u32 %v544, 2147483648
    %v557 = vor.u32 1.1754944e-38, %v556
    %v558 = vsel %vm555, %v557, %v553
    %v559 = vmul.f32 1.0, %v558
    %v560 = vmul.f32 %v539, 0.0
    %v561 = vmul.f32 %v520, %v540
    %v562 = vadd.f32 %v560, %v561
    %v563 = vtanh.pop %v562
    %v564 = vmul.f32 %v559, %v563
    %v565 = vld [vmem:[#allocation6] sm:$0xff]
    %v566 = vld [vmem:[#allocation6 + $0x8] sm:$0xff]
    %v567 = vld [vmem:[#allocation6 + $0x10] sm:$0xff]
    %v568 = vld [vmem:[#allocation6 + $0x18] sm:$0xff]
    %v569 = vld [vmem:[#allocation6 + $0x20] sm:$0xff]
    %v570 = vld [vmem:[#allocation6 + $0x28] sm:$0xff]
    %v571 = vld [vmem:[#allocation6 + $0x30] sm:$0xff]
    %v572 = vld [vmem:[#allocation6 + $0x38] sm:$0xff]
    %v573 = vld [vmem:[#allocation6 + $0x40] sm:$0xff]
    %v574 = vld [vmem:[#allocation6 + $0x48] sm:$0xff]
    %v575 = vld [vmem:[#allocation6 + $0x50] sm:$0xff]
    %v576 = vld [vmem:[#allocation6 + $0x58] sm:$0xff]
    %v577 = vld [vmem:[#allocation6 + $0x60] sm:$0xff]
    %v578 = vld [vmem:[#allocation6 + $0x68] sm:$0xff]
    %v579 = vld [vmem:[#allocation6 + $0x70] sm:$0xff]
    %v580 = vld [vmem:[#allocation6 + $0x78] sm:$0xff]
    %v581 = vld [vmem:[#allocation6 + $0x80] sm:$0xff]
    %v582 = vld [vmem:[#allocation6 + $0x88] sm:$0xff]
    %v583 = vld [vmem:[#allocation6 + $0x90] sm:$0xff]
    %v584 = vld [vmem:[#allocation6 + $0x98] sm:$0xff]
    %v585 = vld [vmem:[#allocation6 + $0xa0] sm:$0xff]
    %v586 = vld [vmem:[#allocation6 + $0xa8] sm:$0xff]
    %v587 = vld [vmem:[#allocation6 + $0xb0] sm:$0xff]
    %v588 = vld [vmem:[#allocation6 + $0xb8] sm:$0xff]
    %v589 = vld [vmem:[#allocation6 + $0xc0] sm:$0xff]
    %v590 = vld [vmem:[#allocation6 + $0xc8] sm:$0xff]
    %v591 = vld [vmem:[#allocation6 + $0xd0] sm:$0xff]
    %v592 = vld [vmem:[#allocation6 + $0xd8] sm:$0xff]
    %v593 = vld [vmem:[#allocation6 + $0xe0] sm:$0xff]
    %v594 = vld [vmem:[#allocation6 + $0xe8] sm:$0xff]
    %v595 = vld [vmem:[#allocation6 + $0xf0] sm:$0xff]
    %v596 = vld [vmem:[#allocation6 + $0xf8] sm:$0xff]
    %v597 = vld [vmem:[#allocation6 + $0x100] sm:$0xff]
    %v598 = vld [vmem:[#allocation6 + $0x108] sm:$0xff]
    %v599 = vld [vmem:[#allocation6 + $0x110] sm:$0xff]
    %v600 = vld [vmem:[#allocation6 + $0x118] sm:$0xff]
    %v601 = vld [vmem:[#allocation6 + $0x120] sm:$0xff]
    %v602 = vld [vmem:[#allocation6 + $0x128] sm:$0xff]
    %v603 = vld [vmem:[#allocation6 + $0x130] sm:$0xff]
    %v604 = vld [vmem:[#allocation6 + $0x138] sm:$0xff]
    %v605 = vld [vmem:[#allocation6 + $0x140] sm:$0xff]
    %v606 = vld [vmem:[#allocation6 + $0x148] sm:$0xff]
    %v607 = vld [vmem:[#allocation6 + $0x150] sm:$0xff]
    %v608 = vld [vmem:[#allocation6 + $0x158] sm:$0xff]
    %v609 = vld [vmem:[#allocation6 + $0x160] sm:$0xff]
    %v610 = vld [vmem:[#allocation6 + $0x168] sm:$0xff]
    %v611 = vld [vmem:[#allocation6 + $0x170] sm:$0xff]
    %v612 = vld [vmem:[#allocation6 + $0x178] sm:$0xff]
    %v613 = vld [vmem:[#allocation6 + $0x180] sm:$0xff]
    %v614 = vld [vmem:[#allocation6 + $0x188] sm:$0xff]
    %v615 = vld [vmem:[#allocation6 + $0x190] sm:$0xff]
    %v616 = vld [vmem:[#allocation6 + $0x198] sm:$0xff]
    %v617 = vld [vmem:[#allocation6 + $0x1a0] sm:$0xff]
    %v618 = vld [vmem:[#allocation6 + $0x1a8] sm:$0xff]
    %v619 = vld [vmem:[#allocation6 + $0x1b0] sm:$0xff]
    %v620 = vld [vmem:[#allocation6 + $0x1b8] sm:$0xff]
    %v621 = vld [vmem:[#allocation6 + $0x1c0] sm:$0xff]
    %v622 = vld [vmem:[#allocation6 + $0x1c8] sm:$0xff]
    %v623 = vld [vmem:[#allocation6 + $0x1d0] sm:$0xff]
    %v624 = vld [vmem:[#allocation6 + $0x1d8] sm:$0xff]
    %v625 = vld [vmem:[#allocation6 + $0x1e0] sm:$0xff]
    %v626 = vld [vmem:[#allocation6 + $0x1e8] sm:$0xff]
    %v627 = vld [vmem:[#allocation6 + $0x1f0] sm:$0xff]
    %v628 = vld [vmem:[#allocation6 + $0x1f8] sm:$0xff]
    %v629 = vld [vmem:[#allocation6 + $0x200] sm:$0xff]
    %v630 = vld [vmem:[#allocation6 + $0x208] sm:$0xff]
    %v631 = vld [vmem:[#allocation6 + $0x210] sm:$0xff]
    %v632 = vld [vmem:[#allocation6 + $0x218] sm:$0xff]
    %v633 = vld [vmem:[#allocation6 + $0x220] sm:$0xff]
    %v634 = vld [vmem:[#allocation6 + $0x228] sm:$0xff]
    %v635 = vld [vmem:[#allocation6 + $0x230] sm:$0xff]
    %v636 = vld [vmem:[#allocation6 + $0x238] sm:$0xff]
    %v637 = vld [vmem:[#allocation6 + $0x240] sm:$0xff]
    %v638 = vld [vmem:[#allocation6 + $0x248] sm:$0xff]
    %v639 = vld [vmem:[#allocation6 + $0x250] sm:$0xff]
    %v640 = vld [vmem:[#allocation6 + $0x258] sm:$0xff]
    %v641 = vld [vmem:[#allocation6 + $0x260] sm:$0xff]
    %v642 = vld [vmem:[#allocation6 + $0x268] sm:$0xff]
    %v643 = vld [vmem:[#allocation6 + $0x270] sm:$0xff]
    %v644 = vld [vmem:[#allocation6 + $0x278] sm:$0xff]
    %v645 = vld [vmem:[#allocation6 + $0x280] sm:$0xff]
    %v646 = vld [vmem:[#allocation6 + $0x288] sm:$0xff]
    %v647 = vld [vmem:[#allocation6 + $0x290] sm:$0xff]
    %v648 = vld [vmem:[#allocation6 + $0x298] sm:$0xff]
    %v649 = vld [vmem:[#allocation6 + $0x2a0] sm:$0xff]
    %v650 = vld [vmem:[#allocation6 + $0x2a8] sm:$0xff]
    %v651 = vld [vmem:[#allocation6 + $0x2b0] sm:$0xff]
    %v652 = vld [vmem:[#allocation6 + $0x2b8] sm:$0xff]
    %v653 = vld [vmem:[#allocation6 + $0x2c0] sm:$0xff]
    %v654 = vld [vmem:[#allocation6 + $0x2c8] sm:$0xff]
    %v655 = vld [vmem:[#allocation6 + $0x2d0] sm:$0xff]
    %v656 = vld [vmem:[#allocation6 + $0x2d8] sm:$0xff]
    %v657 = vld [vmem:[#allocation6 + $0x2e0] sm:$0xff]
    %v658 = vld [vmem:[#allocation6 + $0x2e8] sm:$0xff]
    %v659 = vld [vmem:[#allocation6 + $0x2f0] sm:$0xff]
    %v660 = vld [vmem:[#allocation6 + $0x2f8] sm:$0xff]
    %v661 = vld [vmem:[#allocation6 + $0x300] sm:$0xff]
    %v662 = vld [vmem:[#allocation6 + $0x308] sm:$0xff]
    %v663 = vld [vmem:[#allocation6 + $0x310] sm:$0xff]
    %v664 = vld [vmem:[#allocation6 + $0x318] sm:$0xff]
    %v665 = vld [vmem:[#allocation6 + $0x320] sm:$0xff]
    %v666 = vld [vmem:[#allocation6 + $0x328] sm:$0xff]
    %v667 = vld [vmem:[#allocation6 + $0x330] sm:$0xff]
    %v668 = vld [vmem:[#allocation6 + $0x338] sm:$0xff]
    %v669 = vld [vmem:[#allocation6 + $0x340] sm:$0xff]
    %v670 = vld [vmem:[#allocation6 + $0x348] sm:$0xff]
    %v671 = vld [vmem:[#allocation6 + $0x350] sm:$0xff]
    %v672 = vld [vmem:[#allocation6 + $0x358] sm:$0xff]
    %v673 = vld [vmem:[#allocation6 + $0x360] sm:$0xff]
    %v674 = vld [vmem:[#allocation6 + $0x368] sm:$0xff]
    %v675 = vld [vmem:[#allocation6 + $0x370] sm:$0xff]
    %v676 = vld [vmem:[#allocation6 + $0x378] sm:$0xff]
    %v677 = vld [vmem:[#allocation6 + $0x380] sm:$0xff]
    %v678 = vld [vmem:[#allocation6 + $0x388] sm:$0xff]
    %v679 = vld [vmem:[#allocation6 + $0x390] sm:$0xff]
    %v680 = vld [vmem:[#allocation6 + $0x398] sm:$0xff]
    %v681 = vld [vmem:[#allocation6 + $0x3a0] sm:$0xff]
    %v682 = vld [vmem:[#allocation6 + $0x3a8] sm:$0xff]
    %v683 = vld [vmem:[#allocation6 + $0x3b0] sm:$0xff]
    %v684 = vld [vmem:[#allocation6 + $0x3b8] sm:$0xff]
    %v685 = vld [vmem:[#allocation6 + $0x3c0] sm:$0xff]
    %v686 = vld [vmem:[#allocation6 + $0x3c8] sm:$0xff]
    %v687 = vld [vmem:[#allocation6 + $0x3d0] sm:$0xff]
    %v688 = vld [vmem:[#allocation6 + $0x3d8] sm:$0xff]
    %v689 = vld [vmem:[#allocation6 + $0x3e0] sm:$0xff]
    %v690 = vld [vmem:[#allocation6 + $0x3e8] sm:$0xff]
    %v691 = vld [vmem:[#allocation6 + $0x3f0] sm:$0xff]
    %v692 = vld [vmem:[#allocation6 + $0x3f8] sm:$0xff]
    %v693 = vld [vmem:[%s6] sm:$0xf]
    %v695 = vperm.slane %v693, 0
    %v696 = vperm.slane %v693, 1
    %v697 = vperm.slane %v693, 2
    %v698 = vperm.slane %v693, 3
    %703 = vmatpush.msra.mxu0 %v625
    %704 = vmatpush.msra.mxu0 %v621
    %705 = vmatpush.msra.mxu0 %v617
    %706 = vmatpush.msra.mxu0 %v613
    %707 = vmatpush.msra.mxu0 %v609
    %708 = vmatpush.msra.mxu0 %v605
    %709 = vmatpush.msra.mxu0 %v601
    %710 = vmatpush.msra.mxu0 %v597
    %711 = vmatpush.msra.mxu0 %v593
    %712 = vmatpush.msra.mxu0 %v589
    %713 = vmatpush.msra.mxu0 %v585
    %714 = vmatpush.msra.mxu0 %v581
    %715 = vmatpush.msra.mxu0 %v577
    %716 = vmatpush.msra.mxu0 %v573
    %717 = vmatpush.msra.mxu0 %v569
    %718 = vmatpush.msra.mxu0 %v565
    %719 = vmatmul.f32.gmra.mxu0 %v564
    %v720 = vpop.f32.mrf.mxu0
    %v721 = vadd.f32 %v695, %v720
    %722 = vdwg.mxu0
    %723 = vmatpush.msra.mxu0 %v689
    %724 = vmatpush.msra.mxu0 %v685
    %725 = vmatpush.msra.mxu0 %v681
    %726 = vmatpush.msra.mxu0 %v677
    %727 = vmatpush.msra.mxu0 %v673
    %728 = vmatpush.msra.mxu0 %v669
    %729 = vmatpush.msra.mxu0 %v665
    %730 = vmatpush.msra.mxu0 %v661
    %731 = vmatpush.msra.mxu0 %v657
    %732 = vmatpush.msra.mxu0 %v653
    %733 = vmatpush.msra.mxu0 %v649
    %734 = vmatpush.msra.mxu0 %v645
    %735 = vmatpush.msra.mxu0 %v641
    %736 = vmatpush.msra.mxu0 %v637
    %737 = vmatpush.msra.mxu0 %v633
    %738 = vmatpush.msra.mxu0 %v629
    %739 = vmatmul.f32.gmra.mxu0 0.0
    %v740 = vpop.f32.mrf.mxu0
    %v741 = vadd.f32 %v721, %v740
    %742 = vdwg.mxu0
    %743 = vmatpush.msra.mxu0 %v626
    %744 = vmatpush.msra.mxu0 %v622
    %745 = vmatpush.msra.mxu0 %v618
    %746 = vmatpush.msra.mxu0 %v614
    %747 = vmatpush.msra.mxu0 %v610
    %748 = vmatpush.msra.mxu0 %v606
    %749 = vmatpush.msra.mxu0 %v602
    %750 = vmatpush.msra.mxu0 %v598
    %751 = vmatpush.msra.mxu0 %v594
    %752 = vmatpush.msra.mxu0 %v590
    %753 = vmatpush.msra.mxu0 %v586
    %754 = vmatpush.msra.mxu0 %v582
    %755 = vmatpush.msra.mxu0 %v578
    %756 = vmatpush.msra.mxu0 %v574
    %757 = vmatpush.msra.mxu0 %v570
    %758 = vmatpush.msra.mxu0 %v566
    %759 = vmatmul.f32.gmra.mxu0 %v564
    %v760 = vpop.f32.mrf.mxu0
    %v761 = vadd.f32 %v696, %v760
    %762 = vdwg.mxu0
    %763 = vmatpush.msra.mxu0 %v690
    %764 = vmatpush.msra.mxu0 %v686
    %765 = vmatpush.msra.mxu0 %v682
    %766 = vmatpush.msra.mxu0 %v678
    %767 = vmatpush.msra.mxu0 %v674
    %768 = vmatpush.msra.mxu0 %v670
    %769 = vmatpush.msra.mxu0 %v666
    %770 = vmatpush.msra.mxu0 %v662
    %771 = vmatpush.msra.mxu0 %v658
    %772 = vmatpush.msra.mxu0 %v654
    %773 = vmatpush.msra.mxu0 %v650
    %774 = vmatpush.msra.mxu0 %v646
    %775 = vmatpush.msra.mxu0 %v642
    %776 = vmatpush.msra.mxu0 %v638
    %777 = vmatpush.msra.mxu0 %v634
    %778 = vmatpush.msra.mxu0 %v630
    %779 = vmatmul.f32.gmra.mxu0 0.0
    %v780 = vpop.f32.mrf.mxu0
    %v781 = vadd.f32 %v761, %v780
    %782 = vdwg.mxu0
    %783 = vmatpush.msra.mxu0 %v627
    %784 = vmatpush.msra.mxu0 %v623
    %785 = vmatpush.msra.mxu0 %v619
    %786 = vmatpush.msra.mxu0 %v615
    %787 = vmatpush.msra.mxu0 %v611
    %788 = vmatpush.msra.mxu0 %v607
    %789 = vmatpush.msra.mxu0 %v603
    %790 = vmatpush.msra.mxu0 %v599
    %791 = vmatpush.msra.mxu0 %v595
    %792 = vmatpush.msra.mxu0 %v591
    %793 = vmatpush.msra.mxu0 %v587
    %794 = vmatpush.msra.mxu0 %v583
    %795 = vmatpush.msra.mxu0 %v579
    %796 = vmatpush.msra.mxu0 %v575
    %797 = vmatpush.msra.mxu0 %v571
    %798 = vmatpush.msra.mxu0 %v567
    %799 = vmatmul.f32.gmra.mxu0 %v564
    %v800 = vpop.f32.mrf.mxu0
    %v801 = vadd.f32 %v697, %v800
    %802 = vdwg.mxu0
    %803 = vmatpush.msra.mxu0 %v691
    %804 = vmatpush.msra.mxu0 %v687
    %805 = vmatpush.msra.mxu0 %v683
    %806 = vmatpush.msra.mxu0 %v679
    %807 = vmatpush.msra.mxu0 %v675
    %808 = vmatpush.msra.mxu0 %v671
    %809 = vmatpush.msra.mxu0 %v667
    %810 = vmatpush.msra.mxu0 %v663
    %811 = vmatpush.msra.mxu0 %v659
    %812 = vmatpush.msra.mxu0 %v655
    %813 = vmatpush.msra.mxu0 %v651
    %814 = vmatpush.msra.mxu0 %v647
    %815 = vmatpush.msra.mxu0 %v643
    %816 = vmatpush.msra.mxu0 %v639
    %817 = vmatpush.msra.mxu0 %v635
    %818 = vmatpush.msra.mxu0 %v631
    %819 = vmatmul.f32.gmra.mxu0 0.0
    %v820 = vpop.f32.mrf.mxu0
    %v821 = vadd.f32 %v801, %v820
    %822 = vdwg.mxu0
    %823 = vmatpush.msra.mxu0 %v628
    %824 = vmatpush.msra.mxu0 %v624
    %825 = vmatpush.msra.mxu0 %v620
    %826 = vmatpush.msra.mxu0 %v616
    %827 = vmatpush.msra.mxu0 %v612
    %828 = vmatpush.msra.mxu0 %v608
    %829 = vmatpush.msra.mxu0 %v604
    %830 = vmatpush.msra.mxu0 %v600
    %831 = vmatpush.msra.mxu0 %v596
    %832 = vmatpush.msra.mxu0 %v592
    %833 = vmatpush.msra.mxu0 %v588
    %834 = vmatpush.msra.mxu0 %v584
    %835 = vmatpush.msra.mxu0 %v580
    %836 = vmatpush.msra.mxu0 %v576
    %837 = vmatpush.msra.mxu0 %v572
    %838 = vmatpush.msra.mxu0 %v568
    %839 = vmatmul.f32.gmra.mxu0 %v564
    %v840 = vpop.f32.mrf.mxu0
    %v841 = vadd.f32 %v698, %v840
    %842 = vdwg.mxu0
    %843 = vmatpush.msra.mxu0 %v692
    %844 = vmatpush.msra.mxu0 %v688
    %845 = vmatpush.msra.mxu0 %v684
    %846 = vmatpush.msra.mxu0 %v680
    %847 = vmatpush.msra.mxu0 %v676
    %848 = vmatpush.msra.mxu0 %v672
    %849 = vmatpush.msra.mxu0 %v668
    %850 = vmatpush.msra.mxu0 %v664
    %851 = vmatpush.msra.mxu0 %v660
    %852 = vmatpush.msra.mxu0 %v656
    %853 = vmatpush.msra.mxu0 %v652
    %854 = vmatpush.msra.mxu0 %v648
    %855 = vmatpush.msra.mxu0 %v644
    %856 = vmatpush.msra.mxu0 %v640
    %857 = vmatpush.msra.mxu0 %v636
    %858 = vmatpush.msra.mxu0 %v632
    %859 = vmatmul.f32.gmra.mxu0 0.0
    %v860 = vpop.f32.mrf.mxu0
    %v861 = vadd.f32 %v841, %v860
    %862 = vdwg.mxu0
    %v863 = vxor.u32 %v741, 2147483648
    %v864 = vmul.f32 %v863, 1.442695
    %v865 = vpow.pop %v864
    %v866 = vadd.f32 %v865, 1.0
    %v867 = vrcp.pop %v866
    %v868 = vmul.f32 %v866, %v867
    %v869 = vsub.f32 1.0, %v868
    %v870 = vmul.f32 %v867, %v869
    %v871 = vadd.f32 %v867, %v870
    %vm872 = vweird.f32 %v866
    %vm873 = vweird.f32 %v867
    %vm874 = vmor %vm872, %vm873
    %v875 = vsel %vm874, %v867, %v871
    %v876 = vand.u32 2147483647, %v866
    %vm877 = vcmp.eq.f32.partialorder %v876, 8.507059e+37
    %v878 = vand.u32 %v866, 2147483648
    %v879 = vor.u32 1.1754944e-38, %v878
    %v880 = vsel %vm877, %v879, %v875
    %v881 = vmul.f32 1.0, %v880
    %v882 = vxor.u32 %v781, 2147483648
    %v883 = vmul.f32 %v882, 1.442695
    %v884 = vpow.pop %v883
    %v885 = vadd.f32 %v884, 1.0
    %v886 = vrcp.pop %v885
    %v887 = vmul.f32 %v885, %v886
    %v888 = vsub.f32 1.0, %v887
    %v889 = vmul.f32 %v886, %v888
    %v890 = vadd.f32 %v886, %v889
    %vm891 = vweird.f32 %v885
    %vm892 = vweird.f32 %v886
    %vm893 = vmor %vm891, %vm892
    %v894 = vsel %vm893, %v886, %v890
    %v895 = vand.u32 2147483647, %v885
    %vm896 = vcmp.eq.f32.partialorder %v895, 8.507059e+37
    %v897 = vand.u32 %v885, 2147483648
    %v898 = vor.u32 1.1754944e-38, %v897
    %v899 = vsel %vm896, %v898, %v894
    %v900 = vmul.f32 1.0, %v899
    %v901 = vtanh.pop %v821
    %v902 = vxor.u32 %v861, 2147483648
    %v903 = vmul.f32 %v902, 1.442695
    %v904 = vpow.pop %v903
    %v905 = vadd.f32 %v904, 1.0
    %v906 = vrcp.pop %v905
    %v907 = vmul.f32 %v905, %v906
    %v908 = vsub.f32 1.0, %v907
    %v909 = vmul.f32 %v906, %v908
    %v910 = vadd.f32 %v906, %v909
    %vm911 = vweird.f32 %v905
    %vm912 = vweird.f32 %v906
    %vm913 = vmor %vm911, %vm912
    %v914 = vsel %vm913, %v906, %v910
    %v915 = vand.u32 2147483647, %v905
    %vm916 = vcmp.eq.f32.partialorder %v915, 8.507059e+37
    %v917 = vand.u32 %v905, 2147483648
    %v918 = vor.u32 1.1754944e-38, %v917
    %v919 = vsel %vm916, %v918, %v914
    %v920 = vmul.f32 1.0, %v919
    %v921 = vmul.f32 %v900, 0.0
    %v922 = vmul.f32 %v881, %v901
    %v923 = vadd.f32 %v921, %v922
    %v924 = vtanh.pop %v923
    %v925 = vmul.f32 %v920, %v924
    %v926 = vsel %vm346, %v564, 0.0
    %v927 = vsel %vm346, %v562, 0.0
    %v928 = vsel %vm346, %v925, 0.0
    %v929 = vsel %vm346, %v923, 0.0
    %vm930 = vcmp.gt.s32.totalorder %v80, 1
    %v931 = vsel %vm930, 1, 0
    %932 = vset.pattern.permute.xlu0 0
    %933 = vperm.xlu0 %932, %v931
    %v934 = vpop.permute.xlu0 %933
    %vm935 = vcmp.eq.s32.totalorder %v934, 1
    %s936 = smul.u32 1, 4
    %s937 = smul.addr %s936, 8
    %s938 = scalar_lea.vmem [#allocation2], %s937
    %v939 = vld [vmem:[%s938] sm:$0xff]
    %v940 = vld [vmem:[%s938 + $0x8] sm:$0xff]
    %v941 = vld [vmem:[%s938 + $0x10] sm:$0xff]
    %v942 = vld [vmem:[%s938 + $0x18] sm:$0xff]
    %943 = vmatpush.msra.mxu0 %v414
    %944 = vmatpush.msra.mxu0 %v410
    %945 = vmatpush.msra.mxu0 %v406
    %946 = vmatpush.msra.mxu0 %v402
    %947 = vmatpush.msra.mxu0 %v398
    %948 = vmatpush.msra.mxu0 %v394
    %949 = vmatpush.msra.mxu0 %v390
    %950 = vmatpush.msra.mxu0 %v386
    %951 = vmatpush.msra.mxu0 %v382
    %952 = vmatpush.msra.mxu0 %v378
    %953 = vmatpush.msra.mxu0 %v374
    %954 = vmatpush.msra.mxu0 %v370
    %955 = vmatpush.msra.mxu0 %v366
    %956 = vmatpush.msra.mxu0 %v362
    %957 = vmatpush.msra.mxu0 %v358
    %958 = vmatpush.msra.mxu0 %v354
    %959 = vmatmul.f32.gmra.mxu0 %v926
    %v960 = vpop.f32.mrf.mxu0
    %v961 = vadd.f32 0.0, %v960
    %962 = vdwg.mxu0
    %963 = vmatpush.msra.mxu0 %v415
    %964 = vmatpush.msra.mxu0 %v411
    %965 = vmatpush.msra.mxu0 %v407
    %966 = vmatpush.msra.mxu0 %v403
    %967 = vmatpush.msra.mxu0 %v399
    %968 = vmatpush.msra.mxu0 %v395
    %969 = vmatpush.msra.mxu0 %v391
    %970 = vmatpush.msra.mxu0 %v387
    %971 = vmatpush.msra.mxu0 %v383
    %972 = vmatpush.msra.mxu0 %v379
    %973 = vmatpush.msra.mxu0 %v375
    %974 = vmatpush.msra.mxu0 %v371
    %975 = vmatpush.msra.mxu0 %v367
    %976 = vmatpush.msra.mxu0 %v363
    %977 = vmatpush.msra.mxu0 %v359
    %978 = vmatpush.msra.mxu0 %v355
    %979 = vmatmul.f32.gmra.mxu0 %v926
    %v980 = vpop.f32.mrf.mxu0
    %v981 = vadd.f32 0.0, %v980
    %982 = vdwg.mxu0
    %983 = vmatpush.msra.mxu0 %v416
    %984 = vmatpush.msra.mxu0 %v412
    %985 = vmatpush.msra.mxu0 %v408
    %986 = vmatpush.msra.mxu0 %v404
    %987 = vmatpush.msra.mxu0 %v400
    %988 = vmatpush.msra.mxu0 %v396
    %989 = vmatpush.msra.mxu0 %v392
    %990 = vmatpush.msra.mxu0 %v388
    %991 = vmatpush.msra.mxu0 %v384
    %992 = vmatpush.msra.mxu0 %v380
    %993 = vmatpush.msra.mxu0 %v376
    %994 = vmatpush.msra.mxu0 %v372
    %995 = vmatpush.msra.mxu0 %v368
    %996 = vmatpush.msra.mxu0 %v364
    %997 = vmatpush.msra.mxu0 %v360
    %998 = vmatpush.msra.mxu0 %v356
    %999 = vmatmul.f32.gmra.mxu0 %v926
    %v1000 = vpop.f32.mrf.mxu0
    %v1001 = vadd.f32 0.0, %v1000
    %1002 = vdwg.mxu0
    %1003 = vmatpush.msra.mxu0 %v417
    %1004 = vmatpush.msra.mxu0 %v413
    %1005 = vmatpush.msra.mxu0 %v409
    %1006 = vmatpush.msra.mxu0 %v405
    %1007 = vmatpush.msra.mxu0 %v401
    %1008 = vmatpush.msra.mxu0 %v397
    %1009 = vmatpush.msra.mxu0 %v393
    %1010 = vmatpush.msra.mxu0 %v389
    %1011 = vmatpush.msra.mxu0 %v385
    %1012 = vmatpush.msra.mxu0 %v381
    %1013 = vmatpush.msra.mxu0 %v377
    %1014 = vmatpush.msra.mxu0 %v373
    %1015 = vmatpush.msra.mxu0 %v369
    %1016 = vmatpush.msra.mxu0 %v365
    %1017 = vmatpush.msra.mxu0 %v361
    %1018 = vmatpush.msra.mxu0 %v357
    %1019 = vmatmul.f32.gmra.mxu0 %v926
    %v1020 = vpop.f32.mrf.mxu0
    %v1021 = vadd.f32 0.0, %v1020
    %1022 = vdwg.mxu0
    %v1023 = vadd.f32 %v939, %v961
    %v1024 = vadd.f32 %v940, %v981
    %v1025 = vadd.f32 %v941, %v1001
    %v1026 = vadd.f32 %v942, %v1021
    %v1027 = vxor.u32 %v1023, 2147483648
    %v1028 = vmul.f32 %v1027, 1.442695
    %v1029 = vpow.pop %v1028
    %v1030 = vadd.f32 %v1029, 1.0
    %v1031 = vrcp.pop %v1030
    %v1032 = vmul.f32 %v1030, %v1031
    %v1033 = vsub.f32 1.0, %v1032
    %v1034 = vmul.f32 %v1031, %v1033
    %v1035 = vadd.f32 %v1031, %v1034
    %vm1036 = vweird.f32 %v1030
    %vm1037 = vweird.f32 %v1031
    %vm1038 = vmor %vm1036, %vm1037
    %v1039 = vsel %vm1038, %v1031, %v1035
    %v1040 = vand.u32 2147483647, %v1030
    %vm1041 = vcmp.eq.f32.partialorder %v1040, 8.507059e+37
    %v1042 = vand.u32 %v1030, 2147483648
    %v1043 = vor.u32 1.1754944e-38, %v1042
    %v1044 = vsel %vm1041, %v1043, %v1039
    %v1045 = vmul.f32 1.0, %v1044
    %v1046 = vxor.u32 %v1024, 2147483648
    %v1047 = vmul.f32 %v1046, 1.442695
    %v1048 = vpow.pop %v1047
    %v1049 = vadd.f32 %v1048, 1.0
    %v1050 = vrcp.pop %v1049
    %v1051 = vmul.f32 %v1049, %v1050
    %v1052 = vsub.f32 1.0, %v1051
    %v1053 = vmul.f32 %v1050, %v1052
    %v1054 = vadd.f32 %v1050, %v1053
    %vm1055 = vweird.f32 %v1049
    %vm1056 = vweird.f32 %v1050
    %vm1057 = vmor %vm1055, %vm1056
    %v1058 = vsel %vm1057, %v1050, %v1054
    %v1059 = vand.u32 2147483647, %v1049
    %vm1060 = vcmp.eq.f32.partialorder %v1059, 8.507059e+37
    %v1061 = vand.u32 %v1049, 2147483648
    %v1062 = vor.u32 1.1754944e-38, %v1061
    %v1063 = vsel %vm1060, %v1062, %v1058
    %v1064 = vmul.f32 1.0, %v1063
    %v1065 = vtanh.pop %v1025
    %v1066 = vxor.u32 %v1026, 2147483648
    %v1067 = vmul.f32 %v1066, 1.442695
    %v1068 = vpow.pop %v1067
    %v1069 = vadd.f32 %v1068, 1.0
    %v1070 = vrcp.pop %v1069
    %v1071 = vmul.f32 %v1069, %v1070
    %v1072 = vsub.f32 1.0, %v1071
    %v1073 = vmul.f32 %v1070, %v1072
    %v1074 = vadd.f32 %v1070, %v1073
    %vm1075 = vweird.f32 %v1069
    %vm1076 = vweird.f32 %v1070
    %vm1077 = vmor %vm1075, %vm1076
    %v1078 = vsel %vm1077, %v1070, %v1074
    %v1079 = vand.u32 2147483647, %v1069
    %vm1080 = vcmp.eq.f32.partialorder %v1079, 8.507059e+37
    %v1081 = vand.u32 %v1069, 2147483648
    %v1082 = vor.u32 1.1754944e-38, %v1081
    %v1083 = vsel %vm1080, %v1082, %v1078
    %v1084 = vmul.f32 1.0, %v1083
    %v1085 = vmul.f32 %v1064, %v927
    %v1086 = vmul.f32 %v1045, %v1065
    %v1087 = vadd.f32 %v1085, %v1086
    %v1088 = vtanh.pop %v1087
    %v1089 = vmul.f32 %v1084, %v1088
    %1090 = vmatpush.msra.mxu0 %v625
    %1091 = vmatpush.msra.mxu0 %v621
    %1092 = vmatpush.msra.mxu0 %v617
    %1093 = vmatpush.msra.mxu0 %v613
    %1094 = vmatpush.msra.mxu0 %v609
    %1095 = vmatpush.msra.mxu0 %v605
    %1096 = vmatpush.msra.mxu0 %v601
    %1097 = vmatpush.msra.mxu0 %v597
    %1098 = vmatpush.msra.mxu0 %v593
    %1099 = vmatpush.msra.mxu0 %v589
    %1100 = vmatpush.msra.mxu0 %v585
    %1101 = vmatpush.msra.mxu0 %v581
    %1102 = vmatpush.msra.mxu0 %v577
    %1103 = vmatpush.msra.mxu0 %v573
    %1104 = vmatpush.msra.mxu0 %v569
    %1105 = vmatpush.msra.mxu0 %v565
    %1106 = vmatmul.f32.gmra.mxu0 %v1089
    %v1107 = vpop.f32.mrf.mxu0
    %v1108 = vadd.f32 %v695, %v1107
    %1109 = vdwg.mxu0
    %1110 = vmatpush.msra.mxu0 %v689
    %1111 = vmatpush.msra.mxu0 %v685
    %1112 = vmatpush.msra.mxu0 %v681
    %1113 = vmatpush.msra.mxu0 %v677
    %1114 = vmatpush.msra.mxu0 %v673
    %1115 = vmatpush.msra.mxu0 %v669
    %1116 = vmatpush.msra.mxu0 %v665
    %1117 = vmatpush.msra.mxu0 %v661
    %1118 = vmatpush.msra.mxu0 %v657
    %1119 = vmatpush.msra.mxu0 %v653
    %1120 = vmatpush.msra.mxu0 %v649
    %1121 = vmatpush.msra.mxu0 %v645
    %1122 = vmatpush.msra.mxu0 %v641
    %1123 = vmatpush.msra.mxu0 %v637
    %1124 = vmatpush.msra.mxu0 %v633
    %1125 = vmatpush.msra.mxu0 %v629
    %1126 = vmatmul.f32.gmra.mxu0 %v928
    %v1127 = vpop.f32.mrf.mxu0
    %v1128 = vadd.f32 %v1108, %v1127
    %1129 = vdwg.mxu0
    %1130 = vmatpush.msra.mxu0 %v626
    %1131 = vmatpush.msra.mxu0 %v622
    %1132 = vmatpush.msra.mxu0 %v618
    %1133 = vmatpush.msra.mxu0 %v614
    %1134 = vmatpush.msra.mxu0 %v610
    %1135 = vmatpush.msra.mxu0 %v606
    %1136 = vmatpush.msra.mxu0 %v602
    %1137 = vmatpush.msra.mxu0 %v598
    %1138 = vmatpush.msra.mxu0 %v594
    %1139 = vmatpush.msra.mxu0 %v590
    %1140 = vmatpush.msra.mxu0 %v586
    %1141 = vmatpush.msra.mxu0 %v582
    %1142 = vmatpush.msra.mxu0 %v578
    %1143 = vmatpush.msra.mxu0 %v574
    %1144 = vmatpush.msra.mxu0 %v570
    %1145 = vmatpush.msra.mxu0 %v566
    %1146 = vmatmul.f32.gmra.mxu0 %v1089
    %v1147 = vpop.f32.mrf.mxu0
    %v1148 = vadd.f32 %v696, %v1147
    %1149 = vdwg.mxu0
    %1150 = vmatpush.msra.mxu0 %v690
    %1151 = vmatpush.msra.mxu0 %v686
    %1152 = vmatpush.msra.mxu0 %v682
    %1153 = vmatpush.msra.mxu0 %v678
    %1154 = vmatpush.msra.mxu0 %v674
    %1155 = vmatpush.msra.mxu0 %v670
    %1156 = vmatpush.msra.mxu0 %v666
    %1157 = vmatpush.msra.mxu0 %v662
    %1158 = vmatpush.msra.mxu0 %v658
    %1159 = vmatpush.msra.mxu0 %v654
    %1160 = vmatpush.msra.mxu0 %v650
    %1161 = vmatpush.msra.mxu0 %v646
    %1162 = vmatpush.msra.mxu0 %v642
    %1163 = vmatpush.msra.mxu0 %v638
    %1164 = vmatpush.msra.mxu0 %v634
    %1165 = vmatpush.msra.mxu0 %v630
    %1166 = vmatmul.f32.gmra.mxu0 %v928
    %v1167 = vpop.f32.mrf.mxu0
    %v1168 = vadd.f32 %v1148, %v1167
    %1169 = vdwg.mxu0
    %1170 = vmatpush.msra.mxu0 %v627
    %1171 = vmatpush.msra.mxu0 %v623
    %1172 = vmatpush.msra.mxu0 %v619
    %1173 = vmatpush.msra.mxu0 %v615
    %1174 = vmatpush.msra.mxu0 %v611
    %1175 = vmatpush.msra.mxu0 %v607
    %1176 = vmatpush.msra.mxu0 %v603
    %1177 = vmatpush.msra.mxu0 %v599
    %1178 = vmatpush.msra.mxu0 %v595
    %1179 = vmatpush.msra.mxu0 %v591
    %1180 = vmatpush.msra.mxu0 %v587
    %1181 = vmatpush.msra.mxu0 %v583
    %1182 = vmatpush.msra.mxu0 %v579
    %1183 = vmatpush.msra.mxu0 %v575
    %1184 = vmatpush.msra.mxu0 %v571
    %1185 = vmatpush.msra.mxu0 %v567
    %1186 = vmatmul.f32.gmra.mxu0 %v1089
    %v1187 = vpop.f32.mrf.mxu0
    %v1188 = vadd.f32 %v697, %v1187
    %1189 = vdwg.mxu0
    %1190 = vmatpush.msra.mxu0 %v691
    %1191 = vmatpush.msra.mxu0 %v687
    %1192 = vmatpush.msra.mxu0 %v683
    %1193 = vmatpush.msra.mxu0 %v679
    %1194 = vmatpush.msra.mxu0 %v675
    %1195 = vmatpush.msra.mxu0 %v671
    %1196 = vmatpush.msra.mxu0 %v667
    %1197 = vmatpush.msra.mxu0 %v663
    %1198 = vmatpush.msra.mxu0 %v659
    %1199 = vmatpush.msra.mxu0 %v655
    %1200 = vmatpush.msra.mxu0 %v651
    %1201 = vmatpush.msra.mxu0 %v647
    %1202 = vmatpush.msra.mxu0 %v643
    %1203 = vmatpush.msra.mxu0 %v639
    %1204 = vmatpush.msra.mxu0 %v635
    %1205 = vmatpush.msra.mxu0 %v631
    %1206 = vmatmul.f32.gmra.mxu0 %v928
    %v1207 = vpop.f32.mrf.mxu0
    %v1208 = vadd.f32 %v1188, %v1207
    %1209 = vdwg.mxu0
    %1210 = vmatpush.msra.mxu0 %v628
    %1211 = vmatpush.msra.mxu0 %v624
    %1212 = vmatpush.msra.mxu0 %v620
    %1213 = vmatpush.msra.mxu0 %v616
    %1214 = vmatpush.msra.mxu0 %v612
    %1215 = vmatpush.msra.mxu0 %v608
    %1216 = vmatpush.msra.mxu0 %v604
    %1217 = vmatpush.msra.mxu0 %v600
    %1218 = vmatpush.msra.mxu0 %v596
    %1219 = vmatpush.msra.mxu0 %v592
    %1220 = vmatpush.msra.mxu0 %v588
    %1221 = vmatpush.msra.mxu0 %v584
    %1222 = vmatpush.msra.mxu0 %v580
    %1223 = vmatpush.msra.mxu0 %v576
    %1224 = vmatpush.msra.mxu0 %v572
    %1225 = vmatpush.msra.mxu0 %v568
    %1226 = vmatmul.f32.gmra.mxu0 %v1089
    %v1227 = vpop.f32.mrf.mxu0
    %v1228 = vadd.f32 %v698, %v1227
    %1229 = vdwg.mxu0
    %1230 = vmatpush.msra.mxu0 %v692
    %1231 = vmatpush.msra.mxu0 %v688
    %1232 = vmatpush.msra.mxu0 %v684
    %1233 = vmatpush.msra.mxu0 %v680
    %1234 = vmatpush.msra.mxu0 %v676
    %1235 = vmatpush.msra.mxu0 %v672
    %1236 = vmatpush.msra.mxu0 %v668
    %1237 = vmatpush.msra.mxu0 %v664
    %1238 = vmatpush.msra.mxu0 %v660
    %1239 = vmatpush.msra.mxu0 %v656
    %1240 = vmatpush.msra.mxu0 %v652
    %1241 = vmatpush.msra.mxu0 %v648
    %1242 = vmatpush.msra.mxu0 %v644
    %1243 = vmatpush.msra.mxu0 %v640
    %1244 = vmatpush.msra.mxu0 %v636
    %1245 = vmatpush.msra.mxu0 %v632
    %1246 = vmatmul.f32.gmra.mxu0 %v928
    %v1247 = vpop.f32.mrf.mxu0
    %v1248 = vadd.f32 %v1228, %v1247
    %1249 = vdwg.mxu0
    %v1250 = vxor.u32 %v1128, 2147483648
    %v1251 = vmul.f32 %v1250, 1.442695
    %v1252 = vpow.pop %v1251
    %v1253 = vadd.f32 %v1252, 1.0
    %v1254 = vrcp.pop %v1253
    %v1255 = vmul.f32 %v1253, %v1254
    %v1256 = vsub.f32 1.0, %v1255
    %v1257 = vmul.f32 %v1254, %v1256
    %v1258 = vadd.f32 %v1254, %v1257
    %vm1259 = vweird.f32 %v1253
    %vm1260 = vweird.f32 %v1254
    %vm1261 = vmor %vm1259, %vm1260
    %v1262 = vsel %vm1261, %v1254, %v1258
    %v1263 = vand.u32 2147483647, %v1253
    %vm1264 = vcmp.eq.f32.partialorder %v1263, 8.507059e+37
    %v1265 = vand.u32 %v1253, 2147483648
    %v1266 = vor.u32 1.1754944e-38, %v1265
    %v1267 = vsel %vm1264, %v1266, %v1262
    %v1268 = vmul.f32 1.0, %v1267
    %v1269 = vxor.u32 %v1168, 2147483648
    %v1270 = vmul.f32 %v1269, 1.442695
    %v1271 = vpow.pop %v1270
    %v1272 = vadd.f32 %v1271, 1.0
    %v1273 = vrcp.pop %v1272
    %v1274 = vmul.f32 %v1272, %v1273
    %v1275 = vsub.f32 1.0, %v1274
    %v1276 = vmul.f32 %v1273, %v1275
    %v1277 = vadd.f32 %v1273, %v1276
    %vm1278 = vweird.f32 %v1272
    %vm1279 = vweird.f32 %v1273
    %vm1280 = vmor %vm1278, %vm1279
    %v1281 = vsel %vm1280, %v1273, %v1277
    %v1282 = vand.u32 2147483647, %v1272
    %vm1283 = vcmp.eq.f32.partialorder %v1282, 8.507059e+37
    %v1284 = vand.u32 %v1272, 2147483648
    %v1285 = vor.u32 1.1754944e-38, %v1284
    %v1286 = vsel %vm1283, %v1285, %v1281
    %v1287 = vmul.f32 1.0, %v1286
    %v1288 = vtanh.pop %v1208
    %v1289 = vxor.u32 %v1248, 2147483648
    %v1290 = vmul.f32 %v1289, 1.442695
    %v1291 = vpow.pop %v1290
    %v1292 = vadd.f32 %v1291, 1.0
    %v1293 = vrcp.pop %v1292
    %v1294 = vmul.f32 %v1292, %v1293
    %v1295 = vsub.f32 1.0, %v1294
    %v1296 = vmul.f32 %v1293, %v1295
    %v1297 = vadd.f32 %v1293, %v1296
    %vm1298 = vweird.f32 %v1292
    %vm1299 = vweird.f32 %v1293
    %vm1300 = vmor %vm1298, %vm1299
    %v1301 = vsel %vm1300, %v1293, %v1297
    %v1302 = vand.u32 2147483647, %v1292
    %vm1303 = vcmp.eq.f32.partialorder %v1302, 8.507059e+37
    %v1304 = vand.u32 %v1292, 2147483648
    %v1305 = vor.u32 1.1754944e-38, %v1304
    %v1306 = vsel %vm1303, %v1305, %v1301
    %v1307 = vmul.f32 1.0, %v1306
    %v1308 = vmul.f32 %v1287, %v929
    %v1309 = vmul.f32 %v1268, %v1288
    %v1310 = vadd.f32 %v1308, %v1309
    %v1311 = vtanh.pop %v1310
    %v1312 = vmul.f32 %v1307, %v1311
    %v1313 = vsel %vm935, %v1089, %v926
    %v1314 = vsel %vm935, %v1087, %v927
    %v1315 = vsel %vm935, %v1312, %v928
    %v1316 = vsel %vm935, %v1310, %v929
    %vm1317 = vcmp.gt.s32.totalorder %v80, 2
    %v1318 = vsel %vm1317, 1, 0
    %1319 = vset.pattern.permute.xlu0 0
    %1320 = vperm.xlu0 %1319, %v1318
    %v1321 = vpop.permute.xlu0 %1320
    %vm1322 = vcmp.eq.s32.totalorder %v1321, 1
    %s1323 = smul.u32 2, 4
    %s1324 = smul.addr %s1323, 8
    %s1325 = scalar_lea.vmem [#allocation2], %s1324
    %v1326 = vld [vmem:[%s1325] sm:$0xff]
    %v1327 = vld [vmem:[%s1325 + $0x8] sm:$0xff]
    %v1328 = vld [vmem:[%s1325 + $0x10] sm:$0xff]
    %v1329 = vld [vmem:[%s1325 + $0x18] sm:$0xff]
    %1330 = vmatpush.msra.mxu0 %v414
    %1331 = vmatpush.msra.mxu0 %v410
    %1332 = vmatpush.msra.mxu0 %v406
    %1333 = vmatpush.msra.mxu0 %v402
    %1334 = vmatpush.msra.mxu0 %v398
    %1335 = vmatpush.msra.mxu0 %v394
    %1336 = vmatpush.msra.mxu0 %v390
    %1337 = vmatpush.msra.mxu0 %v386
    %1338 = vmatpush.msra.mxu0 %v382
    %1339 = vmatpush.msra.mxu0 %v378
    %1340 = vmatpush.msra.mxu0 %v374
    %1341 = vmatpush.msra.mxu0 %v370
    %1342 = vmatpush.msra.mxu0 %v366
    %1343 = vmatpush.msra.mxu0 %v362
    %1344 = vmatpush.msra.mxu0 %v358
    %1345 = vmatpush.msra.mxu0 %v354
    %1346 = vmatmul.f32.gmra.mxu0 %v1313
    %v1347 = vpop.f32.mrf.mxu0
    %v1348 = vadd.f32 0.0, %v1347
    %1349 = vdwg.mxu0
    %1350 = vmatpush.msra.mxu0 %v415
    %1351 = vmatpush.msra.mxu0 %v411
    %1352 = vmatpush.msra.mxu0 %v407
    %1353 = vmatpush.msra.mxu0 %v403
    %1354 = vmatpush.msra.mxu0 %v399
    %1355 = vmatpush.msra.mxu0 %v395
    %1356 = vmatpush.msra.mxu0 %v391
    %1357 = vmatpush.msra.mxu0 %v387
    %1358 = vmatpush.msra.mxu0 %v383
    %1359 = vmatpush.msra.mxu0 %v379
    %1360 = vmatpush.msra.mxu0 %v375
    %1361 = vmatpush.msra.mxu0 %v371
    %1362 = vmatpush.msra.mxu0 %v367
    %1363 = vmatpush.msra.mxu0 %v363
    %1364 = vmatpush.msra.mxu0 %v359
    %1365 = vmatpush.msra.mxu0 %v355
    %1366 = vmatmul.f32.gmra.mxu0 %v1313
    %v1367 = vpop.f32.mrf.mxu0
    %v1368 = vadd.f32 0.0, %v1367
    %1369 = vdwg.mxu0
    %1370 = vmatpush.msra.mxu0 %v416
    %1371 = vmatpush.msra.mxu0 %v412
    %1372 = vmatpush.msra.mxu0 %v408
    %1373 = vmatpush.msra.mxu0 %v404
    %1374 = vmatpush.msra.mxu0 %v400
    %1375 = vmatpush.msra.mxu0 %v396
    %1376 = vmatpush.msra.mxu0 %v392
    %1377 = vmatpush.msra.mxu0 %v388
    %1378 = vmatpush.msra.mxu0 %v384
    %1379 = vmatpush.msra.mxu0 %v380
    %1380 = vmatpush.msra.mxu0 %v376
    %1381 = vmatpush.msra.mxu0 %v372
    %1382 = vmatpush.msra.mxu0 %v368
    %1383 = vmatpush.msra.mxu0 %v364
    %1384 = vmatpush.msra.mxu0 %v360
    %1385 = vmatpush.msra.mxu0 %v356
    %1386 = vmatmul.f32.gmra.mxu0 %v1313
    %v1387 = vpop.f32.mrf.mxu0
    %v1388 = vadd.f32 0.0, %v1387
    %1389 = vdwg.mxu0
    %1390 = vmatpush.msra.mxu0 %v417
    %1391 = vmatpush.msra.mxu0 %v413
    %1392 = vmatpush.msra.mxu0 %v409
    %1393 = vmatpush.msra.mxu0 %v405
    %1394 = vmatpush.msra.mxu0 %v401
    %1395 = vmatpush.msra.mxu0 %v397
    %1396 = vmatpush.msra.mxu0 %v393
    %1397 = vmatpush.msra.mxu0 %v389
    %1398 = vmatpush.msra.mxu0 %v385
    %1399 = vmatpush.msra.mxu0 %v381
    %1400 = vmatpush.msra.mxu0 %v377
    %1401 = vmatpush.msra.mxu0 %v373
    %1402 = vmatpush.msra.mxu0 %v369
    %1403 = vmatpush.msra.mxu0 %v365
    %1404 = vmatpush.msra.mxu0 %v361
    %1405 = vmatpush.msra.mxu0 %v357
    %1406 = vmatmul.f32.gmra.mxu0 %v1313
    %v1407 = vpop.f32.mrf.mxu0
    %v1408 = vadd.f32 0.0, %v1407
    %1409 = vdwg.mxu0
    %v1410 = vadd.f32 %v1326, %v1348
    %v1411 = vadd.f32 %v1327, %v1368
    %v1412 = vadd.f32 %v1328, %v1388
    %v1413 = vadd.f32 %v1329, %v1408
    %v1414 = vxor.u32 %v1410, 2147483648
    %v1415 = vmul.f32 %v1414, 1.442695
    %v1416 = vpow.pop %v1415
    %v1417 = vadd.f32 %v1416, 1.0
    %v1418 = vrcp.pop %v1417
    %v1419 = vmul.f32 %v1417, %v1418
    %v1420 = vsub.f32 1.0, %v1419
    %v1421 = vmul.f32 %v1418, %v1420
    %v1422 = vadd.f32 %v1418, %v1421
    %vm1423 = vweird.f32 %v1417
    %vm1424 = vweird.f32 %v1418
    %vm1425 = vmor %vm1423, %vm1424
    %v1426 = vsel %vm1425, %v1418, %v1422
    %v1427 = vand.u32 2147483647, %v1417
    %vm1428 = vcmp.eq.f32.partialorder %v1427, 8.507059e+37
    %v1429 = vand.u32 %v1417, 2147483648
    %v1430 = vor.u32 1.1754944e-38, %v1429
    %v1431 = vsel %vm1428, %v1430, %v1426
    %v1432 = vmul.f32 1.0, %v1431
    %v1433 = vxor.u32 %v1411, 2147483648
    %v1434 = vmul.f32 %v1433, 1.442695
    %v1435 = vpow.pop %v1434
    %v1436 = vadd.f32 %v1435, 1.0
    %v1437 = vrcp.pop %v1436
    %v1438 = vmul.f32 %v1436, %v1437
    %v1439 = vsub.f32 1.0, %v1438
    %v1440 = vmul.f32 %v1437, %v1439
    %v1441 = vadd.f32 %v1437, %v1440
    %vm1442 = vweird.f32 %v1436
    %vm1443 = vweird.f32 %v1437
    %vm1444 = vmor %vm1442, %vm1443
    %v1445 = vsel %vm1444, %v1437, %v1441
    %v1446 = vand.u32 2147483647, %v1436
    %vm1447 = vcmp.eq.f32.partialorder %v1446, 8.507059e+37
    %v1448 = vand.u32 %v1436, 2147483648
    %v1449 = vor.u32 1.1754944e-38, %v1448
    %v1450 = vsel %vm1447, %v1449, %v1445
    %v1451 = vmul.f32 1.0, %v1450
    %v1452 = vtanh.pop %v1412
    %v1453 = vxor.u32 %v1413, 2147483648
    %v1454 = vmul.f32 %v1453, 1.442695
    %v1455 = vpow.pop %v1454
    %v1456 = vadd.f32 %v1455, 1.0
    %v1457 = vrcp.pop %v1456
    %v1458 = vmul.f32 %v1456, %v1457
    %v1459 = vsub.f32 1.0, %v1458
    %v1460 = vmul.f32 %v1457, %v1459
    %v1461 = vadd.f32 %v1457, %v1460
    %vm1462 = vweird.f32 %v1456
    %vm1463 = vweird.f32 %v1457
    %vm1464 = vmor %vm1462, %vm1463
    %v1465 = vsel %vm1464, %v1457, %v1461
    %v1466 = vand.u32 2147483647, %v1456
    %vm1467 = vcmp.eq.f32.partialorder %v1466, 8.507059e+37
    %v1468 = vand.u32 %v1456, 2147483648
    %v1469 = vor.u32 1.1754944e-38, %v1468
    %v1470 = vsel %vm1467, %v1469, %v1465
    %v1471 = vmul.f32 1.0, %v1470
    %v1472 = vmul.f32 %v1451, %v1314
    %v1473 = vmul.f32 %v1432, %v1452
    %v1474 = vadd.f32 %v1472, %v1473
    %v1475 = vtanh.pop %v1474
    %v1476 = vmul.f32 %v1471, %v1475
    %1477 = vmatpush.msra.mxu0 %v625
    %1478 = vmatpush.msra.mxu0 %v621
    %1479 = vmatpush.msra.mxu0 %v617
    %1480 = vmatpush.msra.mxu0 %v613
    %1481 = vmatpush.msra.mxu0 %v609
    %1482 = vmatpush.msra.mxu0 %v605
    %1483 = vmatpush.msra.mxu0 %v601
    %1484 = vmatpush.msra.mxu0 %v597
    %1485 = vmatpush.msra.mxu0 %v593
    %1486 = vmatpush.msra.mxu0 %v589
    %1487 = vmatpush.msra.mxu0 %v585
    %1488 = vmatpush.msra.mxu0 %v581
    %1489 = vmatpush.msra.mxu0 %v577
    %1490 = vmatpush.msra.mxu0 %v573
    %1491 = vmatpush.msra.mxu0 %v569
    %1492 = vmatpush.msra.mxu0 %v565
    %1493 = vmatmul.f32.gmra.mxu0 %v1476
    %v1494 = vpop.f32.mrf.mxu0
    %v1495 = vadd.f32 %v695, %v1494
    %1496 = vdwg.mxu0
    %1497 = vmatpush.msra.mxu0 %v689
    %1498 = vmatpush.msra.mxu0 %v685
    %1499 = vmatpush.msra.mxu0 %v681
    %1500 = vmatpush.msra.mxu0 %v677
    %1501 = vmatpush.msra.mxu0 %v673
    %1502 = vmatpush.msra.mxu0 %v669
    %1503 = vmatpush.msra.mxu0 %v665
    %1504 = vmatpush.msra.mxu0 %v661
    %1505 = vmatpush.msra.mxu0 %v657
    %1506 = vmatpush.msra.mxu0 %v653
    %1507 = vmatpush.msra.mxu0 %v649
    %1508 = vmatpush.msra.mxu0 %v645
    %1509 = vmatpush.msra.mxu0 %v641
    %1510 = vmatpush.msra.mxu0 %v637
    %1511 = vmatpush.msra.mxu0 %v633
    %1512 = vmatpush.msra.mxu0 %v629
    %1513 = vmatmul.f32.gmra.mxu0 %v1315
    %v1514 = vpop.f32.mrf.mxu0
    %v1515 = vadd.f32 %v1495, %v1514
    %1516 = vdwg.mxu0
    %1517 = vmatpush.msra.mxu0 %v626
    %1518 = vmatpush.msra.mxu0 %v622
    %1519 = vmatpush.msra.mxu0 %v618
    %1520 = vmatpush.msra.mxu0 %v614
    %1521 = vmatpush.msra.mxu0 %v610
    %1522 = vmatpush.msra.mxu0 %v606
    %1523 = vmatpush.msra.mxu0 %v602
    %1524 = vmatpush.msra.mxu0 %v598
    %1525 = vmatpush.msra.mxu0 %v594
    %1526 = vmatpush.msra.mxu0 %v590
    %1527 = vmatpush.msra.mxu0 %v586
    %1528 = vmatpush.msra.mxu0 %v582
    %1529 = vmatpush.msra.mxu0 %v578
    %1530 = vmatpush.msra.mxu0 %v574
    %1531 = vmatpush.msra.mxu0 %v570
    %1532 = vmatpush.msra.mxu0 %v566
    %1533 = vmatmul.f32.gmra.mxu0 %v1476
    %v1534 = vpop.f32.mrf.mxu0
    %v1535 = vadd.f32 %v696, %v1534
    %1536 = vdwg.mxu0
    %1537 = vmatpush.msra.mxu0 %v690
    %1538 = vmatpush.msra.mxu0 %v686
    %1539 = vmatpush.msra.mxu0 %v682
    %1540 = vmatpush.msra.mxu0 %v678
    %1541 = vmatpush.msra.mxu0 %v674
    %1542 = vmatpush.msra.mxu0 %v670
    %1543 = vmatpush.msra.mxu0 %v666
    %1544 = vmatpush.msra.mxu0 %v662
    %1545 = vmatpush.msra.mxu0 %v658
    %1546 = vmatpush.msra.mxu0 %v654
    %1547 = vmatpush.msra.mxu0 %v650
    %1548 = vmatpush.msra.mxu0 %v646
    %1549 = vmatpush.msra.mxu0 %v642
    %1550 = vmatpush.msra.mxu0 %v638
    %1551 = vmatpush.msra.mxu0 %v634
    %1552 = vmatpush.msra.mxu0 %v630
    %1553 = vmatmul.f32.gmra.mxu0 %v1315
    %v1554 = vpop.f32.mrf.mxu0
    %v1555 = vadd.f32 %v1535, %v1554
    %1556 = vdwg.mxu0
    %1557 = vmatpush.msra.mxu0 %v627
    %1558 = vmatpush.msra.mxu0 %v623
    %1559 = vmatpush.msra.mxu0 %v619
    %1560 = vmatpush.msra.mxu0 %v615
    %1561 = vmatpush.msra.mxu0 %v611
    %1562 = vmatpush.msra.mxu0 %v607
    %1563 = vmatpush.msra.mxu0 %v603
    %1564 = vmatpush.msra.mxu0 %v599
    %1565 = vmatpush.msra.mxu0 %v595
    %1566 = vmatpush.msra.mxu0 %v591
    %1567 = vmatpush.msra.mxu0 %v587
    %1568 = vmatpush.msra.mxu0 %v583
    %1569 = vmatpush.msra.mxu0 %v579
    %1570 = vmatpush.msra.mxu0 %v575
    %1571 = vmatpush.msra.mxu0 %v571
    %1572 = vmatpush.msra.mxu0 %v567
    %1573 = vmatmul.f32.gmra.mxu0 %v1476
    %v1574 = vpop.f32.mrf.mxu0
    %v1575 = vadd.f32 %v697, %v1574
    %1576 = vdwg.mxu0
    %1577 = vmatpush.msra.mxu0 %v691
    %1578 = vmatpush.msra.mxu0 %v687
    %1579 = vmatpush.msra.mxu0 %v683
    %1580 = vmatpush.msra.mxu0 %v679
    %1581 = vmatpush.msra.mxu0 %v675
    %1582 = vmatpush.msra.mxu0 %v671
    %1583 = vmatpush.msra.mxu0 %v667
    %1584 = vmatpush.msra.mxu0 %v663
    %1585 = vmatpush.msra.mxu0 %v659
    %1586 = vmatpush.msra.mxu0 %v655
    %1587 = vmatpush.msra.mxu0 %v651
    %1588 = vmatpush.msra.mxu0 %v647
    %1589 = vmatpush.msra.mxu0 %v643
    %1590 = vmatpush.msra.mxu0 %v639
    %1591 = vmatpush.msra.mxu0 %v635
    %1592 = vmatpush.msra.mxu0 %v631
    %1593 = vmatmul.f32.gmra.mxu0 %v1315
    %v1594 = vpop.f32.mrf.mxu0
    %v1595 = vadd.f32 %v1575, %v1594
    %1596 = vdwg.mxu0
    %1597 = vmatpush.msra.mxu0 %v628
    %1598 = vmatpush.msra.mxu0 %v624
    %1599 = vmatpush.msra.mxu0 %v620
    %1600 = vmatpush.msra.mxu0 %v616
    %1601 = vmatpush.msra.mxu0 %v612
    %1602 = vmatpush.msra.mxu0 %v608
    %1603 = vmatpush.msra.mxu0 %v604
    %1604 = vmatpush.msra.mxu0 %v600
    %1605 = vmatpush.msra.mxu0 %v596
    %1606 = vmatpush.msra.mxu0 %v592
    %1607 = vmatpush.msra.mxu0 %v588
    %1608 = vmatpush.msra.mxu0 %v584
    %1609 = vmatpush.msra.mxu0 %v580
    %1610 = vmatpush.msra.mxu0 %v576
    %1611 = vmatpush.msra.mxu0 %v572
    %1612 = vmatpush.msra.mxu0 %v568
    %1613 = vmatmul.f32.gmra.mxu0 %v1476
    %v1614 = vpop.f32.mrf.mxu0
    %v1615 = vadd.f32 %v698, %v1614
    %1616 = vdwg.mxu0
    %1617 = vmatpush.msra.mxu0 %v692
    %1618 = vmatpush.msra.mxu0 %v688
    %1619 = vmatpush.msra.mxu0 %v684
    %1620 = vmatpush.msra.mxu0 %v680
    %1621 = vmatpush.msra.mxu0 %v676
    %1622 = vmatpush.msra.mxu0 %v672
    %1623 = vmatpush.msra.mxu0 %v668
    %1624 = vmatpush.msra.mxu0 %v664
    %1625 = vmatpush.msra.mxu0 %v660
    %1626 = vmatpush.msra.mxu0 %v656
    %1627 = vmatpush.msra.mxu0 %v652
    %1628 = vmatpush.msra.mxu0 %v648
    %1629 = vmatpush.msra.mxu0 %v644
    %1630 = vmatpush.msra.mxu0 %v640
    %1631 = vmatpush.msra.mxu0 %v636
    %1632 = vmatpush.msra.mxu0 %v632
    %1633 = vmatmul.f32.gmra.mxu0 %v1315
    %v1634 = vpop.f32.mrf.mxu0
    %v1635 = vadd.f32 %v1615, %v1634
    %1636 = vdwg.mxu0
    %v1637 = vxor.u32 %v1515, 2147483648
    %v1638 = vmul.f32 %v1637, 1.442695
    %v1639 = vpow.pop %v1638
    %v1640 = vadd.f32 %v1639, 1.0
    %v1641 = vrcp.pop %v1640
    %v1642 = vmul.f32 %v1640, %v1641
    %v1643 = vsub.f32 1.0, %v1642
    %v1644 = vmul.f32 %v1641, %v1643
    %v1645 = vadd.f32 %v1641, %v1644
    %vm1646 = vweird.f32 %v1640
    %vm1647 = vweird.f32 %v1641
    %vm1648 = vmor %vm1646, %vm1647
    %v1649 = vsel %vm1648, %v1641, %v1645
    %v1650 = vand.u32 2147483647, %v1640
    %vm1651 = vcmp.eq.f32.partialorder %v1650, 8.507059e+37
    %v1652 = vand.u32 %v1640, 2147483648
    %v1653 = vor.u32 1.1754944e-38, %v1652
    %v1654 = vsel %vm1651, %v1653, %v1649
    %v1655 = vmul.f32 1.0, %v1654
    %v1656 = vxor.u32 %v1555, 2147483648
    %v1657 = vmul.f32 %v1656, 1.442695
    %v1658 = vpow.pop %v1657
    %v1659 = vadd.f32 %v1658, 1.0
    %v1660 = vrcp.pop %v1659
    %v1661 = vmul.f32 %v1659, %v1660
    %v1662 = vsub.f32 1.0, %v1661
    %v1663 = vmul.f32 %v1660, %v1662
    %v1664 = vadd.f32 %v1660, %v1663
    %vm1665 = vweird.f32 %v1659
    %vm1666 = vweird.f32 %v1660
    %vm1667 = vmor %vm1665, %vm1666
    %v1668 = vsel %vm1667, %v1660, %v1664
    %v1669 = vand.u32 2147483647, %v1659
    %vm1670 = vcmp.eq.f32.partialorder %v1669, 8.507059e+37
    %v1671 = vand.u32 %v1659, 2147483648
    %v1672 = vor.u32 1.1754944e-38, %v1671
    %v1673 = vsel %vm1670, %v1672, %v1668
    %v1674 = vmul.f32 1.0, %v1673
    %v1675 = vtanh.pop %v1595
    %v1676 = vxor.u32 %v1635, 2147483648
    %v1677 = vmul.f32 %v1676, 1.442695
    %v1678 = vpow.pop %v1677
    %v1679 = vadd.f32 %v1678, 1.0
    %v1680 = vrcp.pop %v1679
    %v1681 = vmul.f32 %v1679, %v1680
    %v1682 = vsub.f32 1.0, %v1681
    %v1683 = vmul.f32 %v1680, %v1682
    %v1684 = vadd.f32 %v1680, %v1683
    %vm1685 = vweird.f32 %v1679
    %vm1686 = vweird.f32 %v1680
    %vm1687 = vmor %vm1685, %vm1686
    %v1688 = vsel %vm1687, %v1680, %v1684
    %v1689 = vand.u32 2147483647, %v1679
    %vm1690 = vcmp.eq.f32.partialorder %v1689, 8.507059e+37
    %v1691 = vand.u32 %v1679, 2147483648
    %v1692 = vor.u32 1.1754944e-38, %v1691
    %v1693 = vsel %vm1690, %v1692, %v1688
    %v1694 = vmul.f32 1.0, %v1693
    %v1695 = vmul.f32 %v1674, %v1316
    %v1696 = vmul.f32 %v1655, %v1675
    %v1697 = vadd.f32 %v1695, %v1696
    %v1698 = vtanh.pop %v1697
    %v1699 = vmul.f32 %v1694, %v1698
    %v1700 = vsel %vm1322, %v1476, %v1313
    %v1701 = vsel %vm1322, %v1474, %v1314
    %v1702 = vsel %vm1322, %v1699, %v1315
    %v1703 = vsel %vm1322, %v1697, %v1316
    %vm1704 = vcmp.gt.s32.totalorder %v80, 3
    %v1705 = vsel %vm1704, 1, 0
    %1706 = vset.pattern.permute.xlu0 0
    %1707 = vperm.xlu0 %1706, %v1705
    %v1708 = vpop.permute.xlu0 %1707
    %vm1709 = vcmp.eq.s32.totalorder %v1708, 1
    %s1710 = smul.u32 3, 4
    %s1711 = smul.addr %s1710, 8
    %s1712 = scalar_lea.vmem [#allocation2], %s1711
    %v1713 = vld [vmem:[%s1712] sm:$0xff]
    %v1714 = vld [vmem:[%s1712 + $0x8] sm:$0xff]
    %v1715 = vld [vmem:[%s1712 + $0x10] sm:$0xff]
    %v1716 = vld [vmem:[%s1712 + $0x18] sm:$0xff]
    %1717 = vmatpush.msra.mxu0 %v414
    %1718 = vmatpush.msra.mxu0 %v410
    %1719 = vmatpush.msra.mxu0 %v406
    %1720 = vmatpush.msra.mxu0 %v402
    %1721 = vmatpush.msra.mxu0 %v398
    %1722 = vmatpush.msra.mxu0 %v394
    %1723 = vmatpush.msra.mxu0 %v390
    %1724 = vmatpush.msra.mxu0 %v386
    %1725 = vmatpush.msra.mxu0 %v382
    %1726 = vmatpush.msra.mxu0 %v378
    %1727 = vmatpush.msra.mxu0 %v374
    %1728 = vmatpush.msra.mxu0 %v370
    %1729 = vmatpush.msra.mxu0 %v366
    %1730 = vmatpush.msra.mxu0 %v362
    %1731 = vmatpush.msra.mxu0 %v358
    %1732 = vmatpush.msra.mxu0 %v354
    %1733 = vmatmul.f32.gmra.mxu0 %v1700
    %v1734 = vpop.f32.mrf.mxu0
    %v1735 = vadd.f32 0.0, %v1734
    %1736 = vdwg.mxu0
    %1737 = vmatpush.msra.mxu0 %v415
    %1738 = vmatpush.msra.mxu0 %v411
    %1739 = vmatpush.msra.mxu0 %v407
    %1740 = vmatpush.msra.mxu0 %v403
    %1741 = vmatpush.msra.mxu0 %v399
    %1742 = vmatpush.msra.mxu0 %v395
    %1743 = vmatpush.msra.mxu0 %v391
    %1744 = vmatpush.msra.mxu0 %v387
    %1745 = vmatpush.msra.mxu0 %v383
    %1746 = vmatpush.msra.mxu0 %v379
    %1747 = vmatpush.msra.mxu0 %v375
    %1748 = vmatpush.msra.mxu0 %v371
    %1749 = vmatpush.msra.mxu0 %v367
    %1750 = vmatpush.msra.mxu0 %v363
    %1751 = vmatpush.msra.mxu0 %v359
    %1752 = vmatpush.msra.mxu0 %v355
    %1753 = vmatmul.f32.gmra.mxu0 %v1700
    %v1754 = vpop.f32.mrf.mxu0
    %v1755 = vadd.f32 0.0, %v1754
    %1756 = vdwg.mxu0
    %1757 = vmatpush.msra.mxu0 %v416
    %1758 = vmatpush.msra.mxu0 %v412
    %1759 = vmatpush.msra.mxu0 %v408
    %1760 = vmatpush.msra.mxu0 %v404
    %1761 = vmatpush.msra.mxu0 %v400
    %1762 = vmatpush.msra.mxu0 %v396
    %1763 = vmatpush.msra.mxu0 %v392
    %1764 = vmatpush.msra.mxu0 %v388
    %1765 = vmatpush.msra.mxu0 %v384
    %1766 = vmatpush.msra.mxu0 %v380
    %1767 = vmatpush.msra.mxu0 %v376
    %1768 = vmatpush.msra.mxu0 %v372
    %1769 = vmatpush.msra.mxu0 %v368
    %1770 = vmatpush.msra.mxu0 %v364
    %1771 = vmatpush.msra.mxu0 %v360
    %1772 = vmatpush.msra.mxu0 %v356
    %1773 = vmatmul.f32.gmra.mxu0 %v1700
    %v1774 = vpop.f32.mrf.mxu0
    %v1775 = vadd.f32 0.0, %v1774
    %1776 = vdwg.mxu0
    %1777 = vmatpush.msra.mxu0 %v417
    %1778 = vmatpush.msra.mxu0 %v413
    %1779 = vmatpush.msra.mxu0 %v409
    %1780 = vmatpush.msra.mxu0 %v405
    %1781 = vmatpush.msra.mxu0 %v401
    %1782 = vmatpush.msra.mxu0 %v397
    %1783 = vmatpush.msra.mxu0 %v393
    %1784 = vmatpush.msra.mxu0 %v389
    %1785 = vmatpush.msra.mxu0 %v385
    %1786 = vmatpush.msra.mxu0 %v381
    %1787 = vmatpush.msra.mxu0 %v377
    %1788 = vmatpush.msra.mxu0 %v373
    %1789 = vmatpush.msra.mxu0 %v369
    %1790 = vmatpush.msra.mxu0 %v365
    %1791 = vmatpush.msra.mxu0 %v361
    %1792 = vmatpush.msra.mxu0 %v357
    %1793 = vmatmul.f32.gmra.mxu0 %v1700
    %v1794 = vpop.f32.mrf.mxu0
    %v1795 = vadd.f32 0.0, %v1794
    %1796 = vdwg.mxu0
    %v1797 = vadd.f32 %v1713, %v1735
    %v1798 = vadd.f32 %v1714, %v1755
    %v1799 = vadd.f32 %v1715, %v1775
    %v1800 = vadd.f32 %v1716, %v1795
    %v1801 = vxor.u32 %v1797, 2147483648
    %v1802 = vmul.f32 %v1801, 1.442695
    %v1803 = vpow.pop %v1802
    %v1804 = vadd.f32 %v1803, 1.0
    %v1805 = vrcp.pop %v1804
    %v1806 = vmul.f32 %v1804, %v1805
    %v1807 = vsub.f32 1.0, %v1806
    %v1808 = vmul.f32 %v1805, %v1807
    %v1809 = vadd.f32 %v1805, %v1808
    %vm1810 = vweird.f32 %v1804
    %vm1811 = vweird.f32 %v1805
    %vm1812 = vmor %vm1810, %vm1811
    %v1813 = vsel %vm1812, %v1805, %v1809
    %v1814 = vand.u32 2147483647, %v1804
    %vm1815 = vcmp.eq.f32.partialorder %v1814, 8.507059e+37
    %v1816 = vand.u32 %v1804, 2147483648
    %v1817 = vor.u32 1.1754944e-38, %v1816
    %v1818 = vsel %vm1815, %v1817, %v1813
    %v1819 = vmul.f32 1.0, %v1818
    %v1820 = vxor.u32 %v1798, 2147483648
    %v1821 = vmul.f32 %v1820, 1.442695
    %v1822 = vpow.pop %v1821
    %v1823 = vadd.f32 %v1822, 1.0
    %v1824 = vrcp.pop %v1823
    %v1825 = vmul.f32 %v1823, %v1824
    %v1826 = vsub.f32 1.0, %v1825
    %v1827 = vmul.f32 %v1824, %v1826
    %v1828 = vadd.f32 %v1824, %v1827
    %vm1829 = vweird.f32 %v1823
    %vm1830 = vweird.f32 %v1824
    %vm1831 = vmor %vm1829, %vm1830
    %v1832 = vsel %vm1831, %v1824, %v1828
    %v1833 = vand.u32 2147483647, %v1823
    %vm1834 = vcmp.eq.f32.partialorder %v1833, 8.507059e+37
    %v1835 = vand.u32 %v1823, 2147483648
    %v1836 = vor.u32 1.1754944e-38, %v1835
    %v1837 = vsel %vm1834, %v1836, %v1832
    %v1838 = vmul.f32 1.0, %v1837
    %v1839 = vtanh.pop %v1799
    %v1840 = vxor.u32 %v1800, 2147483648
    %v1841 = vmul.f32 %v1840, 1.442695
    %v1842 = vpow.pop %v1841
    %v1843 = vadd.f32 %v1842, 1.0
    %v1844 = vrcp.pop %v1843
    %v1845 = vmul.f32 %v1843, %v1844
    %v1846 = vsub.f32 1.0, %v1845
    %v1847 = vmul.f32 %v1844, %v1846
    %v1848 = vadd.f32 %v1844, %v1847
    %vm1849 = vweird.f32 %v1843
    %vm1850 = vweird.f32 %v1844
    %vm1851 = vmor %vm1849, %vm1850
    %v1852 = vsel %vm1851, %v1844, %v1848
    %v1853 = vand.u32 2147483647, %v1843
    %vm1854 = vcmp.eq.f32.partialorder %v1853, 8.507059e+37
    %v1855 = vand.u32 %v1843, 2147483648
    %v1856 = vor.u32 1.1754944e-38, %v1855
    %v1857 = vsel %vm1854, %v1856, %v1852
    %v1858 = vmul.f32 1.0, %v1857
    %v1859 = vmul.f32 %v1838, %v1701
    %v1860 = vmul.f32 %v1819, %v1839
    %v1861 = vadd.f32 %v1859, %v1860
    %v1862 = vtanh.pop %v1861
    %v1863 = vmul.f32 %v1858, %v1862
    %1864 = vmatpush.msra.mxu0 %v625
    %1865 = vmatpush.msra.mxu0 %v621
    %1866 = vmatpush.msra.mxu0 %v617
    %1867 = vmatpush.msra.mxu0 %v613
    %1868 = vmatpush.msra.mxu0 %v609
    %1869 = vmatpush.msra.mxu0 %v605
    %1870 = vmatpush.msra.mxu0 %v601
    %1871 = vmatpush.msra.mxu0 %v597
    %1872 = vmatpush.msra.mxu0 %v593
    %1873 = vmatpush.msra.mxu0 %v589
    %1874 = vmatpush.msra.mxu0 %v585
    %1875 = vmatpush.msra.mxu0 %v581
    %1876 = vmatpush.msra.mxu0 %v577
    %1877 = vmatpush.msra.mxu0 %v573
    %1878 = vmatpush.msra.mxu0 %v569
    %1879 = vmatpush.msra.mxu0 %v565
    %1880 = vmatmul.f32.gmra.mxu0 %v1863
    %v1881 = vpop.f32.mrf.mxu0
    %v1882 = vadd.f32 %v695, %v1881
    %1883 = vdwg.mxu0
    %1884 = vmatpush.msra.mxu0 %v689
    %1885 = vmatpush.msra.mxu0 %v685
    %1886 = vmatpush.msra.mxu0 %v681
    %1887 = vmatpush.msra.mxu0 %v677
    %1888 = vmatpush.msra.mxu0 %v673
    %1889 = vmatpush.msra.mxu0 %v669
    %1890 = vmatpush.msra.mxu0 %v665
    %1891 = vmatpush.msra.mxu0 %v661
    %1892 = vmatpush.msra.mxu0 %v657
    %1893 = vmatpush.msra.mxu0 %v653
    %1894 = vmatpush.msra.mxu0 %v649
    %1895 = vmatpush.msra.mxu0 %v645
    %1896 = vmatpush.msra.mxu0 %v641
    %1897 = vmatpush.msra.mxu0 %v637
    %1898 = vmatpush.msra.mxu0 %v633
    %1899 = vmatpush.msra.mxu0 %v629
    %1900 = vmatmul.f32.gmra.mxu0 %v1702
    %v1901 = vpop.f32.mrf.mxu0
    %v1902 = vadd.f32 %v1882, %v1901
    %1903 = vdwg.mxu0
    %1904 = vmatpush.msra.mxu0 %v626
    %1905 = vmatpush.msra.mxu0 %v622
    %1906 = vmatpush.msra.mxu0 %v618
    %1907 = vmatpush.msra.mxu0 %v614
    %1908 = vmatpush.msra.mxu0 %v610
    %1909 = vmatpush.msra.mxu0 %v606
    %1910 = vmatpush.msra.mxu0 %v602
    %1911 = vmatpush.msra.mxu0 %v598
    %1912 = vmatpush.msra.mxu0 %v594
    %1913 = vmatpush.msra.mxu0 %v590
    %1914 = vmatpush.msra.mxu0 %v586
    %1915 = vmatpush.msra.mxu0 %v582
    %1916 = vmatpush.msra.mxu0 %v578
    %1917 = vmatpush.msra.mxu0 %v574
    %1918 = vmatpush.msra.mxu0 %v570
    %1919 = vmatpush.msra.mxu0 %v566
    %1920 = vmatmul.f32.gmra.mxu0 %v1863
    %v1921 = vpop.f32.mrf.mxu0
    %v1922 = vadd.f32 %v696, %v1921
    %1923 = vdwg.mxu0
    %1924 = vmatpush.msra.mxu0 %v690
    %1925 = vmatpush.msra.mxu0 %v686
    %1926 = vmatpush.msra.mxu0 %v682
    %1927 = vmatpush.msra.mxu0 %v678
    %1928 = vmatpush.msra.mxu0 %v674
    %1929 = vmatpush.msra.mxu0 %v670
    %1930 = vmatpush.msra.mxu0 %v666
    %1931 = vmatpush.msra.mxu0 %v662
    %1932 = vmatpush.msra.mxu0 %v658
    %1933 = vmatpush.msra.mxu0 %v654
    %1934 = vmatpush.msra.mxu0 %v650
    %1935 = vmatpush.msra.mxu0 %v646
    %1936 = vmatpush.msra.mxu0 %v642
    %1937 = vmatpush.msra.mxu0 %v638
    %1938 = vmatpush.msra.mxu0 %v634
    %1939 = vmatpush.msra.mxu0 %v630
    %1940 = vmatmul.f32.gmra.mxu0 %v1702
    %v1941 = vpop.f32.mrf.mxu0
    %v1942 = vadd.f32 %v1922, %v1941
    %1943 = vdwg.mxu0
    %1944 = vmatpush.msra.mxu0 %v627
    %1945 = vmatpush.msra.mxu0 %v623
    %1946 = vmatpush.msra.mxu0 %v619
    %1947 = vmatpush.msra.mxu0 %v615
    %1948 = vmatpush.msra.mxu0 %v611
    %1949 = vmatpush.msra.mxu0 %v607
    %1950 = vmatpush.msra.mxu0 %v603
    %1951 = vmatpush.msra.mxu0 %v599
    %1952 = vmatpush.msra.mxu0 %v595
    %1953 = vmatpush.msra.mxu0 %v591
    %1954 = vmatpush.msra.mxu0 %v587
    %1955 = vmatpush.msra.mxu0 %v583
    %1956 = vmatpush.msra.mxu0 %v579
    %1957 = vmatpush.msra.mxu0 %v575
    %1958 = vmatpush.msra.mxu0 %v571
    %1959 = vmatpush.msra.mxu0 %v567
    %1960 = vmatmul.f32.gmra.mxu0 %v1863
    %v1961 = vpop.f32.mrf.mxu0
    %v1962 = vadd.f32 %v697, %v1961
    %1963 = vdwg.mxu0
    %1964 = vmatpush.msra.mxu0 %v691
    %1965 = vmatpush.msra.mxu0 %v687
    %1966 = vmatpush.msra.mxu0 %v683
    %1967 = vmatpush.msra.mxu0 %v679
    %1968 = vmatpush.msra.mxu0 %v675
    %1969 = vmatpush.msra.mxu0 %v671
    %1970 = vmatpush.msra.mxu0 %v667
    %1971 = vmatpush.msra.mxu0 %v663
    %1972 = vmatpush.msra.mxu0 %v659
    %1973 = vmatpush.msra.mxu0 %v655
    %1974 = vmatpush.msra.mxu0 %v651
    %1975 = vmatpush.msra.mxu0 %v647
    %1976 = vmatpush.msra.mxu0 %v643
    %1977 = vmatpush.msra.mxu0 %v639
    %1978 = vmatpush.msra.mxu0 %v635
    %1979 = vmatpush.msra.mxu0 %v631
    %1980 = vmatmul.f32.gmra.mxu0 %v1702
    %v1981 = vpop.f32.mrf.mxu0
    %v1982 = vadd.f32 %v1962, %v1981
    %1983 = vdwg.mxu0
    %1984 = vmatpush.msra.mxu0 %v628
    %1985 = vmatpush.msra.mxu0 %v624
    %1986 = vmatpush.msra.mxu0 %v620
    %1987 = vmatpush.msra.mxu0 %v616
    %1988 = vmatpush.msra.mxu0 %v612
    %1989 = vmatpush.msra.mxu0 %v608
    %1990 = vmatpush.msra.mxu0 %v604
    %1991 = vmatpush.msra.mxu0 %v600
    %1992 = vmatpush.msra.mxu0 %v596
    %1993 = vmatpush.msra.mxu0 %v592
    %1994 = vmatpush.msra.mxu0 %v588
    %1995 = vmatpush.msra.mxu0 %v584
    %1996 = vmatpush.msra.mxu0 %v580
    %1997 = vmatpush.msra.mxu0 %v576
    %1998 = vmatpush.msra.mxu0 %v572
    %1999 = vmatpush.msra.mxu0 %v568
    %2000 = vmatmul.f32.gmra.mxu0 %v1863
    %v2001 = vpop.f32.mrf.mxu0
    %v2002 = vadd.f32 %v698, %v2001
    %2003 = vdwg.mxu0
    %2004 = vmatpush.msra.mxu0 %v692
    %2005 = vmatpush.msra.mxu0 %v688
    %2006 = vmatpush.msra.mxu0 %v684
    %2007 = vmatpush.msra.mxu0 %v680
    %2008 = vmatpush.msra.mxu0 %v676
    %2009 = vmatpush.msra.mxu0 %v672
    %2010 = vmatpush.msra.mxu0 %v668
    %2011 = vmatpush.msra.mxu0 %v664
    %2012 = vmatpush.msra.mxu0 %v660
    %2013 = vmatpush.msra.mxu0 %v656
    %2014 = vmatpush.msra.mxu0 %v652
    %2015 = vmatpush.msra.mxu0 %v648
    %2016 = vmatpush.msra.mxu0 %v644
    %2017 = vmatpush.msra.mxu0 %v640
    %2018 = vmatpush.msra.mxu0 %v636
    %2019 = vmatpush.msra.mxu0 %v632
    %2020 = vmatmul.f32.gmra.mxu0 %v1702
    %v2021 = vpop.f32.mrf.mxu0
    %v2022 = vadd.f32 %v2002, %v2021
    %2023 = vdwg.mxu0
    %v2024 = vxor.u32 %v1902, 2147483648
    %v2025 = vmul.f32 %v2024, 1.442695
    %v2026 = vpow.pop %v2025
    %v2027 = vadd.f32 %v2026, 1.0
    %v2028 = vrcp.pop %v2027
    %v2029 = vmul.f32 %v2027, %v2028
    %v2030 = vsub.f32 1.0, %v2029
    %v2031 = vmul.f32 %v2028, %v2030
    %v2032 = vadd.f32 %v2028, %v2031
    %vm2033 = vweird.f32 %v2027
    %vm2034 = vweird.f32 %v2028
    %vm2035 = vmor %vm2033, %vm2034
    %v2036 = vsel %vm2035, %v2028, %v2032
    %v2037 = vand.u32 2147483647, %v2027
    %vm2038 = vcmp.eq.f32.partialorder %v2037, 8.507059e+37
    %v2039 = vand.u32 %v2027, 2147483648
    %v2040 = vor.u32 1.1754944e-38, %v2039
    %v2041 = vsel %vm2038, %v2040, %v2036
    %v2042 = vmul.f32 1.0, %v2041
    %v2043 = vxor.u32 %v1942, 2147483648
    %v2044 = vmul.f32 %v2043, 1.442695
    %v2045 = vpow.pop %v2044
    %v2046 = vadd.f32 %v2045, 1.0
    %v2047 = vrcp.pop %v2046
    %v2048 = vmul.f32 %v2046, %v2047
    %v2049 = vsub.f32 1.0, %v2048
    %v2050 = vmul.f32 %v2047, %v2049
    %v2051 = vadd.f32 %v2047, %v2050
    %vm2052 = vweird.f32 %v2046
    %vm2053 = vweird.f32 %v2047
    %vm2054 = vmor %vm2052, %vm2053
    %v2055 = vsel %vm2054, %v2047, %v2051
    %v2056 = vand.u32 2147483647, %v2046
    %vm2057 = vcmp.eq.f32.partialorder %v2056, 8.507059e+37
    %v2058 = vand.u32 %v2046, 2147483648
    %v2059 = vor.u32 1.1754944e-38, %v2058
    %v2060 = vsel %vm2057, %v2059, %v2055
    %v2061 = vmul.f32 1.0, %v2060
    %v2062 = vtanh.pop %v1982
    %v2063 = vxor.u32 %v2022, 2147483648
    %v2064 = vmul.f32 %v2063, 1.442695
    %v2065 = vpow.pop %v2064
    %v2066 = vadd.f32 %v2065, 1.0
    %v2067 = vrcp.pop %v2066
    %v2068 = vmul.f32 %v2066, %v2067
    %v2069 = vsub.f32 1.0, %v2068
    %v2070 = vmul.f32 %v2067, %v2069
    %v2071 = vadd.f32 %v2067, %v2070
    %vm2072 = vweird.f32 %v2066
    %vm2073 = vweird.f32 %v2067
    %vm2074 = vmor %vm2072, %vm2073
    %v2075 = vsel %vm2074, %v2067, %v2071
    %v2076 = vand.u32 2147483647, %v2066
    %vm2077 = vcmp.eq.f32.partialorder %v2076, 8.507059e+37
    %v2078 = vand.u32 %v2066, 2147483648
    %v2079 = vor.u32 1.1754944e-38, %v2078
    %v2080 = vsel %vm2077, %v2079, %v2075
    %v2081 = vmul.f32 1.0, %v2080
    %v2082 = vmul.f32 %v2061, %v1703
    %v2083 = vmul.f32 %v2042, %v2062
    %v2084 = vadd.f32 %v2082, %v2083
    %v2085 = vtanh.pop %v2084
    %v2086 = vmul.f32 %v2081, %v2085
    %v2087 = vsel %vm1709, %v1863, %v1700
    %v2088 = vsel %vm1709, %v1861, %v1701
    %v2089 = vsel %vm1709, %v2086, %v1702
    %v2090 = vsel %vm1709, %v2084, %v1703
    %vm2091 = vcmp.gt.s32.totalorder %v80, 4
    %v2092 = vsel %vm2091, 1, 0
    %2093 = vset.pattern.permute.xlu0 0
    %2094 = vperm.xlu0 %2093, %v2092
    %v2095 = vpop.permute.xlu0 %2094
    %vm2096 = vcmp.eq.s32.totalorder %v2095, 1
    %s2097 = smul.u32 4, 4
    %s2098 = smul.addr %s2097, 8
    %s2099 = scalar_lea.vmem [#allocation2], %s2098
    %v2100 = vld [vmem:[%s2099] sm:$0xff]
    %v2101 = vld [vmem:[%s2099 + $0x8] sm:$0xff]
    %v2102 = vld [vmem:[%s2099 + $0x10] sm:$0xff]
    %v2103 = vld [vmem:[%s2099 + $0x18] sm:$0xff]
    %2104 = vmatpush.msra.mxu0 %v414
    %2105 = vmatpush.msra.mxu0 %v410
    %2106 = vmatpush.msra.mxu0 %v406
    %2107 = vmatpush.msra.mxu0 %v402
    %2108 = vmatpush.msra.mxu0 %v398
    %2109 = vmatpush.msra.mxu0 %v394
    %2110 = vmatpush.msra.mxu0 %v390
    %2111 = vmatpush.msra.mxu0 %v386
    %2112 = vmatpush.msra.mxu0 %v382
    %2113 = vmatpush.msra.mxu0 %v378
    %2114 = vmatpush.msra.mxu0 %v374
    %2115 = vmatpush.msra.mxu0 %v370
    %2116 = vmatpush.msra.mxu0 %v366
    %2117 = vmatpush.msra.mxu0 %v362
    %2118 = vmatpush.msra.mxu0 %v358
    %2119 = vmatpush.msra.mxu0 %v354
    %2120 = vmatmul.f32.gmra.mxu0 %v2087
    %v2121 = vpop.f32.mrf.mxu0
    %v2122 = vadd.f32 0.0, %v2121
    %2123 = vdwg.mxu0
    %2124 = vmatpush.msra.mxu0 %v415
    %2125 = vmatpush.msra.mxu0 %v411
    %2126 = vmatpush.msra.mxu0 %v407
    %2127 = vmatpush.msra.mxu0 %v403
    %2128 = vmatpush.msra.mxu0 %v399
    %2129 = vmatpush.msra.mxu0 %v395
    %2130 = vmatpush.msra.mxu0 %v391
    %2131 = vmatpush.msra.mxu0 %v387
    %2132 = vmatpush.msra.mxu0 %v383
    %2133 = vmatpush.msra.mxu0 %v379
    %2134 = vmatpush.msra.mxu0 %v375
    %2135 = vmatpush.msra.mxu0 %v371
    %2136 = vmatpush.msra.mxu0 %v367
    %2137 = vmatpush.msra.mxu0 %v363
    %2138 = vmatpush.msra.mxu0 %v359
    %2139 = vmatpush.msra.mxu0 %v355
    %2140 = vmatmul.f32.gmra.mxu0 %v2087
    %v2141 = vpop.f32.mrf.mxu0
    %v2142 = vadd.f32 0.0, %v2141
    %2143 = vdwg.mxu0
    %2144 = vmatpush.msra.mxu0 %v416
    %2145 = vmatpush.msra.mxu0 %v412
    %2146 = vmatpush.msra.mxu0 %v408
    %2147 = vmatpush.msra.mxu0 %v404
    %2148 = vmatpush.msra.mxu0 %v400
    %2149 = vmatpush.msra.mxu0 %v396
    %2150 = vmatpush.msra.mxu0 %v392
    %2151 = vmatpush.msra.mxu0 %v388
    %2152 = vmatpush.msra.mxu0 %v384
    %2153 = vmatpush.msra.mxu0 %v380
    %2154 = vmatpush.msra.mxu0 %v376
    %2155 = vmatpush.msra.mxu0 %v372
    %2156 = vmatpush.msra.mxu0 %v368
    %2157 = vmatpush.msra.mxu0 %v364
    %2158 = vmatpush.msra.mxu0 %v360
    %2159 = vmatpush.msra.mxu0 %v356
    %2160 = vmatmul.f32.gmra.mxu0 %v2087
    %v2161 = vpop.f32.mrf.mxu0
    %v2162 = vadd.f32 0.0, %v2161
    %2163 = vdwg.mxu0
    %2164 = vmatpush.msra.mxu0 %v417
    %2165 = vmatpush.msra.mxu0 %v413
    %2166 = vmatpush.msra.mxu0 %v409
    %2167 = vmatpush.msra.mxu0 %v405
    %2168 = vmatpush.msra.mxu0 %v401
    %2169 = vmatpush.msra.mxu0 %v397
    %2170 = vmatpush.msra.mxu0 %v393
    %2171 = vmatpush.msra.mxu0 %v389
    %2172 = vmatpush.msra.mxu0 %v385
    %2173 = vmatpush.msra.mxu0 %v381
    %2174 = vmatpush.msra.mxu0 %v377
    %2175 = vmatpush.msra.mxu0 %v373
    %2176 = vmatpush.msra.mxu0 %v369
    %2177 = vmatpush.msra.mxu0 %v365
    %2178 = vmatpush.msra.mxu0 %v361
    %2179 = vmatpush.msra.mxu0 %v357
    %2180 = vmatmul.f32.gmra.mxu0 %v2087
    %v2181 = vpop.f32.mrf.mxu0
    %v2182 = vadd.f32 0.0, %v2181
    %2183 = vdwg.mxu0
    %v2184 = vadd.f32 %v2100, %v2122
    %v2185 = vadd.f32 %v2101, %v2142
    %v2186 = vadd.f32 %v2102, %v2162
    %v2187 = vadd.f32 %v2103, %v2182
    %v2188 = vxor.u32 %v2184, 2147483648
    %v2189 = vmul.f32 %v2188, 1.442695
    %v2190 = vpow.pop %v2189
    %v2191 = vadd.f32 %v2190, 1.0
    %v2192 = vrcp.pop %v2191
    %v2193 = vmul.f32 %v2191, %v2192
    %v2194 = vsub.f32 1.0, %v2193
    %v2195 = vmul.f32 %v2192, %v2194
    %v2196 = vadd.f32 %v2192, %v2195
    %vm2197 = vweird.f32 %v2191
    %vm2198 = vweird.f32 %v2192
    %vm2199 = vmor %vm2197, %vm2198
    %v2200 = vsel %vm2199, %v2192, %v2196
    %v2201 = vand.u32 2147483647, %v2191
    %vm2202 = vcmp.eq.f32.partialorder %v2201, 8.507059e+37
    %v2203 = vand.u32 %v2191, 2147483648
    %v2204 = vor.u32 1.1754944e-38, %v2203
    %v2205 = vsel %vm2202, %v2204, %v2200
    %v2206 = vmul.f32 1.0, %v2205
    %v2207 = vxor.u32 %v2185, 2147483648
    %v2208 = vmul.f32 %v2207, 1.442695
    %v2209 = vpow.pop %v2208
    %v2210 = vadd.f32 %v2209, 1.0
    %v2211 = vrcp.pop %v2210
    %v2212 = vmul.f32 %v2210, %v2211
    %v2213 = vsub.f32 1.0, %v2212
    %v2214 = vmul.f32 %v2211, %v2213
    %v2215 = vadd.f32 %v2211, %v2214
    %vm2216 = vweird.f32 %v2210
    %vm2217 = vweird.f32 %v2211
    %vm2218 = vmor %vm2216, %vm2217
    %v2219 = vsel %vm2218, %v2211, %v2215
    %v2220 = vand.u32 2147483647, %v2210
    %vm2221 = vcmp.eq.f32.partialorder %v2220, 8.507059e+37
    %v2222 = vand.u32 %v2210, 2147483648
    %v2223 = vor.u32 1.1754944e-38, %v2222
    %v2224 = vsel %vm2221, %v2223, %v2219
    %v2225 = vmul.f32 1.0, %v2224
    %v2226 = vtanh.pop %v2186
    %v2227 = vxor.u32 %v2187, 2147483648
    %v2228 = vmul.f32 %v2227, 1.442695
    %v2229 = vpow.pop %v2228
    %v2230 = vadd.f32 %v2229, 1.0
    %v2231 = vrcp.pop %v2230
    %v2232 = vmul.f32 %v2230, %v2231
    %v2233 = vsub.f32 1.0, %v2232
    %v2234 = vmul.f32 %v2231, %v2233
    %v2235 = vadd.f32 %v2231, %v2234
    %vm2236 = vweird.f32 %v2230
    %vm2237 = vweird.f32 %v2231
    %vm2238 = vmor %vm2236, %vm2237
    %v2239 = vsel %vm2238, %v2231, %v2235
    %v2240 = vand.u32 2147483647, %v2230
    %vm2241 = vcmp.eq.f32.partialorder %v2240, 8.507059e+37
    %v2242 = vand.u32 %v2230, 2147483648
    %v2243 = vor.u32 1.1754944e-38, %v2242
    %v2244 = vsel %vm2241, %v2243, %v2239
    %v2245 = vmul.f32 1.0, %v2244
    %v2246 = vmul.f32 %v2225, %v2088
    %v2247 = vmul.f32 %v2206, %v2226
    %v2248 = vadd.f32 %v2246, %v2247
    %v2249 = vtanh.pop %v2248
    %v2250 = vmul.f32 %v2245, %v2249
    %2251 = vmatpush.msra.mxu0 %v625
    %2252 = vmatpush.msra.mxu0 %v621
    %2253 = vmatpush.msra.mxu0 %v617
    %2254 = vmatpush.msra.mxu0 %v613
    %2255 = vmatpush.msra.mxu0 %v609
    %2256 = vmatpush.msra.mxu0 %v605
    %2257 = vmatpush.msra.mxu0 %v601
    %2258 = vmatpush.msra.mxu0 %v597
    %2259 = vmatpush.msra.mxu0 %v593
    %2260 = vmatpush.msra.mxu0 %v589
    %2261 = vmatpush.msra.mxu0 %v585
    %2262 = vmatpush.msra.mxu0 %v581
    %2263 = vmatpush.msra.mxu0 %v577
    %2264 = vmatpush.msra.mxu0 %v573
    %2265 = vmatpush.msra.mxu0 %v569
    %2266 = vmatpush.msra.mxu0 %v565
    %2267 = vmatmul.f32.gmra.mxu0 %v2250
    %v2268 = vpop.f32.mrf.mxu0
    %v2269 = vadd.f32 %v695, %v2268
    %2270 = vdwg.mxu0
    %2271 = vmatpush.msra.mxu0 %v689
    %2272 = vmatpush.msra.mxu0 %v685
    %2273 = vmatpush.msra.mxu0 %v681
    %2274 = vmatpush.msra.mxu0 %v677
    %2275 = vmatpush.msra.mxu0 %v673
    %2276 = vmatpush.msra.mxu0 %v669
    %2277 = vmatpush.msra.mxu0 %v665
    %2278 = vmatpush.msra.mxu0 %v661
    %2279 = vmatpush.msra.mxu0 %v657
    %2280 = vmatpush.msra.mxu0 %v653
    %2281 = vmatpush.msra.mxu0 %v649
    %2282 = vmatpush.msra.mxu0 %v645
    %2283 = vmatpush.msra.mxu0 %v641
    %2284 = vmatpush.msra.mxu0 %v637
    %2285 = vmatpush.msra.mxu0 %v633
    %2286 = vmatpush.msra.mxu0 %v629
    %2287 = vmatmul.f32.gmra.mxu0 %v2089
    %v2288 = vpop.f32.mrf.mxu0
    %v2289 = vadd.f32 %v2269, %v2288
    %2290 = vdwg.mxu0
    %2291 = vmatpush.msra.mxu0 %v626
    %2292 = vmatpush.msra.mxu0 %v622
    %2293 = vmatpush.msra.mxu0 %v618
    %2294 = vmatpush.msra.mxu0 %v614
    %2295 = vmatpush.msra.mxu0 %v610
    %2296 = vmatpush.msra.mxu0 %v606
    %2297 = vmatpush.msra.mxu0 %v602
    %2298 = vmatpush.msra.mxu0 %v598
    %2299 = vmatpush.msra.mxu0 %v594
    %2300 = vmatpush.msra.mxu0 %v590
    %2301 = vmatpush.msra.mxu0 %v586
    %2302 = vmatpush.msra.mxu0 %v582
    %2303 = vmatpush.msra.mxu0 %v578
    %2304 = vmatpush.msra.mxu0 %v574
    %2305 = vmatpush.msra.mxu0 %v570
    %2306 = vmatpush.msra.mxu0 %v566
    %2307 = vmatmul.f32.gmra.mxu0 %v2250
    %v2308 = vpop.f32.mrf.mxu0
    %v2309 = vadd.f32 %v696, %v2308
    %2310 = vdwg.mxu0
    %2311 = vmatpush.msra.mxu0 %v690
    %2312 = vmatpush.msra.mxu0 %v686
    %2313 = vmatpush.msra.mxu0 %v682
    %2314 = vmatpush.msra.mxu0 %v678
    %2315 = vmatpush.msra.mxu0 %v674
    %2316 = vmatpush.msra.mxu0 %v670
    %2317 = vmatpush.msra.mxu0 %v666
    %2318 = vmatpush.msra.mxu0 %v662
    %2319 = vmatpush.msra.mxu0 %v658
    %2320 = vmatpush.msra.mxu0 %v654
    %2321 = vmatpush.msra.mxu0 %v650
    %2322 = vmatpush.msra.mxu0 %v646
    %2323 = vmatpush.msra.mxu0 %v642
    %2324 = vmatpush.msra.mxu0 %v638
    %2325 = vmatpush.msra.mxu0 %v634
    %2326 = vmatpush.msra.mxu0 %v630
    %2327 = vmatmul.f32.gmra.mxu0 %v2089
    %v2328 = vpop.f32.mrf.mxu0
    %v2329 = vadd.f32 %v2309, %v2328
    %2330 = vdwg.mxu0
    %2331 = vmatpush.msra.mxu0 %v627
    %2332 = vmatpush.msra.mxu0 %v623
    %2333 = vmatpush.msra.mxu0 %v619
    %2334 = vmatpush.msra.mxu0 %v615
    %2335 = vmatpush.msra.mxu0 %v611
    %2336 = vmatpush.msra.mxu0 %v607
    %2337 = vmatpush.msra.mxu0 %v603
    %2338 = vmatpush.msra.mxu0 %v599
    %2339 = vmatpush.msra.mxu0 %v595
    %2340 = vmatpush.msra.mxu0 %v591
    %2341 = vmatpush.msra.mxu0 %v587
    %2342 = vmatpush.msra.mxu0 %v583
    %2343 = vmatpush.msra.mxu0 %v579
    %2344 = vmatpush.msra.mxu0 %v575
    %2345 = vmatpush.msra.mxu0 %v571
    %2346 = vmatpush.msra.mxu0 %v567
    %2347 = vmatmul.f32.gmra.mxu0 %v2250
    %v2348 = vpop.f32.mrf.mxu0
    %v2349 = vadd.f32 %v697, %v2348
    %2350 = vdwg.mxu0
    %2351 = vmatpush.msra.mxu0 %v691
    %2352 = vmatpush.msra.mxu0 %v687
    %2353 = vmatpush.msra.mxu0 %v683
    %2354 = vmatpush.msra.mxu0 %v679
    %2355 = vmatpush.msra.mxu0 %v675
    %2356 = vmatpush.msra.mxu0 %v671
    %2357 = vmatpush.msra.mxu0 %v667
    %2358 = vmatpush.msra.mxu0 %v663
    %2359 = vmatpush.msra.mxu0 %v659
    %2360 = vmatpush.msra.mxu0 %v655
    %2361 = vmatpush.msra.mxu0 %v651
    %2362 = vmatpush.msra.mxu0 %v647
    %2363 = vmatpush.msra.mxu0 %v643
    %2364 = vmatpush.msra.mxu0 %v639
    %2365 = vmatpush.msra.mxu0 %v635
    %2366 = vmatpush.msra.mxu0 %v631
    %2367 = vmatmul.f32.gmra.mxu0 %v2089
    %v2368 = vpop.f32.mrf.mxu0
    %v2369 = vadd.f32 %v2349, %v2368
    %2370 = vdwg.mxu0
    %2371 = vmatpush.msra.mxu0 %v628
    %2372 = vmatpush.msra.mxu0 %v624
    %2373 = vmatpush.msra.mxu0 %v620
    %2374 = vmatpush.msra.mxu0 %v616
    %2375 = vmatpush.msra.mxu0 %v612
    %2376 = vmatpush.msra.mxu0 %v608
    %2377 = vmatpush.msra.mxu0 %v604
    %2378 = vmatpush.msra.mxu0 %v600
    %2379 = vmatpush.msra.mxu0 %v596
    %2380 = vmatpush.msra.mxu0 %v592
    %2381 = vmatpush.msra.mxu0 %v588
    %2382 = vmatpush.msra.mxu0 %v584
    %2383 = vmatpush.msra.mxu0 %v580
    %2384 = vmatpush.msra.mxu0 %v576
    %2385 = vmatpush.msra.mxu0 %v572
    %2386 = vmatpush.msra.mxu0 %v568
    %2387 = vmatmul.f32.gmra.mxu0 %v2250
    %v2388 = vpop.f32.mrf.mxu0
    %v2389 = vadd.f32 %v698, %v2388
    %2390 = vdwg.mxu0
    %2391 = vmatpush.msra.mxu0 %v692
    %2392 = vmatpush.msra.mxu0 %v688
    %2393 = vmatpush.msra.mxu0 %v684
    %2394 = vmatpush.msra.mxu0 %v680
    %2395 = vmatpush.msra.mxu0 %v676
    %2396 = vmatpush.msra.mxu0 %v672
    %2397 = vmatpush.msra.mxu0 %v668
    %2398 = vmatpush.msra.mxu0 %v664
    %2399 = vmatpush.msra.mxu0 %v660
    %2400 = vmatpush.msra.mxu0 %v656
    %2401 = vmatpush.msra.mxu0 %v652
    %2402 = vmatpush.msra.mxu0 %v648
    %2403 = vmatpush.msra.mxu0 %v644
    %2404 = vmatpush.msra.mxu0 %v640
    %2405 = vmatpush.msra.mxu0 %v636
    %2406 = vmatpush.msra.mxu0 %v632
    %2407 = vmatmul.f32.gmra.mxu0 %v2089
    %v2408 = vpop.f32.mrf.mxu0
    %v2409 = vadd.f32 %v2389, %v2408
    %2410 = vdwg.mxu0
    %v2411 = vxor.u32 %v2289, 2147483648
    %v2412 = vmul.f32 %v2411, 1.442695
    %v2413 = vpow.pop %v2412
    %v2414 = vadd.f32 %v2413, 1.0
    %v2415 = vrcp.pop %v2414
    %v2416 = vmul.f32 %v2414, %v2415
    %v2417 = vsub.f32 1.0, %v2416
    %v2418 = vmul.f32 %v2415, %v2417
    %v2419 = vadd.f32 %v2415, %v2418
    %vm2420 = vweird.f32 %v2414
    %vm2421 = vweird.f32 %v2415
    %vm2422 = vmor %vm2420, %vm2421
    %v2423 = vsel %vm2422, %v2415, %v2419
    %v2424 = vand.u32 2147483647, %v2414
    %vm2425 = vcmp.eq.f32.partialorder %v2424, 8.507059e+37
    %v2426 = vand.u32 %v2414, 2147483648
    %v2427 = vor.u32 1.1754944e-38, %v2426
    %v2428 = vsel %vm2425, %v2427, %v2423
    %v2429 = vmul.f32 1.0, %v2428
    %v2430 = vxor.u32 %v2329, 2147483648
    %v2431 = vmul.f32 %v2430, 1.442695
    %v2432 = vpow.pop %v2431
    %v2433 = vadd.f32 %v2432, 1.0
    %v2434 = vrcp.pop %v2433
    %v2435 = vmul.f32 %v2433, %v2434
    %v2436 = vsub.f32 1.0, %v2435
    %v2437 = vmul.f32 %v2434, %v2436
    %v2438 = vadd.f32 %v2434, %v2437
    %vm2439 = vweird.f32 %v2433
    %vm2440 = vweird.f32 %v2434
    %vm2441 = vmor %vm2439, %vm2440
    %v2442 = vsel %vm2441, %v2434, %v2438
    %v2443 = vand.u32 2147483647, %v2433
    %vm2444 = vcmp.eq.f32.partialorder %v2443, 8.507059e+37
    %v2445 = vand.u32 %v2433, 2147483648
    %v2446 = vor.u32 1.1754944e-38, %v2445
    %v2447 = vsel %vm2444, %v2446, %v2442
    %v2448 = vmul.f32 1.0, %v2447
    %v2449 = vtanh.pop %v2369
    %v2450 = vxor.u32 %v2409, 2147483648
    %v2451 = vmul.f32 %v2450, 1.442695
    %v2452 = vpow.pop %v2451
    %v2453 = vadd.f32 %v2452, 1.0
    %v2454 = vrcp.pop %v2453
    %v2455 = vmul.f32 %v2453, %v2454
    %v2456 = vsub.f32 1.0, %v2455
    %v2457 = vmul.f32 %v2454, %v2456
    %v2458 = vadd.f32 %v2454, %v2457
    %vm2459 = vweird.f32 %v2453
    %vm2460 = vweird.f32 %v2454
    %vm2461 = vmor %vm2459, %vm2460
    %v2462 = vsel %vm2461, %v2454, %v2458
    %v2463 = vand.u32 2147483647, %v2453
    %vm2464 = vcmp.eq.f32.partialorder %v2463, 8.507059e+37
    %v2465 = vand.u32 %v2453, 2147483648
    %v2466 = vor.u32 1.1754944e-38, %v2465
    %v2467 = vsel %vm2464, %v2466, %v2462
    %v2468 = vmul.f32 1.0, %v2467
    %v2469 = vmul.f32 %v2448, %v2090
    %v2470 = vmul.f32 %v2429, %v2449
    %v2471 = vadd.f32 %v2469, %v2470
    %v2472 = vtanh.pop %v2471
    %v2473 = vmul.f32 %v2468, %v2472
    %v2474 = vsel %vm2096, %v2250, %v2087
    %v2475 = vsel %vm2096, %v2248, %v2088
    %v2476 = vsel %vm2096, %v2473, %v2089
    %v2477 = vsel %vm2096, %v2471, %v2090
    %vm2478 = vcmp.gt.s32.totalorder %v80, 5
    %v2479 = vsel %vm2478, 1, 0
    %2480 = vset.pattern.permute.xlu0 0
    %2481 = vperm.xlu0 %2480, %v2479
    %v2482 = vpop.permute.xlu0 %2481
    %vm2483 = vcmp.eq.s32.totalorder %v2482, 1
    %s2484 = smul.u32 5, 4
    %s2485 = smul.addr %s2484, 8
    %s2486 = scalar_lea.vmem [#allocation2], %s2485
    %v2487 = vld [vmem:[%s2486] sm:$0xff]
    %v2488 = vld [vmem:[%s2486 + $0x8] sm:$0xff]
    %v2489 = vld [vmem:[%s2486 + $0x10] sm:$0xff]
    %v2490 = vld [vmem:[%s2486 + $0x18] sm:$0xff]
    %2491 = vmatpush.msra.mxu0 %v414
    %2492 = vmatpush.msra.mxu0 %v410
    %2493 = vmatpush.msra.mxu0 %v406
    %2494 = vmatpush.msra.mxu0 %v402
    %2495 = vmatpush.msra.mxu0 %v398
    %2496 = vmatpush.msra.mxu0 %v394
    %2497 = vmatpush.msra.mxu0 %v390
    %2498 = vmatpush.msra.mxu0 %v386
    %2499 = vmatpush.msra.mxu0 %v382
    %2500 = vmatpush.msra.mxu0 %v378
    %2501 = vmatpush.msra.mxu0 %v374
    %2502 = vmatpush.msra.mxu0 %v370
    %2503 = vmatpush.msra.mxu0 %v366
    %2504 = vmatpush.msra.mxu0 %v362
    %2505 = vmatpush.msra.mxu0 %v358
    %2506 = vmatpush.msra.mxu0 %v354
    %2507 = vmatmul.f32.gmra.mxu0 %v2474
    %v2508 = vpop.f32.mrf.mxu0
    %v2509 = vadd.f32 0.0, %v2508
    %2510 = vdwg.mxu0
    %2511 = vmatpush.msra.mxu0 %v415
    %2512 = vmatpush.msra.mxu0 %v411
    %2513 = vmatpush.msra.mxu0 %v407
    %2514 = vmatpush.msra.mxu0 %v403
    %2515 = vmatpush.msra.mxu0 %v399
    %2516 = vmatpush.msra.mxu0 %v395
    %2517 = vmatpush.msra.mxu0 %v391
    %2518 = vmatpush.msra.mxu0 %v387
    %2519 = vmatpush.msra.mxu0 %v383
    %2520 = vmatpush.msra.mxu0 %v379
    %2521 = vmatpush.msra.mxu0 %v375
    %2522 = vmatpush.msra.mxu0 %v371
    %2523 = vmatpush.msra.mxu0 %v367
    %2524 = vmatpush.msra.mxu0 %v363
    %2525 = vmatpush.msra.mxu0 %v359
    %2526 = vmatpush.msra.mxu0 %v355
    %2527 = vmatmul.f32.gmra.mxu0 %v2474
    %v2528 = vpop.f32.mrf.mxu0
    %v2529 = vadd.f32 0.0, %v2528
    %2530 = vdwg.mxu0
    %2531 = vmatpush.msra.mxu0 %v416
    %2532 = vmatpush.msra.mxu0 %v412
    %2533 = vmatpush.msra.mxu0 %v408
    %2534 = vmatpush.msra.mxu0 %v404
    %2535 = vmatpush.msra.mxu0 %v400
    %2536 = vmatpush.msra.mxu0 %v396
    %2537 = vmatpush.msra.mxu0 %v392
    %2538 = vmatpush.msra.mxu0 %v388
    %2539 = vmatpush.msra.mxu0 %v384
    %2540 = vmatpush.msra.mxu0 %v380
    %2541 = vmatpush.msra.mxu0 %v376
    %2542 = vmatpush.msra.mxu0 %v372
    %2543 = vmatpush.msra.mxu0 %v368
    %2544 = vmatpush.msra.mxu0 %v364
    %2545 = vmatpush.msra.mxu0 %v360
    %2546 = vmatpush.msra.mxu0 %v356
    %2547 = vmatmul.f32.gmra.mxu0 %v2474
    %v2548 = vpop.f32.mrf.mxu0
    %v2549 = vadd.f32 0.0, %v2548
    %2550 = vdwg.mxu0
    %2551 = vmatpush.msra.mxu0 %v417
    %2552 = vmatpush.msra.mxu0 %v413
    %2553 = vmatpush.msra.mxu0 %v409
    %2554 = vmatpush.msra.mxu0 %v405
    %2555 = vmatpush.msra.mxu0 %v401
    %2556 = vmatpush.msra.mxu0 %v397
    %2557 = vmatpush.msra.mxu0 %v393
    %2558 = vmatpush.msra.mxu0 %v389
    %2559 = vmatpush.msra.mxu0 %v385
    %2560 = vmatpush.msra.mxu0 %v381
    %2561 = vmatpush.msra.mxu0 %v377
    %2562 = vmatpush.msra.mxu0 %v373
    %2563 = vmatpush.msra.mxu0 %v369
    %2564 = vmatpush.msra.mxu0 %v365
    %2565 = vmatpush.msra.mxu0 %v361
    %2566 = vmatpush.msra.mxu0 %v357
    %2567 = vmatmul.f32.gmra.mxu0 %v2474
    %v2568 = vpop.f32.mrf.mxu0
    %v2569 = vadd.f32 0.0, %v2568
    %2570 = vdwg.mxu0
    %v2571 = vadd.f32 %v2487, %v2509
    %v2572 = vadd.f32 %v2488, %v2529
    %v2573 = vadd.f32 %v2489, %v2549
    %v2574 = vadd.f32 %v2490, %v2569
    %v2575 = vxor.u32 %v2571, 2147483648
    %v2576 = vmul.f32 %v2575, 1.442695
    %v2577 = vpow.pop %v2576
    %v2578 = vadd.f32 %v2577, 1.0
    %v2579 = vrcp.pop %v2578
    %v2580 = vmul.f32 %v2578, %v2579
    %v2581 = vsub.f32 1.0, %v2580
    %v2582 = vmul.f32 %v2579, %v2581
    %v2583 = vadd.f32 %v2579, %v2582
    %vm2584 = vweird.f32 %v2578
    %vm2585 = vweird.f32 %v2579
    %vm2586 = vmor %vm2584, %vm2585
    %v2587 = vsel %vm2586, %v2579, %v2583
    %v2588 = vand.u32 2147483647, %v2578
    %vm2589 = vcmp.eq.f32.partialorder %v2588, 8.507059e+37
    %v2590 = vand.u32 %v2578, 2147483648
    %v2591 = vor.u32 1.1754944e-38, %v2590
    %v2592 = vsel %vm2589, %v2591, %v2587
    %v2593 = vmul.f32 1.0, %v2592
    %v2594 = vxor.u32 %v2572, 2147483648
    %v2595 = vmul.f32 %v2594, 1.442695
    %v2596 = vpow.pop %v2595
    %v2597 = vadd.f32 %v2596, 1.0
    %v2598 = vrcp.pop %v2597
    %v2599 = vmul.f32 %v2597, %v2598
    %v2600 = vsub.f32 1.0, %v2599
    %v2601 = vmul.f32 %v2598, %v2600
    %v2602 = vadd.f32 %v2598, %v2601
    %vm2603 = vweird.f32 %v2597
    %vm2604 = vweird.f32 %v2598
    %vm2605 = vmor %vm2603, %vm2604
    %v2606 = vsel %vm2605, %v2598, %v2602
    %v2607 = vand.u32 2147483647, %v2597
    %vm2608 = vcmp.eq.f32.partialorder %v2607, 8.507059e+37
    %v2609 = vand.u32 %v2597, 2147483648
    %v2610 = vor.u32 1.1754944e-38, %v2609
    %v2611 = vsel %vm2608, %v2610, %v2606
    %v2612 = vmul.f32 1.0, %v2611
    %v2613 = vtanh.pop %v2573
    %v2614 = vxor.u32 %v2574, 2147483648
    %v2615 = vmul.f32 %v2614, 1.442695
    %v2616 = vpow.pop %v2615
    %v2617 = vadd.f32 %v2616, 1.0
    %v2618 = vrcp.pop %v2617
    %v2619 = vmul.f32 %v2617, %v2618
    %v2620 = vsub.f32 1.0, %v2619
    %v2621 = vmul.f32 %v2618, %v2620
    %v2622 = vadd.f32 %v2618, %v2621
    %vm2623 = vweird.f32 %v2617
    %vm2624 = vweird.f32 %v2618
    %vm2625 = vmor %vm2623, %vm2624
    %v2626 = vsel %vm2625, %v2618, %v2622
    %v2627 = vand.u32 2147483647, %v2617
    %vm2628 = vcmp.eq.f32.partialorder %v2627, 8.507059e+37
    %v2629 = vand.u32 %v2617, 2147483648
    %v2630 = vor.u32 1.1754944e-38, %v2629
    %v2631 = vsel %vm2628, %v2630, %v2626
    %v2632 = vmul.f32 1.0, %v2631
    %v2633 = vmul.f32 %v2612, %v2475
    %v2634 = vmul.f32 %v2593, %v2613
    %v2635 = vadd.f32 %v2633, %v2634
    %v2636 = vtanh.pop %v2635
    %v2637 = vmul.f32 %v2632, %v2636
    %2638 = vmatpush.msra.mxu0 %v625
    %2639 = vmatpush.msra.mxu0 %v621
    %2640 = vmatpush.msra.mxu0 %v617
    %2641 = vmatpush.msra.mxu0 %v613
    %2642 = vmatpush.msra.mxu0 %v609
    %2643 = vmatpush.msra.mxu0 %v605
    %2644 = vmatpush.msra.mxu0 %v601
    %2645 = vmatpush.msra.mxu0 %v597
    %2646 = vmatpush.msra.mxu0 %v593
    %2647 = vmatpush.msra.mxu0 %v589
    %2648 = vmatpush.msra.mxu0 %v585
    %2649 = vmatpush.msra.mxu0 %v581
    %2650 = vmatpush.msra.mxu0 %v577
    %2651 = vmatpush.msra.mxu0 %v573
    %2652 = vmatpush.msra.mxu0 %v569
    %2653 = vmatpush.msra.mxu0 %v565
    %2654 = vmatmul.f32.gmra.mxu0 %v2637
    %v2655 = vpop.f32.mrf.mxu0
    %v2656 = vadd.f32 %v695, %v2655
    %2657 = vdwg.mxu0
    %2658 = vmatpush.msra.mxu0 %v689
    %2659 = vmatpush.msra.mxu0 %v685
    %2660 = vmatpush.msra.mxu0 %v681
    %2661 = vmatpush.msra.mxu0 %v677
    %2662 = vmatpush.msra.mxu0 %v673
    %2663 = vmatpush.msra.mxu0 %v669
    %2664 = vmatpush.msra.mxu0 %v665
    %2665 = vmatpush.msra.mxu0 %v661
    %2666 = vmatpush.msra.mxu0 %v657
    %2667 = vmatpush.msra.mxu0 %v653
    %2668 = vmatpush.msra.mxu0 %v649
    %2669 = vmatpush.msra.mxu0 %v645
    %2670 = vmatpush.msra.mxu0 %v641
    %2671 = vmatpush.msra.mxu0 %v637
    %2672 = vmatpush.msra.mxu0 %v633
    %2673 = vmatpush.msra.mxu0 %v629
    %2674 = vmatmul.f32.gmra.mxu0 %v2476
    %v2675 = vpop.f32.mrf.mxu0
    %v2676 = vadd.f32 %v2656, %v2675
    %2677 = vdwg.mxu0
    %2678 = vmatpush.msra.mxu0 %v626
    %2679 = vmatpush.msra.mxu0 %v622
    %2680 = vmatpush.msra.mxu0 %v618
    %2681 = vmatpush.msra.mxu0 %v614
    %2682 = vmatpush.msra.mxu0 %v610
    %2683 = vmatpush.msra.mxu0 %v606
    %2684 = vmatpush.msra.mxu0 %v602
    %2685 = vmatpush.msra.mxu0 %v598
    %2686 = vmatpush.msra.mxu0 %v594
    %2687 = vmatpush.msra.mxu0 %v590
    %2688 = vmatpush.msra.mxu0 %v586
    %2689 = vmatpush.msra.mxu0 %v582
    %2690 = vmatpush.msra.mxu0 %v578
    %2691 = vmatpush.msra.mxu0 %v574
    %2692 = vmatpush.msra.mxu0 %v570
    %2693 = vmatpush.msra.mxu0 %v566
    %2694 = vmatmul.f32.gmra.mxu0 %v2637
    %v2695 = vpop.f32.mrf.mxu0
    %v2696 = vadd.f32 %v696, %v2695
    %2697 = vdwg.mxu0
    %2698 = vmatpush.msra.mxu0 %v690
    %2699 = vmatpush.msra.mxu0 %v686
    %2700 = vmatpush.msra.mxu0 %v682
    %2701 = vmatpush.msra.mxu0 %v678
    %2702 = vmatpush.msra.mxu0 %v674
    %2703 = vmatpush.msra.mxu0 %v670
    %2704 = vmatpush.msra.mxu0 %v666
    %2705 = vmatpush.msra.mxu0 %v662
    %2706 = vmatpush.msra.mxu0 %v658
    %2707 = vmatpush.msra.mxu0 %v654
    %2708 = vmatpush.msra.mxu0 %v650
    %2709 = vmatpush.msra.mxu0 %v646
    %2710 = vmatpush.msra.mxu0 %v642
    %2711 = vmatpush.msra.mxu0 %v638
    %2712 = vmatpush.msra.mxu0 %v634
    %2713 = vmatpush.msra.mxu0 %v630
    %2714 = vmatmul.f32.gmra.mxu0 %v2476
    %v2715 = vpop.f32.mrf.mxu0
    %v2716 = vadd.f32 %v2696, %v2715
    %2717 = vdwg.mxu0
    %2718 = vmatpush.msra.mxu0 %v627
    %2719 = vmatpush.msra.mxu0 %v623
    %2720 = vmatpush.msra.mxu0 %v619
    %2721 = vmatpush.msra.mxu0 %v615
    %2722 = vmatpush.msra.mxu0 %v611
    %2723 = vmatpush.msra.mxu0 %v607
    %2724 = vmatpush.msra.mxu0 %v603
    %2725 = vmatpush.msra.mxu0 %v599
    %2726 = vmatpush.msra.mxu0 %v595
    %2727 = vmatpush.msra.mxu0 %v591
    %2728 = vmatpush.msra.mxu0 %v587
    %2729 = vmatpush.msra.mxu0 %v583
    %2730 = vmatpush.msra.mxu0 %v579
    %2731 = vmatpush.msra.mxu0 %v575
    %2732 = vmatpush.msra.mxu0 %v571
    %2733 = vmatpush.msra.mxu0 %v567
    %2734 = vmatmul.f32.gmra.mxu0 %v2637
    %v2735 = vpop.f32.mrf.mxu0
    %v2736 = vadd.f32 %v697, %v2735
    %2737 = vdwg.mxu0
    %2738 = vmatpush.msra.mxu0 %v691
    %2739 = vmatpush.msra.mxu0 %v687
    %2740 = vmatpush.msra.mxu0 %v683
    %2741 = vmatpush.msra.mxu0 %v679
    %2742 = vmatpush.msra.mxu0 %v675
    %2743 = vmatpush.msra.mxu0 %v671
    %2744 = vmatpush.msra.mxu0 %v667
    %2745 = vmatpush.msra.mxu0 %v663
    %2746 = vmatpush.msra.mxu0 %v659
    %2747 = vmatpush.msra.mxu0 %v655
    %2748 = vmatpush.msra.mxu0 %v651
    %2749 = vmatpush.msra.mxu0 %v647
    %2750 = vmatpush.msra.mxu0 %v643
    %2751 = vmatpush.msra.mxu0 %v639
    %2752 = vmatpush.msra.mxu0 %v635
    %2753 = vmatpush.msra.mxu0 %v631
    %2754 = vmatmul.f32.gmra.mxu0 %v2476
    %v2755 = vpop.f32.mrf.mxu0
    %v2756 = vadd.f32 %v2736, %v2755
    %2757 = vdwg.mxu0
    %2758 = vmatpush.msra.mxu0 %v628
    %2759 = vmatpush.msra.mxu0 %v624
    %2760 = vmatpush.msra.mxu0 %v620
    %2761 = vmatpush.msra.mxu0 %v616
    %2762 = vmatpush.msra.mxu0 %v612
    %2763 = vmatpush.msra.mxu0 %v608
    %2764 = vmatpush.msra.mxu0 %v604
    %2765 = vmatpush.msra.mxu0 %v600
    %2766 = vmatpush.msra.mxu0 %v596
    %2767 = vmatpush.msra.mxu0 %v592
    %2768 = vmatpush.msra.mxu0 %v588
    %2769 = vmatpush.msra.mxu0 %v584
    %2770 = vmatpush.msra.mxu0 %v580
    %2771 = vmatpush.msra.mxu0 %v576
    %2772 = vmatpush.msra.mxu0 %v572
    %2773 = vmatpush.msra.mxu0 %v568
    %2774 = vmatmul.f32.gmra.mxu0 %v2637
    %v2775 = vpop.f32.mrf.mxu0
    %v2776 = vadd.f32 %v698, %v2775
    %2777 = vdwg.mxu0
    %2778 = vmatpush.msra.mxu0 %v692
    %2779 = vmatpush.msra.mxu0 %v688
    %2780 = vmatpush.msra.mxu0 %v684
    %2781 = vmatpush.msra.mxu0 %v680
    %2782 = vmatpush.msra.mxu0 %v676
    %2783 = vmatpush.msra.mxu0 %v672
    %2784 = vmatpush.msra.mxu0 %v668
    %2785 = vmatpush.msra.mxu0 %v664
    %2786 = vmatpush.msra.mxu0 %v660
    %2787 = vmatpush.msra.mxu0 %v656
    %2788 = vmatpush.msra.mxu0 %v652
    %2789 = vmatpush.msra.mxu0 %v648
    %2790 = vmatpush.msra.mxu0 %v644
    %2791 = vmatpush.msra.mxu0 %v640
    %2792 = vmatpush.msra.mxu0 %v636
    %2793 = vmatpush.msra.mxu0 %v632
    %2794 = vmatmul.f32.gmra.mxu0 %v2476
    %v2795 = vpop.f32.mrf.mxu0
    %v2796 = vadd.f32 %v2776, %v2795
    %2797 = vdwg.mxu0
    %v2798 = vxor.u32 %v2676, 2147483648
    %v2799 = vmul.f32 %v2798, 1.442695
    %v2800 = vpow.pop %v2799
    %v2801 = vadd.f32 %v2800, 1.0
    %v2802 = vrcp.pop %v2801
    %v2803 = vmul.f32 %v2801, %v2802
    %v2804 = vsub.f32 1.0, %v2803
    %v2805 = vmul.f32 %v2802, %v2804
    %v2806 = vadd.f32 %v2802, %v2805
    %vm2807 = vweird.f32 %v2801
    %vm2808 = vweird.f32 %v2802
    %vm2809 = vmor %vm2807, %vm2808
    %v2810 = vsel %vm2809, %v2802, %v2806
    %v2811 = vand.u32 2147483647, %v2801
    %vm2812 = vcmp.eq.f32.partialorder %v2811, 8.507059e+37
    %v2813 = vand.u32 %v2801, 2147483648
    %v2814 = vor.u32 1.1754944e-38, %v2813
    %v2815 = vsel %vm2812, %v2814, %v2810
    %v2816 = vmul.f32 1.0, %v2815
    %v2817 = vxor.u32 %v2716, 2147483648
    %v2818 = vmul.f32 %v2817, 1.442695
    %v2819 = vpow.pop %v2818
    %v2820 = vadd.f32 %v2819, 1.0
    %v2821 = vrcp.pop %v2820
    %v2822 = vmul.f32 %v2820, %v2821
    %v2823 = vsub.f32 1.0, %v2822
    %v2824 = vmul.f32 %v2821, %v2823
    %v2825 = vadd.f32 %v2821, %v2824
    %vm2826 = vweird.f32 %v2820
    %vm2827 = vweird.f32 %v2821
    %vm2828 = vmor %vm2826, %vm2827
    %v2829 = vsel %vm2828, %v2821, %v2825
    %v2830 = vand.u32 2147483647, %v2820
    %vm2831 = vcmp.eq.f32.partialorder %v2830, 8.507059e+37
    %v2832 = vand.u32 %v2820, 2147483648
    %v2833 = vor.u32 1.1754944e-38, %v2832
    %v2834 = vsel %vm2831, %v2833, %v2829
    %v2835 = vmul.f32 1.0, %v2834
    %v2836 = vtanh.pop %v2756
    %v2837 = vxor.u32 %v2796, 2147483648
    %v2838 = vmul.f32 %v2837, 1.442695
    %v2839 = vpow.pop %v2838
    %v2840 = vadd.f32 %v2839, 1.0
    %v2841 = vrcp.pop %v2840
    %v2842 = vmul.f32 %v2840, %v2841
    %v2843 = vsub.f32 1.0, %v2842
    %v2844 = vmul.f32 %v2841, %v2843
    %v2845 = vadd.f32 %v2841, %v2844
    %vm2846 = vweird.f32 %v2840
    %vm2847 = vweird.f32 %v2841
    %vm2848 = vmor %vm2846, %vm2847
    %v2849 = vsel %vm2848, %v2841, %v2845
    %v2850 = vand.u32 2147483647, %v2840
    %vm2851 = vcmp.eq.f32.partialorder %v2850, 8.507059e+37
    %v2852 = vand.u32 %v2840, 2147483648
    %v2853 = vor.u32 1.1754944e-38, %v2852
    %v2854 = vsel %vm2851, %v2853, %v2849
    %v2855 = vmul.f32 1.0, %v2854
    %v2856 = vmul.f32 %v2835, %v2477
    %v2857 = vmul.f32 %v2816, %v2836
    %v2858 = vadd.f32 %v2856, %v2857
    %v2859 = vtanh.pop %v2858
    %v2860 = vmul.f32 %v2855, %v2859
    %v2861 = vsel %vm2483, %v2637, %v2474
    %v2862 = vsel %vm2483, %v2635, %v2475
    %v2863 = vsel %vm2483, %v2860, %v2476
    %v2864 = vsel %vm2483, %v2858, %v2477
    %vm2865 = vcmp.gt.s32.totalorder %v80, 6
    %v2866 = vsel %vm2865, 1, 0
    %2867 = vset.pattern.permute.xlu0 0
    %2868 = vperm.xlu0 %2867, %v2866
    %v2869 = vpop.permute.xlu0 %2868
    %vm2870 = vcmp.eq.s32.totalorder %v2869, 1
    %s2871 = smul.u32 6, 4
    %s2872 = smul.addr %s2871, 8
    %s2873 = scalar_lea.vmem [#allocation2], %s2872
    %v2874 = vld [vmem:[%s2873] sm:$0xff]
    %v2875 = vld [vmem:[%s2873 + $0x8] sm:$0xff]
    %v2876 = vld [vmem:[%s2873 + $0x10] sm:$0xff]
    %v2877 = vld [vmem:[%s2873 + $0x18] sm:$0xff]
    %2878 = vmatpush.msra.mxu0 %v414
    %2879 = vmatpush.msra.mxu0 %v410
    %2880 = vmatpush.msra.mxu0 %v406
    %2881 = vmatpush.msra.mxu0 %v402
    %2882 = vmatpush.msra.mxu0 %v398
    %2883 = vmatpush.msra.mxu0 %v394
    %2884 = vmatpush.msra.mxu0 %v390
    %2885 = vmatpush.msra.mxu0 %v386
    %2886 = vmatpush.msra.mxu0 %v382
    %2887 = vmatpush.msra.mxu0 %v378
    %2888 = vmatpush.msra.mxu0 %v374
    %2889 = vmatpush.msra.mxu0 %v370
    %2890 = vmatpush.msra.mxu0 %v366
    %2891 = vmatpush.msra.mxu0 %v362
    %2892 = vmatpush.msra.mxu0 %v358
    %2893 = vmatpush.msra.mxu0 %v354
    %2894 = vmatmul.f32.gmra.mxu0 %v2861
    %v2895 = vpop.f32.mrf.mxu0
    %v2896 = vadd.f32 0.0, %v2895
    %2897 = vdwg.mxu0
    %2898 = vmatpush.msra.mxu0 %v415
    %2899 = vmatpush.msra.mxu0 %v411
    %2900 = vmatpush.msra.mxu0 %v407
    %2901 = vmatpush.msra.mxu0 %v403
    %2902 = vmatpush.msra.mxu0 %v399
    %2903 = vmatpush.msra.mxu0 %v395
    %2904 = vmatpush.msra.mxu0 %v391
    %2905 = vmatpush.msra.mxu0 %v387
    %2906 = vmatpush.msra.mxu0 %v383
    %2907 = vmatpush.msra.mxu0 %v379
    %2908 = vmatpush.msra.mxu0 %v375
    %2909 = vmatpush.msra.mxu0 %v371
    %2910 = vmatpush.msra.mxu0 %v367
    %2911 = vmatpush.msra.mxu0 %v363
    %2912 = vmatpush.msra.mxu0 %v359
    %2913 = vmatpush.msra.mxu0 %v355
    %2914 = vmatmul.f32.gmra.mxu0 %v2861
    %v2915 = vpop.f32.mrf.mxu0
    %v2916 = vadd.f32 0.0, %v2915
    %2917 = vdwg.mxu0
    %2918 = vmatpush.msra.mxu0 %v416
    %2919 = vmatpush.msra.mxu0 %v412
    %2920 = vmatpush.msra.mxu0 %v408
    %2921 = vmatpush.msra.mxu0 %v404
    %2922 = vmatpush.msra.mxu0 %v400
    %2923 = vmatpush.msra.mxu0 %v396
    %2924 = vmatpush.msra.mxu0 %v392
    %2925 = vmatpush.msra.mxu0 %v388
    %2926 = vmatpush.msra.mxu0 %v384
    %2927 = vmatpush.msra.mxu0 %v380
    %2928 = vmatpush.msra.mxu0 %v376
    %2929 = vmatpush.msra.mxu0 %v372
    %2930 = vmatpush.msra.mxu0 %v368
    %2931 = vmatpush.msra.mxu0 %v364
    %2932 = vmatpush.msra.mxu0 %v360
    %2933 = vmatpush.msra.mxu0 %v356
    %2934 = vmatmul.f32.gmra.mxu0 %v2861
    %v2935 = vpop.f32.mrf.mxu0
    %v2936 = vadd.f32 0.0, %v2935
    %2937 = vdwg.mxu0
    %2938 = vmatpush.msra.mxu0 %v417
    %2939 = vmatpush.msra.mxu0 %v413
    %2940 = vmatpush.msra.mxu0 %v409
    %2941 = vmatpush.msra.mxu0 %v405
    %2942 = vmatpush.msra.mxu0 %v401
    %2943 = vmatpush.msra.mxu0 %v397
    %2944 = vmatpush.msra.mxu0 %v393
    %2945 = vmatpush.msra.mxu0 %v389
    %2946 = vmatpush.msra.mxu0 %v385
    %2947 = vmatpush.msra.mxu0 %v381
    %2948 = vmatpush.msra.mxu0 %v377
    %2949 = vmatpush.msra.mxu0 %v373
    %2950 = vmatpush.msra.mxu0 %v369
    %2951 = vmatpush.msra.mxu0 %v365
    %2952 = vmatpush.msra.mxu0 %v361
    %2953 = vmatpush.msra.mxu0 %v357
    %2954 = vmatmul.f32.gmra.mxu0 %v2861
    %v2955 = vpop.f32.mrf.mxu0
    %v2956 = vadd.f32 0.0, %v2955
    %2957 = vdwg.mxu0
    %v2958 = vadd.f32 %v2874, %v2896
    %v2959 = vadd.f32 %v2875, %v2916
    %v2960 = vadd.f32 %v2876, %v2936
    %v2961 = vadd.f32 %v2877, %v2956
    %v2962 = vxor.u32 %v2958, 2147483648
    %v2963 = vmul.f32 %v2962, 1.442695
    %v2964 = vpow.pop %v2963
    %v2965 = vadd.f32 %v2964, 1.0
    %v2966 = vrcp.pop %v2965
    %v2967 = vmul.f32 %v2965, %v2966
    %v2968 = vsub.f32 1.0, %v2967
    %v2969 = vmul.f32 %v2966, %v2968
    %v2970 = vadd.f32 %v2966, %v2969
    %vm2971 = vweird.f32 %v2965
    %vm2972 = vweird.f32 %v2966
    %vm2973 = vmor %vm2971, %vm2972
    %v2974 = vsel %vm2973, %v2966, %v2970
    %v2975 = vand.u32 2147483647, %v2965
    %vm2976 = vcmp.eq.f32.partialorder %v2975, 8.507059e+37
    %v2977 = vand.u32 %v2965, 2147483648
    %v2978 = vor.u32 1.1754944e-38, %v2977
    %v2979 = vsel %vm2976, %v2978, %v2974
    %v2980 = vmul.f32 1.0, %v2979
    %v2981 = vxor.u32 %v2959, 2147483648
    %v2982 = vmul.f32 %v2981, 1.442695
    %v2983 = vpow.pop %v2982
    %v2984 = vadd.f32 %v2983, 1.0
    %v2985 = vrcp.pop %v2984
    %v2986 = vmul.f32 %v2984, %v2985
    %v2987 = vsub.f32 1.0, %v2986
    %v2988 = vmul.f32 %v2985, %v2987
    %v2989 = vadd.f32 %v2985, %v2988
    %vm2990 = vweird.f32 %v2984
    %vm2991 = vweird.f32 %v2985
    %vm2992 = vmor %vm2990, %vm2991
    %v2993 = vsel %vm2992, %v2985, %v2989
    %v2994 = vand.u32 2147483647, %v2984
    %vm2995 = vcmp.eq.f32.partialorder %v2994, 8.507059e+37
    %v2996 = vand.u32 %v2984, 2147483648
    %v2997 = vor.u32 1.1754944e-38, %v2996
    %v2998 = vsel %vm2995, %v2997, %v2993
    %v2999 = vmul.f32 1.0, %v2998
    %v3000 = vtanh.pop %v2960
    %v3001 = vxor.u32 %v2961, 2147483648
    %v3002 = vmul.f32 %v3001, 1.442695
    %v3003 = vpow.pop %v3002
    %v3004 = vadd.f32 %v3003, 1.0
    %v3005 = vrcp.pop %v3004
    %v3006 = vmul.f32 %v3004, %v3005
    %v3007 = vsub.f32 1.0, %v3006
    %v3008 = vmul.f32 %v3005, %v3007
    %v3009 = vadd.f32 %v3005, %v3008
    %vm3010 = vweird.f32 %v3004
    %vm3011 = vweird.f32 %v3005
    %vm3012 = vmor %vm3010, %vm3011
    %v3013 = vsel %vm3012, %v3005, %v3009
    %v3014 = vand.u32 2147483647, %v3004
    %vm3015 = vcmp.eq.f32.partialorder %v3014, 8.507059e+37
    %v3016 = vand.u32 %v3004, 2147483648
    %v3017 = vor.u32 1.1754944e-38, %v3016
    %v3018 = vsel %vm3015, %v3017, %v3013
    %v3019 = vmul.f32 1.0, %v3018
    %v3020 = vmul.f32 %v2999, %v2862
    %v3021 = vmul.f32 %v2980, %v3000
    %v3022 = vadd.f32 %v3020, %v3021
    %v3023 = vtanh.pop %v3022
    %v3024 = vmul.f32 %v3019, %v3023
    %3025 = vmatpush.msra.mxu0 %v625
    %3026 = vmatpush.msra.mxu0 %v621
    %3027 = vmatpush.msra.mxu0 %v617
    %3028 = vmatpush.msra.mxu0 %v613
    %3029 = vmatpush.msra.mxu0 %v609
    %3030 = vmatpush.msra.mxu0 %v605
    %3031 = vmatpush.msra.mxu0 %v601
    %3032 = vmatpush.msra.mxu0 %v597
    %3033 = vmatpush.msra.mxu0 %v593
    %3034 = vmatpush.msra.mxu0 %v589
    %3035 = vmatpush.msra.mxu0 %v585
    %3036 = vmatpush.msra.mxu0 %v581
    %3037 = vmatpush.msra.mxu0 %v577
    %3038 = vmatpush.msra.mxu0 %v573
    %3039 = vmatpush.msra.mxu0 %v569
    %3040 = vmatpush.msra.mxu0 %v565
    %3041 = vmatmul.f32.gmra.mxu0 %v3024
    %v3042 = vpop.f32.mrf.mxu0
    %v3043 = vadd.f32 %v695, %v3042
    %3044 = vdwg.mxu0
    %3045 = vmatpush.msra.mxu0 %v689
    %3046 = vmatpush.msra.mxu0 %v685
    %3047 = vmatpush.msra.mxu0 %v681
    %3048 = vmatpush.msra.mxu0 %v677
    %3049 = vmatpush.msra.mxu0 %v673
    %3050 = vmatpush.msra.mxu0 %v669
    %3051 = vmatpush.msra.mxu0 %v665
    %3052 = vmatpush.msra.mxu0 %v661
    %3053 = vmatpush.msra.mxu0 %v657
    %3054 = vmatpush.msra.mxu0 %v653
    %3055 = vmatpush.msra.mxu0 %v649
    %3056 = vmatpush.msra.mxu0 %v645
    %3057 = vmatpush.msra.mxu0 %v641
    %3058 = vmatpush.msra.mxu0 %v637
    %3059 = vmatpush.msra.mxu0 %v633
    %3060 = vmatpush.msra.mxu0 %v629
    %3061 = vmatmul.f32.gmra.mxu0 %v2863
    %v3062 = vpop.f32.mrf.mxu0
    %v3063 = vadd.f32 %v3043, %v3062
    %3064 = vdwg.mxu0
    %3065 = vmatpush.msra.mxu0 %v626
    %3066 = vmatpush.msra.mxu0 %v622
    %3067 = vmatpush.msra.mxu0 %v618
    %3068 = vmatpush.msra.mxu0 %v614
    %3069 = vmatpush.msra.mxu0 %v610
    %3070 = vmatpush.msra.mxu0 %v606
    %3071 = vmatpush.msra.mxu0 %v602
    %3072 = vmatpush.msra.mxu0 %v598
    %3073 = vmatpush.msra.mxu0 %v594
    %3074 = vmatpush.msra.mxu0 %v590
    %3075 = vmatpush.msra.mxu0 %v586
    %3076 = vmatpush.msra.mxu0 %v582
    %3077 = vmatpush.msra.mxu0 %v578
    %3078 = vmatpush.msra.mxu0 %v574
    %3079 = vmatpush.msra.mxu0 %v570
    %3080 = vmatpush.msra.mxu0 %v566
    %3081 = vmatmul.f32.gmra.mxu0 %v3024
    %v3082 = vpop.f32.mrf.mxu0
    %v3083 = vadd.f32 %v696, %v3082
    %3084 = vdwg.mxu0
    %3085 = vmatpush.msra.mxu0 %v690
    %3086 = vmatpush.msra.mxu0 %v686
    %3087 = vmatpush.msra.mxu0 %v682
    %3088 = vmatpush.msra.mxu0 %v678
    %3089 = vmatpush.msra.mxu0 %v674
    %3090 = vmatpush.msra.mxu0 %v670
    %3091 = vmatpush.msra.mxu0 %v666
    %3092 = vmatpush.msra.mxu0 %v662
    %3093 = vmatpush.msra.mxu0 %v658
    %3094 = vmatpush.msra.mxu0 %v654
    %3095 = vmatpush.msra.mxu0 %v650
    %3096 = vmatpush.msra.mxu0 %v646
    %3097 = vmatpush.msra.mxu0 %v642
    %3098 = vmatpush.msra.mxu0 %v638
    %3099 = vmatpush.msra.mxu0 %v634
    %3100 = vmatpush.msra.mxu0 %v630
    %3101 = vmatmul.f32.gmra.mxu0 %v2863
    %v3102 = vpop.f32.mrf.mxu0
    %v3103 = vadd.f32 %v3083, %v3102
    %3104 = vdwg.mxu0
    %3105 = vmatpush.msra.mxu0 %v627
    %3106 = vmatpush.msra.mxu0 %v623
    %3107 = vmatpush.msra.mxu0 %v619
    %3108 = vmatpush.msra.mxu0 %v615
    %3109 = vmatpush.msra.mxu0 %v611
    %3110 = vmatpush.msra.mxu0 %v607
    %3111 = vmatpush.msra.mxu0 %v603
    %3112 = vmatpush.msra.mxu0 %v599
    %3113 = vmatpush.msra.mxu0 %v595
    %3114 = vmatpush.msra.mxu0 %v591
    %3115 = vmatpush.msra.mxu0 %v587
    %3116 = vmatpush.msra.mxu0 %v583
    %3117 = vmatpush.msra.mxu0 %v579
    %3118 = vmatpush.msra.mxu0 %v575
    %3119 = vmatpush.msra.mxu0 %v571
    %3120 = vmatpush.msra.mxu0 %v567
    %3121 = vmatmul.f32.gmra.mxu0 %v3024
    %v3122 = vpop.f32.mrf.mxu0
    %v3123 = vadd.f32 %v697, %v3122
    %3124 = vdwg.mxu0
    %3125 = vmatpush.msra.mxu0 %v691
    %3126 = vmatpush.msra.mxu0 %v687
    %3127 = vmatpush.msra.mxu0 %v683
    %3128 = vmatpush.msra.mxu0 %v679
    %3129 = vmatpush.msra.mxu0 %v675
    %3130 = vmatpush.msra.mxu0 %v671
    %3131 = vmatpush.msra.mxu0 %v667
    %3132 = vmatpush.msra.mxu0 %v663
    %3133 = vmatpush.msra.mxu0 %v659
    %3134 = vmatpush.msra.mxu0 %v655
    %3135 = vmatpush.msra.mxu0 %v651
    %3136 = vmatpush.msra.mxu0 %v647
    %3137 = vmatpush.msra.mxu0 %v643
    %3138 = vmatpush.msra.mxu0 %v639
    %3139 = vmatpush.msra.mxu0 %v635
    %3140 = vmatpush.msra.mxu0 %v631
    %3141 = vmatmul.f32.gmra.mxu0 %v2863
    %v3142 = vpop.f32.mrf.mxu0
    %v3143 = vadd.f32 %v3123, %v3142
    %3144 = vdwg.mxu0
    %3145 = vmatpush.msra.mxu0 %v628
    %3146 = vmatpush.msra.mxu0 %v624
    %3147 = vmatpush.msra.mxu0 %v620
    %3148 = vmatpush.msra.mxu0 %v616
    %3149 = vmatpush.msra.mxu0 %v612
    %3150 = vmatpush.msra.mxu0 %v608
    %3151 = vmatpush.msra.mxu0 %v604
    %3152 = vmatpush.msra.mxu0 %v600
    %3153 = vmatpush.msra.mxu0 %v596
    %3154 = vmatpush.msra.mxu0 %v592
    %3155 = vmatpush.msra.mxu0 %v588
    %3156 = vmatpush.msra.mxu0 %v584
    %3157 = vmatpush.msra.mxu0 %v580
    %3158 = vmatpush.msra.mxu0 %v576
    %3159 = vmatpush.msra.mxu0 %v572
    %3160 = vmatpush.msra.mxu0 %v568
    %3161 = vmatmul.f32.gmra.mxu0 %v3024
    %v3162 = vpop.f32.mrf.mxu0
    %v3163 = vadd.f32 %v698, %v3162
    %3164 = vdwg.mxu0
    %3165 = vmatpush.msra.mxu0 %v692
    %3166 = vmatpush.msra.mxu0 %v688
    %3167 = vmatpush.msra.mxu0 %v684
    %3168 = vmatpush.msra.mxu0 %v680
    %3169 = vmatpush.msra.mxu0 %v676
    %3170 = vmatpush.msra.mxu0 %v672
    %3171 = vmatpush.msra.mxu0 %v668
    %3172 = vmatpush.msra.mxu0 %v664
    %3173 = vmatpush.msra.mxu0 %v660
    %3174 = vmatpush.msra.mxu0 %v656
    %3175 = vmatpush.msra.mxu0 %v652
    %3176 = vmatpush.msra.mxu0 %v648
    %3177 = vmatpush.msra.mxu0 %v644
    %3178 = vmatpush.msra.mxu0 %v640
    %3179 = vmatpush.msra.mxu0 %v636
    %3180 = vmatpush.msra.mxu0 %v632
    %3181 = vmatmul.f32.gmra.mxu0 %v2863
    %v3182 = vpop.f32.mrf.mxu0
    %v3183 = vadd.f32 %v3163, %v3182
    %3184 = vdwg.mxu0
    %v3185 = vxor.u32 %v3063, 2147483648
    %v3186 = vmul.f32 %v3185, 1.442695
    %v3187 = vpow.pop %v3186
    %v3188 = vadd.f32 %v3187, 1.0
    %v3189 = vrcp.pop %v3188
    %v3190 = vmul.f32 %v3188, %v3189
    %v3191 = vsub.f32 1.0, %v3190
    %v3192 = vmul.f32 %v3189, %v3191
    %v3193 = vadd.f32 %v3189, %v3192
    %vm3194 = vweird.f32 %v3188
    %vm3195 = vweird.f32 %v3189
    %vm3196 = vmor %vm3194, %vm3195
    %v3197 = vsel %vm3196, %v3189, %v3193
    %v3198 = vand.u32 2147483647, %v3188
    %vm3199 = vcmp.eq.f32.partialorder %v3198, 8.507059e+37
    %v3200 = vand.u32 %v3188, 2147483648
    %v3201 = vor.u32 1.1754944e-38, %v3200
    %v3202 = vsel %vm3199, %v3201, %v3197
    %v3203 = vmul.f32 1.0, %v3202
    %v3204 = vxor.u32 %v3103, 2147483648
    %v3205 = vmul.f32 %v3204, 1.442695
    %v3206 = vpow.pop %v3205
    %v3207 = vadd.f32 %v3206, 1.0
    %v3208 = vrcp.pop %v3207
    %v3209 = vmul.f32 %v3207, %v3208
    %v3210 = vsub.f32 1.0, %v3209
    %v3211 = vmul.f32 %v3208, %v3210
    %v3212 = vadd.f32 %v3208, %v3211
    %vm3213 = vweird.f32 %v3207
    %vm3214 = vweird.f32 %v3208
    %vm3215 = vmor %vm3213, %vm3214
    %v3216 = vsel %vm3215, %v3208, %v3212
    %v3217 = vand.u32 2147483647, %v3207
    %vm3218 = vcmp.eq.f32.partialorder %v3217, 8.507059e+37
    %v3219 = vand.u32 %v3207, 2147483648
    %v3220 = vor.u32 1.1754944e-38, %v3219
    %v3221 = vsel %vm3218, %v3220, %v3216
    %v3222 = vmul.f32 1.0, %v3221
    %v3223 = vtanh.pop %v3143
    %v3224 = vxor.u32 %v3183, 2147483648
    %v3225 = vmul.f32 %v3224, 1.442695
    %v3226 = vpow.pop %v3225
    %v3227 = vadd.f32 %v3226, 1.0
    %v3228 = vrcp.pop %v3227
    %v3229 = vmul.f32 %v3227, %v3228
    %v3230 = vsub.f32 1.0, %v3229
    %v3231 = vmul.f32 %v3228, %v3230
    %v3232 = vadd.f32 %v3228, %v3231
    %vm3233 = vweird.f32 %v3227
    %vm3234 = vweird.f32 %v3228
    %vm3235 = vmor %vm3233, %vm3234
    %v3236 = vsel %vm3235, %v3228, %v3232
    %v3237 = vand.u32 2147483647, %v3227
    %vm3238 = vcmp.eq.f32.partialorder %v3237, 8.507059e+37
    %v3239 = vand.u32 %v3227, 2147483648
    %v3240 = vor.u32 1.1754944e-38, %v3239
    %v3241 = vsel %vm3238, %v3240, %v3236
    %v3242 = vmul.f32 1.0, %v3241
    %v3243 = vmul.f32 %v3222, %v2864
    %v3244 = vmul.f32 %v3203, %v3223
    %v3245 = vadd.f32 %v3243, %v3244
    %v3246 = vtanh.pop %v3245
    %v3247 = vmul.f32 %v3242, %v3246
    %v3248 = vsel %vm2870, %v3024, %v2861
    %v3249 = vsel %vm2870, %v3022, %v2862
    %v3250 = vsel %vm2870, %v3247, %v2863
    %v3251 = vsel %vm2870, %v3245, %v2864
    %vm3252 = vcmp.gt.s32.totalorder %v80, 7
    %v3253 = vsel %vm3252, 1, 0
    %3254 = vset.pattern.permute.xlu0 0
    %3255 = vperm.xlu0 %3254, %v3253
    %v3256 = vpop.permute.xlu0 %3255
    %vm3257 = vcmp.eq.s32.totalorder %v3256, 1
    %s3258 = smul.u32 7, 4
    %s3259 = smul.addr %s3258, 8
    %s3260 = scalar_lea.vmem [#allocation2], %s3259
    %v3261 = vld [vmem:[%s3260] sm:$0xff]
    %v3262 = vld [vmem:[%s3260 + $0x8] sm:$0xff]
    %v3263 = vld [vmem:[%s3260 + $0x10] sm:$0xff]
    %v3264 = vld [vmem:[%s3260 + $0x18] sm:$0xff]
    %3265 = vmatpush.msra.mxu0 %v414
    %3266 = vmatpush.msra.mxu0 %v410
    %3267 = vmatpush.msra.mxu0 %v406
    %3268 = vmatpush.msra.mxu0 %v402
    %3269 = vmatpush.msra.mxu0 %v398
    %3270 = vmatpush.msra.mxu0 %v394
    %3271 = vmatpush.msra.mxu0 %v390
    %3272 = vmatpush.msra.mxu0 %v386
    %3273 = vmatpush.msra.mxu0 %v382
    %3274 = vmatpush.msra.mxu0 %v378
    %3275 = vmatpush.msra.mxu0 %v374
    %3276 = vmatpush.msra.mxu0 %v370
    %3277 = vmatpush.msra.mxu0 %v366
    %3278 = vmatpush.msra.mxu0 %v362
    %3279 = vmatpush.msra.mxu0 %v358
    %3280 = vmatpush.msra.mxu0 %v354
    %3281 = vmatmul.f32.gmra.mxu0 %v3248
    %v3282 = vpop.f32.mrf.mxu0
    %v3283 = vadd.f32 0.0, %v3282
    %3284 = vdwg.mxu0
    %3285 = vmatpush.msra.mxu0 %v415
    %3286 = vmatpush.msra.mxu0 %v411
    %3287 = vmatpush.msra.mxu0 %v407
    %3288 = vmatpush.msra.mxu0 %v403
    %3289 = vmatpush.msra.mxu0 %v399
    %3290 = vmatpush.msra.mxu0 %v395
    %3291 = vmatpush.msra.mxu0 %v391
    %3292 = vmatpush.msra.mxu0 %v387
    %3293 = vmatpush.msra.mxu0 %v383
    %3294 = vmatpush.msra.mxu0 %v379
    %3295 = vmatpush.msra.mxu0 %v375
    %3296 = vmatpush.msra.mxu0 %v371
    %3297 = vmatpush.msra.mxu0 %v367
    %3298 = vmatpush.msra.mxu0 %v363
    %3299 = vmatpush.msra.mxu0 %v359
    %3300 = vmatpush.msra.mxu0 %v355
    %3301 = vmatmul.f32.gmra.mxu0 %v3248
    %v3302 = vpop.f32.mrf.mxu0
    %v3303 = vadd.f32 0.0, %v3302
    %3304 = vdwg.mxu0
    %3305 = vmatpush.msra.mxu0 %v416
    %3306 = vmatpush.msra.mxu0 %v412
    %3307 = vmatpush.msra.mxu0 %v408
    %3308 = vmatpush.msra.mxu0 %v404
    %3309 = vmatpush.msra.mxu0 %v400
    %3310 = vmatpush.msra.mxu0 %v396
    %3311 = vmatpush.msra.mxu0 %v392
    %3312 = vmatpush.msra.mxu0 %v388
    %3313 = vmatpush.msra.mxu0 %v384
    %3314 = vmatpush.msra.mxu0 %v380
    %3315 = vmatpush.msra.mxu0 %v376
    %3316 = vmatpush.msra.mxu0 %v372
    %3317 = vmatpush.msra.mxu0 %v368
    %3318 = vmatpush.msra.mxu0 %v364
    %3319 = vmatpush.msra.mxu0 %v360
    %3320 = vmatpush.msra.mxu0 %v356
    %3321 = vmatmul.f32.gmra.mxu0 %v3248
    %v3322 = vpop.f32.mrf.mxu0
    %v3323 = vadd.f32 0.0, %v3322
    %3324 = vdwg.mxu0
    %3325 = vmatpush.msra.mxu0 %v417
    %3326 = vmatpush.msra.mxu0 %v413
    %3327 = vmatpush.msra.mxu0 %v409
    %3328 = vmatpush.msra.mxu0 %v405
    %3329 = vmatpush.msra.mxu0 %v401
    %3330 = vmatpush.msra.mxu0 %v397
    %3331 = vmatpush.msra.mxu0 %v393
    %3332 = vmatpush.msra.mxu0 %v389
    %3333 = vmatpush.msra.mxu0 %v385
    %3334 = vmatpush.msra.mxu0 %v381
    %3335 = vmatpush.msra.mxu0 %v377
    %3336 = vmatpush.msra.mxu0 %v373
    %3337 = vmatpush.msra.mxu0 %v369
    %3338 = vmatpush.msra.mxu0 %v365
    %3339 = vmatpush.msra.mxu0 %v361
    %3340 = vmatpush.msra.mxu0 %v357
    %3341 = vmatmul.f32.gmra.mxu0 %v3248
    %v3342 = vpop.f32.mrf.mxu0
    %v3343 = vadd.f32 0.0, %v3342
    %3344 = vdwg.mxu0
    %v3345 = vadd.f32 %v3261, %v3283
    %v3346 = vadd.f32 %v3262, %v3303
    %v3347 = vadd.f32 %v3263, %v3323
    %v3348 = vadd.f32 %v3264, %v3343
    %v3349 = vxor.u32 %v3345, 2147483648
    %v3350 = vmul.f32 %v3349, 1.442695
    %v3351 = vpow.pop %v3350
    %v3352 = vadd.f32 %v3351, 1.0
    %v3353 = vrcp.pop %v3352
    %v3354 = vmul.f32 %v3352, %v3353
    %v3355 = vsub.f32 1.0, %v3354
    %v3356 = vmul.f32 %v3353, %v3355
    %v3357 = vadd.f32 %v3353, %v3356
    %vm3358 = vweird.f32 %v3352
    %vm3359 = vweird.f32 %v3353
    %vm3360 = vmor %vm3358, %vm3359
    %v3361 = vsel %vm3360, %v3353, %v3357
    %v3362 = vand.u32 2147483647, %v3352
    %vm3363 = vcmp.eq.f32.partialorder %v3362, 8.507059e+37
    %v3364 = vand.u32 %v3352, 2147483648
    %v3365 = vor.u32 1.1754944e-38, %v3364
    %v3366 = vsel %vm3363, %v3365, %v3361
    %v3367 = vmul.f32 1.0, %v3366
    %v3368 = vxor.u32 %v3346, 2147483648
    %v3369 = vmul.f32 %v3368, 1.442695
    %v3370 = vpow.pop %v3369
    %v3371 = vadd.f32 %v3370, 1.0
    %v3372 = vrcp.pop %v3371
    %v3373 = vmul.f32 %v3371, %v3372
    %v3374 = vsub.f32 1.0, %v3373
    %v3375 = vmul.f32 %v3372, %v3374
    %v3376 = vadd.f32 %v3372, %v3375
    %vm3377 = vweird.f32 %v3371
    %vm3378 = vweird.f32 %v3372
    %vm3379 = vmor %vm3377, %vm3378
    %v3380 = vsel %vm3379, %v3372, %v3376
    %v3381 = vand.u32 2147483647, %v3371
    %vm3382 = vcmp.eq.f32.partialorder %v3381, 8.507059e+37
    %v3383 = vand.u32 %v3371, 2147483648
    %v3384 = vor.u32 1.1754944e-38, %v3383
    %v3385 = vsel %vm3382, %v3384, %v3380
    %v3386 = vmul.f32 1.0, %v3385
    %v3387 = vtanh.pop %v3347
    %v3388 = vxor.u32 %v3348, 2147483648
    %v3389 = vmul.f32 %v3388, 1.442695
    %v3390 = vpow.pop %v3389
    %v3391 = vadd.f32 %v3390, 1.0
    %v3392 = vrcp.pop %v3391
    %v3393 = vmul.f32 %v3391, %v3392
    %v3394 = vsub.f32 1.0, %v3393
    %v3395 = vmul.f32 %v3392, %v3394
    %v3396 = vadd.f32 %v3392, %v3395
    %vm3397 = vweird.f32 %v3391
    %vm3398 = vweird.f32 %v3392
    %vm3399 = vmor %vm3397, %vm3398
    %v3400 = vsel %vm3399, %v3392, %v3396
    %v3401 = vand.u32 2147483647, %v3391
    %vm3402 = vcmp.eq.f32.partialorder %v3401, 8.507059e+37
    %v3403 = vand.u32 %v3391, 2147483648
    %v3404 = vor.u32 1.1754944e-38, %v3403
    %v3405 = vsel %vm3402, %v3404, %v3400
    %v3406 = vmul.f32 1.0, %v3405
    %v3407 = vmul.f32 %v3386, %v3249
    %v3408 = vmul.f32 %v3367, %v3387
    %v3409 = vadd.f32 %v3407, %v3408
    %v3410 = vtanh.pop %v3409
    %v3411 = vmul.f32 %v3406, %v3410
    %3412 = vmatpush.msra.mxu0 %v625
    %3413 = vmatpush.msra.mxu0 %v621
    %3414 = vmatpush.msra.mxu0 %v617
    %3415 = vmatpush.msra.mxu0 %v613
    %3416 = vmatpush.msra.mxu0 %v609
    %3417 = vmatpush.msra.mxu0 %v605
    %3418 = vmatpush.msra.mxu0 %v601
    %3419 = vmatpush.msra.mxu0 %v597
    %3420 = vmatpush.msra.mxu0 %v593
    %3421 = vmatpush.msra.mxu0 %v589
    %3422 = vmatpush.msra.mxu0 %v585
    %3423 = vmatpush.msra.mxu0 %v581
    %3424 = vmatpush.msra.mxu0 %v577
    %3425 = vmatpush.msra.mxu0 %v573
    %3426 = vmatpush.msra.mxu0 %v569
    %3427 = vmatpush.msra.mxu0 %v565
    %3428 = vmatmul.f32.gmra.mxu0 %v3411
    %v3429 = vpop.f32.mrf.mxu0
    %v3430 = vadd.f32 %v695, %v3429
    %3431 = vdwg.mxu0
    %3432 = vmatpush.msra.mxu0 %v689
    %3433 = vmatpush.msra.mxu0 %v685
    %3434 = vmatpush.msra.mxu0 %v681
    %3435 = vmatpush.msra.mxu0 %v677
    %3436 = vmatpush.msra.mxu0 %v673
    %3437 = vmatpush.msra.mxu0 %v669
    %3438 = vmatpush.msra.mxu0 %v665
    %3439 = vmatpush.msra.mxu0 %v661
    %3440 = vmatpush.msra.mxu0 %v657
    %3441 = vmatpush.msra.mxu0 %v653
    %3442 = vmatpush.msra.mxu0 %v649
    %3443 = vmatpush.msra.mxu0 %v645
    %3444 = vmatpush.msra.mxu0 %v641
    %3445 = vmatpush.msra.mxu0 %v637
    %3446 = vmatpush.msra.mxu0 %v633
    %3447 = vmatpush.msra.mxu0 %v629
    %3448 = vmatmul.f32.gmra.mxu0 %v3250
    %v3449 = vpop.f32.mrf.mxu0
    %v3450 = vadd.f32 %v3430, %v3449
    %3451 = vdwg.mxu0
    %3452 = vmatpush.msra.mxu0 %v626
    %3453 = vmatpush.msra.mxu0 %v622
    %3454 = vmatpush.msra.mxu0 %v618
    %3455 = vmatpush.msra.mxu0 %v614
    %3456 = vmatpush.msra.mxu0 %v610
    %3457 = vmatpush.msra.mxu0 %v606
    %3458 = vmatpush.msra.mxu0 %v602
    %3459 = vmatpush.msra.mxu0 %v598
    %3460 = vmatpush.msra.mxu0 %v594
    %3461 = vmatpush.msra.mxu0 %v590
    %3462 = vmatpush.msra.mxu0 %v586
    %3463 = vmatpush.msra.mxu0 %v582
    %3464 = vmatpush.msra.mxu0 %v578
    %3465 = vmatpush.msra.mxu0 %v574
    %3466 = vmatpush.msra.mxu0 %v570
    %3467 = vmatpush.msra.mxu0 %v566
    %3468 = vmatmul.f32.gmra.mxu0 %v3411
    %v3469 = vpop.f32.mrf.mxu0
    %v3470 = vadd.f32 %v696, %v3469
    %3471 = vdwg.mxu0
    %3472 = vmatpush.msra.mxu0 %v690
    %3473 = vmatpush.msra.mxu0 %v686
    %3474 = vmatpush.msra.mxu0 %v682
    %3475 = vmatpush.msra.mxu0 %v678
    %3476 = vmatpush.msra.mxu0 %v674
    %3477 = vmatpush.msra.mxu0 %v670
    %3478 = vmatpush.msra.mxu0 %v666
    %3479 = vmatpush.msra.mxu0 %v662
    %3480 = vmatpush.msra.mxu0 %v658
    %3481 = vmatpush.msra.mxu0 %v654
    %3482 = vmatpush.msra.mxu0 %v650
    %3483 = vmatpush.msra.mxu0 %v646
    %3484 = vmatpush.msra.mxu0 %v642
    %3485 = vmatpush.msra.mxu0 %v638
    %3486 = vmatpush.msra.mxu0 %v634
    %3487 = vmatpush.msra.mxu0 %v630
    %3488 = vmatmul.f32.gmra.mxu0 %v3250
    %v3489 = vpop.f32.mrf.mxu0
    %v3490 = vadd.f32 %v3470, %v3489
    %3491 = vdwg.mxu0
    %3492 = vmatpush.msra.mxu0 %v627
    %3493 = vmatpush.msra.mxu0 %v623
    %3494 = vmatpush.msra.mxu0 %v619
    %3495 = vmatpush.msra.mxu0 %v615
    %3496 = vmatpush.msra.mxu0 %v611
    %3497 = vmatpush.msra.mxu0 %v607
    %3498 = vmatpush.msra.mxu0 %v603
    %3499 = vmatpush.msra.mxu0 %v599
    %3500 = vmatpush.msra.mxu0 %v595
    %3501 = vmatpush.msra.mxu0 %v591
    %3502 = vmatpush.msra.mxu0 %v587
    %3503 = vmatpush.msra.mxu0 %v583
    %3504 = vmatpush.msra.mxu0 %v579
    %3505 = vmatpush.msra.mxu0 %v575
    %3506 = vmatpush.msra.mxu0 %v571
    %3507 = vmatpush.msra.mxu0 %v567
    %3508 = vmatmul.f32.gmra.mxu0 %v3411
    %v3509 = vpop.f32.mrf.mxu0
    %v3510 = vadd.f32 %v697, %v3509
    %3511 = vdwg.mxu0
    %3512 = vmatpush.msra.mxu0 %v691
    %3513 = vmatpush.msra.mxu0 %v687
    %3514 = vmatpush.msra.mxu0 %v683
    %3515 = vmatpush.msra.mxu0 %v679
    %3516 = vmatpush.msra.mxu0 %v675
    %3517 = vmatpush.msra.mxu0 %v671
    %3518 = vmatpush.msra.mxu0 %v667
    %3519 = vmatpush.msra.mxu0 %v663
    %3520 = vmatpush.msra.mxu0 %v659
    %3521 = vmatpush.msra.mxu0 %v655
    %3522 = vmatpush.msra.mxu0 %v651
    %3523 = vmatpush.msra.mxu0 %v647
    %3524 = vmatpush.msra.mxu0 %v643
    %3525 = vmatpush.msra.mxu0 %v639
    %3526 = vmatpush.msra.mxu0 %v635
    %3527 = vmatpush.msra.mxu0 %v631
    %3528 = vmatmul.f32.gmra.mxu0 %v3250
    %v3529 = vpop.f32.mrf.mxu0
    %v3530 = vadd.f32 %v3510, %v3529
    %3531 = vdwg.mxu0
    %3532 = vmatpush.msra.mxu0 %v628
    %3533 = vmatpush.msra.mxu0 %v624
    %3534 = vmatpush.msra.mxu0 %v620
    %3535 = vmatpush.msra.mxu0 %v616
    %3536 = vmatpush.msra.mxu0 %v612
    %3537 = vmatpush.msra.mxu0 %v608
    %3538 = vmatpush.msra.mxu0 %v604
    %3539 = vmatpush.msra.mxu0 %v600
    %3540 = vmatpush.msra.mxu0 %v596
    %3541 = vmatpush.msra.mxu0 %v592
    %3542 = vmatpush.msra.mxu0 %v588
    %3543 = vmatpush.msra.mxu0 %v584
    %3544 = vmatpush.msra.mxu0 %v580
    %3545 = vmatpush.msra.mxu0 %v576
    %3546 = vmatpush.msra.mxu0 %v572
    %3547 = vmatpush.msra.mxu0 %v568
    %3548 = vmatmul.f32.gmra.mxu0 %v3411
    %v3549 = vpop.f32.mrf.mxu0
    %v3550 = vadd.f32 %v698, %v3549
    %3551 = vdwg.mxu0
    %3552 = vmatpush.msra.mxu0 %v692
    %3553 = vmatpush.msra.mxu0 %v688
    %3554 = vmatpush.msra.mxu0 %v684
    %3555 = vmatpush.msra.mxu0 %v680
    %3556 = vmatpush.msra.mxu0 %v676
    %3557 = vmatpush.msra.mxu0 %v672
    %3558 = vmatpush.msra.mxu0 %v668
    %3559 = vmatpush.msra.mxu0 %v664
    %3560 = vmatpush.msra.mxu0 %v660
    %3561 = vmatpush.msra.mxu0 %v656
    %3562 = vmatpush.msra.mxu0 %v652
    %3563 = vmatpush.msra.mxu0 %v648
    %3564 = vmatpush.msra.mxu0 %v644
    %3565 = vmatpush.msra.mxu0 %v640
    %3566 = vmatpush.msra.mxu0 %v636
    %3567 = vmatpush.msra.mxu0 %v632
    %3568 = vmatmul.f32.gmra.mxu0 %v3250
    %v3569 = vpop.f32.mrf.mxu0
    %v3570 = vadd.f32 %v3550, %v3569
    %3571 = vdwg.mxu0
    %v3572 = vxor.u32 %v3450, 2147483648
    %v3573 = vmul.f32 %v3572, 1.442695
    %v3574 = vpow.pop %v3573
    %v3575 = vadd.f32 %v3574, 1.0
    %v3576 = vrcp.pop %v3575
    %v3577 = vmul.f32 %v3575, %v3576
    %v3578 = vsub.f32 1.0, %v3577
    %v3579 = vmul.f32 %v3576, %v3578
    %v3580 = vadd.f32 %v3576, %v3579
    %vm3581 = vweird.f32 %v3575
    %vm3582 = vweird.f32 %v3576
    %vm3583 = vmor %vm3581, %vm3582
    %v3584 = vsel %vm3583, %v3576, %v3580
    %v3585 = vand.u32 2147483647, %v3575
    %vm3586 = vcmp.eq.f32.partialorder %v3585, 8.507059e+37
    %v3587 = vand.u32 %v3575, 2147483648
    %v3588 = vor.u32 1.1754944e-38, %v3587
    %v3589 = vsel %vm3586, %v3588, %v3584
    %v3590 = vmul.f32 1.0, %v3589
    %v3591 = vxor.u32 %v3490, 2147483648
    %v3592 = vmul.f32 %v3591, 1.442695
    %v3593 = vpow.pop %v3592
    %v3594 = vadd.f32 %v3593, 1.0
    %v3595 = vrcp.pop %v3594
    %v3596 = vmul.f32 %v3594, %v3595
    %v3597 = vsub.f32 1.0, %v3596
    %v3598 = vmul.f32 %v3595, %v3597
    %v3599 = vadd.f32 %v3595, %v3598
    %vm3600 = vweird.f32 %v3594
    %vm3601 = vweird.f32 %v3595
    %vm3602 = vmor %vm3600, %vm3601
    %v3603 = vsel %vm3602, %v3595, %v3599
    %v3604 = vand.u32 2147483647, %v3594
    %vm3605 = vcmp.eq.f32.partialorder %v3604, 8.507059e+37
    %v3606 = vand.u32 %v3594, 2147483648
    %v3607 = vor.u32 1.1754944e-38, %v3606
    %v3608 = vsel %vm3605, %v3607, %v3603
    %v3609 = vmul.f32 1.0, %v3608
    %v3610 = vtanh.pop %v3530
    %v3611 = vxor.u32 %v3570, 2147483648
    %v3612 = vmul.f32 %v3611, 1.442695
    %v3613 = vpow.pop %v3612
    %v3614 = vadd.f32 %v3613, 1.0
    %v3615 = vrcp.pop %v3614
    %v3616 = vmul.f32 %v3614, %v3615
    %v3617 = vsub.f32 1.0, %v3616
    %v3618 = vmul.f32 %v3615, %v3617
    %v3619 = vadd.f32 %v3615, %v3618
    %vm3620 = vweird.f32 %v3614
    %vm3621 = vweird.f32 %v3615
    %vm3622 = vmor %vm3620, %vm3621
    %v3623 = vsel %vm3622, %v3615, %v3619
    %v3624 = vand.u32 2147483647, %v3614
    %vm3625 = vcmp.eq.f32.partialorder %v3624, 8.507059e+37
    %v3626 = vand.u32 %v3614, 2147483648
    %v3627 = vor.u32 1.1754944e-38, %v3626
    %v3628 = vsel %vm3625, %v3627, %v3623
    %v3629 = vmul.f32 1.0, %v3628
    %v3630 = vmul.f32 %v3609, %v3251
    %v3631 = vmul.f32 %v3590, %v3610
    %v3632 = vadd.f32 %v3630, %v3631
    %v3633 = vtanh.pop %v3632
    %v3634 = vmul.f32 %v3629, %v3633
    %v3635 = vsel %vm3257, %v3634, %v3250
    %v3636 = vld [vmem:[#allocation8] sm:$0xff]
    %v3637 = vld [vmem:[#allocation8 + $0x8] sm:$0xff]
    %v3638 = vld [vmem:[#allocation8 + $0x10] sm:$0xff]
    %v3639 = vld [vmem:[#allocation8 + $0x18] sm:$0xff]
    %v3640 = vld [vmem:[#allocation8 + $0x20] sm:$0xff]
    %v3641 = vld [vmem:[#allocation8 + $0x28] sm:$0xff]
    %v3642 = vld [vmem:[#allocation8 + $0x30] sm:$0xff]
    %v3643 = vld [vmem:[#allocation8 + $0x38] sm:$0xff]
    %v3644 = vld [vmem:[#allocation8 + $0x40] sm:$0xff]
    %v3645 = vld [vmem:[#allocation8 + $0x48] sm:$0xff]
    %v3646 = vld [vmem:[#allocation8 + $0x50] sm:$0xff]
    %v3647 = vld [vmem:[#allocation8 + $0x58] sm:$0xff]
    %v3648 = vld [vmem:[#allocation8 + $0x60] sm:$0xff]
    %v3649 = vld [vmem:[#allocation8 + $0x68] sm:$0xff]
    %v3650 = vld [vmem:[#allocation8 + $0x70] sm:$0xff]
    %v3651 = vld [vmem:[#allocation8 + $0x78] sm:$0xff]
    %v3652 = vld [vmem:[%s8] sm:$0x1]
    %v3654 = vperm.slane %v3652, 0
    %3656 = vmatpush.msra.mxu0 %v3651
    %3657 = vmatpush.msra.mxu0 %v3650
    %3658 = vmatpush.msra.mxu0 %v3649
    %3659 = vmatpush.msra.mxu0 %v3648
    %3660 = vmatpush.msra.mxu0 %v3647
    %3661 = vmatpush.msra.mxu0 %v3646
    %3662 = vmatpush.msra.mxu0 %v3645
    %3663 = vmatpush.msra.mxu0 %v3644
    %3664 = vmatpush.msra.mxu0 %v3643
    %3665 = vmatpush.msra.mxu0 %v3642
    %3666 = vmatpush.msra.mxu0 %v3641
    %3667 = vmatpush.msra.mxu0 %v3640
    %3668 = vmatpush.msra.mxu0 %v3639
    %3669 = vmatpush.msra.mxu0 %v3638
    %3670 = vmatpush.msra.mxu0 %v3637
    %3671 = vmatpush.msra.mxu0 %v3636
    %3672 = vmatmul.f32.gmra.mxu0 %v3635
    %v3673 = vpop.f32.mrf.mxu0
    %v3674 = vadd.f32 %v3654, %v3673
    %3675 = vdwg.mxu0
    %3676 = vst [vmem:[#allocation9] sm:$0xff] %v3674
    // Predicated region
    $region50: #{tpu_custom_call.1} parent=1 // pred_check
      _
    $region51: #{tpu_custom_call.1} parent=1 // pred_check_branch
      %3678 = sbr.rel (0) target = $region53
    $region52: #{tpu_custom_call.1} parent=1 // pred_region
      %3680 = vsyncadd [#allocation5], 0
      %s3682 = sshll.u32 [#allocation9], 4
      %s3683 = int_to_ptr.vmem [resolvable:$true] %s3682
      %s3684 = sshll.u32 %s9, 4
      %s3685 = int_to_ptr.hbm [resolvable:$true] %s3684
      %3687 = dma.vmem_to_hbm [thread:$0]  %s3683, 128, %s3685, [#allocation5]
    $region53: #{tpu_custom_call.1} parent=1 // pred_fallthru
      _
    // Predicated region
    $region54: #{tpu_custom_call.1} parent=1 // pred_check
      _
    $region55: #{tpu_custom_call.1} parent=1 // pred_check_branch
      %3689 = sbr.rel (0) target = $region57
    $region56: #{tpu_custom_call.1} parent=1 // pred_region
      %3691 = dma.done [#allocation5], 128
    $region57: #{tpu_custom_call.1} parent=1 // pred_fallthru
      _
    %3692 = vsyncpa [#allocation4], 1
    %3693 = vsyncpa [#allocation7], 1
    %3694 = vsyncpa [#allocation5], 1

</llo_original>
